<compile_context>
chip_gen: v5e
topology: v5e:2x2
jax: 0.10.0
libtpu: 0.0.40
codegen_flags: <defaults>
</compile_context>

<pallas_src>
import math

import numpy as np
import jax
import jax.numpy as jnp
from jax import lax
from jax.experimental import pallas as pl
from jax.experimental.pallas import tpu as pltpu

_EPS = 1e-5


def _cdiv(a, b):
    return -(-a // b)


# --------------------------------------------------------------------------
# small shared helpers (used by the kernels / wrapper and the JAX reference)
# --------------------------------------------------------------------------
def _gelu(x):
    # TODO(synk): torch nn.GELU default is the exact erf form; the tanh
    # approximation is used here for a Mosaic-safe elementwise lowering
    # (abs diff <~1e-3, inside the test tolerance).
    c = math.sqrt(2.0 / math.pi)
    return 0.5 * x * (1.0 + jnp.tanh(c * (x + 0.044715 * x * x * x)))


def _layernorm(v, g, b, eps=_EPS):
    mu = jnp.mean(v, axis=-1, keepdims=True)
    var = jnp.mean(jnp.square(v - mu), axis=-1, keepdims=True)
    return (v - mu) * lax.rsqrt(var + eps) * g + b


def window_partition(x, ws):            # wrapper-side: mask build + reference
    B, H, W, C = x.shape
    x = x.reshape(B, H // ws, ws, W // ws, ws, C)
    return x.transpose(0, 1, 3, 2, 4, 5).reshape(-1, ws, ws, C)


def window_reverse(windows, ws, H, W):  # reference only
    B = windows.shape[0] // (H * W // ws // ws)
    x = windows.reshape(B, H // ws, W // ws, ws, ws, -1)
    return x.transpose(0, 1, 3, 2, 4, 5).reshape(B, H, W, -1)


def relative_position_index(ws):
    coords = np.stack(np.meshgrid(np.arange(ws), np.arange(ws), indexing="ij"))
    flat = coords.reshape(2, -1)
    rel = (flat[:, :, None] - flat[:, None, :]).transpose(1, 2, 0).astype(np.int32).copy()
    rel[:, :, 0] += ws - 1
    rel[:, :, 1] += ws - 1
    rel[:, :, 0] *= 2 * ws - 1
    return rel.sum(-1)                                   # (N, N)


def get_rel_bias(table, ws, nh):
    N = ws * ws
    idx = relative_position_index(ws).reshape(-1)
    rb = table[idx].reshape(N, N, nh)
    return jnp.transpose(rb, (2, 0, 1)).astype(jnp.float32)   # (nh, N, N)


# --------------------------------------------------------------------------
# Kernel A: LN1 + windowed multi-head attention + projection (one band/step)
# --------------------------------------------------------------------------
def _make_attn_kernel(nh, ws, nw, nw_b, apply_ln):
    N = ws * ws
    f32 = jnp.float32
    bf16 = jnp.bfloat16

    def body(x_ref, g1_ref, b1_ref, wqkv_ref, bqkv_ref, wp_ref, bp_ref,
             bias_ref, o_ref):
        C = x_ref.shape[-1]
        hd = C // nh

        band = x_ref[0]                                       # (ws, Wp, C) f32
        # window partition of the band: sublane-aligned static slices stacked
        # along a new leading (window) batch dim -> (nw, N, C).  No transposes.
        xw = jnp.stack(
            [band[:, w * ws:(w + 1) * ws, :].reshape(N, C) for w in range(nw)],
            axis=0)
        y = xw.reshape(nw * N, C)
        if apply_ln:
            mu = jnp.mean(y, axis=-1, keepdims=True)
            var = jnp.mean(jnp.square(y - mu), axis=-1, keepdims=True)
            y = (y - mu) * lax.rsqrt(var + _EPS) * g1_ref[...] + b1_ref[...]

        # fused QKV: one (R, C) x (C, 3C) bf16 matmul, f32 accumulation.
        # Softmax scale is pre-folded into the q columns of wqkv / bqkv.
        qkv = jnp.dot(y.astype(bf16), wqkv_ref[...],
                      preferred_element_type=f32) + bqkv_ref[...]
        qkv = qkv.reshape(nw, N, 3 * C)

        bias_all = bias_ref[0]                                # (nh*nw_b, N, N)
        head_outs = []
        for h in range(nh):                                   # static unroll
            qh = qkv[:, :, h * hd:(h + 1) * hd].astype(bf16)
            kh = qkv[:, :, C + h * hd:C + (h + 1) * hd].astype(bf16)
            vh = qkv[:, :, 2 * C + h * hd:2 * C + (h + 1) * hd].astype(bf16)
            s = jnp.einsum("bnd,bmd->bnm", qh, kh,
                           preferred_element_type=f32)        # (nw, N, N)
            # single pre-combined (rel-bias + shift-mask) add per head
            s = s + bias_all[h * nw_b:(h + 1) * nw_b]         # (nw_b,N,N) bcast
            m = jnp.max(s, axis=-1, keepdims=True)
            p = jnp.exp(s - m)
            denom = jnp.sum(p, axis=-1, keepdims=True)
            oh = jnp.einsum("bnm,bmd->bnd", p.astype(bf16), vh,
                            preferred_element_type=f32)       # (nw, N, hd)
            # normalize after PV: divides hd (=C/nh) columns instead of N,
            # and the reciprocal goes to the EUP slot.
            head_outs.append(oh * pl.reciprocal(denom, approx=True))

        attn = jnp.concatenate(head_outs, axis=-1)            # (nw, N, C)
        out = jnp.dot(attn.reshape(nw * N, C).astype(bf16), wp_ref[...],
                      preferred_element_type=f32) + bp_ref[...]
        out = out.reshape(nw, ws, ws, C).astype(o_ref.dtype)
        # window reverse for this band: sublane-axis concat back to (ws, Wp, C)
        o_ref[0] = jnp.concatenate([out[w] for w in range(nw)], axis=1)

    return body


# --------------------------------------------------------------------------
# Kernel B: first residual add + LN2 + MLP (GELU) + second residual add
# --------------------------------------------------------------------------
def _mlp_kernel(x_ref, a_ref, g2_ref, b2_ref, w1_ref, fb1_ref, w2_ref, fb2_ref,
                o_ref):
    f32 = jnp.float32
    bf16 = jnp.bfloat16
    y = x_ref[...] + a_ref[...].astype(f32)           # shortcut + attention
    mu = jnp.mean(y, axis=-1, keepdims=True)
    var = jnp.mean(jnp.square(y - mu), axis=-1, keepdims=True)
    z = (y - mu) * lax.rsqrt(var + _EPS) * g2_ref[...] + b2_ref[...]
    h = jnp.dot(z.astype(bf16), w1_ref[...], preferred_element_type=f32)
    h = _gelu(h + fb1_ref[...])
    o = jnp.dot(h.astype(bf16), w2_ref[...], preferred_element_type=f32)
    o_ref[...] = y + o + fb2_ref[...]


# --------------------------------------------------------------------------
# Wrapper: full SwinTransformerBlock forward
# --------------------------------------------------------------------------
def swin_block_forward(x, attn_mask, params, *, H, W, window_size, shift_size,
                       num_heads):
    B, L, C = x.shape
    assert L == H * W, "input feature has wrong size"
    ws, nh = window_size, num_heads
    assert C % nh == 0
    N = ws * ws
    hd = C // nh
    scale = hd ** (-0.5)
    f32, bf16 = jnp.float32, jnp.bfloat16

    shortcut = x

    pad_r = (ws - W % ws) % ws
    pad_b = (ws - H % ws) % ws
    ln_in_kernel = (pad_r == 0 and pad_b == 0)
    if ln_in_kernel:
        xs = x.reshape(B, H, W, C)                    # free reshape, no HBM pass
    else:
        # TODO(synk): padded fallback keeps LN1 in XLA so the zero padding sees
        # already-normalized tokens (torch order: norm -> pad); could be folded
        # in-kernel with an explicit validity mask to save one HBM pass.
        xs = _layernorm(x, params["ln1_g"], params["ln1_b"]).reshape(B, H, W, C)
        xs = jnp.pad(xs, ((0, 0), (0, pad_b), (0, pad_r), (0, 0)))
    Hp, Wp = H + pad_b, W + pad_r

    if shift_size > 0:
        xs = jnp.roll(xs, (-shift_size, -shift_size), axis=(1, 2))

    n_hb = Hp // ws                       # bands of windows (grid rows)
    nw = Wp // ws                         # windows per band

    # relative-position bias (+ shift mask) pre-combined: one add per head.
    rel_bias = get_rel_bias(params["rpb_table"], ws, nh)        # (nh, N, N)
    if shift_size > 0:
        mask4 = attn_mask.astype(f32).reshape(n_hb, nw, N, N)
        bias = rel_bias[None, :, None] + mask4[:, None]         # (n_hb,nh,nw,N,N)
        nw_b = nw
        bias = bias.reshape(n_hb, nh * nw_b, N, N)
        bias_idx = lambda b, hi: (hi, 0, 0, 0)
    else:
        nw_b = 1
        bias = rel_bias.reshape(1, nh, N, N).astype(f32)        # (1, nh, N, N)
        bias_idx = lambda b, hi: (0, 0, 0, 0)

    # softmax scale folded into the q columns of the fused QKV weights / bias.
    qcol_scale = jnp.concatenate(
        [jnp.full((1, C), scale, f32), jnp.ones((1, 2 * C), f32)], axis=1)
    wqkv = (params["wqkv"] * qcol_scale).astype(bf16)
    bqkv = (params["bqkv"] * qcol_scale).astype(f32)
    wproj = params["wproj"].astype(bf16)

    def _const2(shape):
        nd = len(shape)
        return pl.BlockSpec(shape, lambda b, hi, _nd=nd: (0,) * _nd)

    attn_img = pl.pallas_call(
        _make_attn_kernel(nh=nh, ws=ws, nw=nw, nw_b=nw_b, apply_ln=ln_in_kernel),
        out_shape=jax.ShapeDtypeStruct((B, Hp, Wp, C), bf16),
        grid=(B, n_hb),
        in_specs=[
            pl.BlockSpec((1, ws, Wp, C), lambda b, hi: (b, hi, 0, 0)),  # x band
            _const2((1, C)),                                            # ln1_g
            _const2((1, C)),                                            # ln1_b
            _const2((C, 3 * C)),                                        # wqkv
            _const2((1, 3 * C)),                                        # bqkv
            _const2((C, C)),                                            # wproj
            _const2((1, C)),                                            # bproj
            pl.BlockSpec((1, nh * nw_b, N, N), bias_idx),               # bias
        ],
        out_specs=pl.BlockSpec((1, ws, Wp, C), lambda b, hi: (b, hi, 0, 0)),
        compiler_params=pltpu.CompilerParams(
            dimension_semantics=("parallel", "parallel")),
    )(xs, params["ln1_g"], params["ln1_b"], wqkv, bqkv, wproj,
      params["bproj"], bias)

    # un-shift / un-pad (layout only; output already in image layout, bf16)
    if shift_size > 0:
        attn_img = jnp.roll(attn_img, (shift_size, shift_size), axis=(1, 2))
    if pad_r or pad_b:
        attn_img = attn_img[:, :H, :W, :]
    attn_flat = attn_img.reshape(B * L, C)            # bf16 handoff
    x_flat = shortcut.reshape(B * L, C)

    # ---- Kernel B tiling: >=2 parallel steps, cdiv grid + pad (no TM search)
    rows = B * L
    TM = 512
    if _cdiv(rows, TM) < 2:
        TM = max(8, _cdiv(_cdiv(rows, 2), 8) * 8)
    nsteps = _cdiv(rows, TM)
    rows_p = nsteps * TM
    if rows_p != rows:
        x_flat = jnp.pad(x_flat, ((0, rows_p - rows), (0, 0)))
        attn_flat = jnp.pad(attn_flat, ((0, rows_p - rows), (0, 0)))

    w1 = params["w1"].astype(bf16)
    w2 = params["w2"].astype(bf16)
    hidden = w1.shape[1]

    def _const1(shape):
        nd = len(shape)
        return pl.BlockSpec(shape, lambda i, _nd=nd: (0,) * _nd)

    out = pl.pallas_call(
        _mlp_kernel,
        out_shape=jax.ShapeDtypeStruct((rows_p, C), f32),
        grid=(nsteps,),
        in_specs=[
            pl.BlockSpec((TM, C), lambda i: (i, 0)),   # shortcut rows (f32)
            pl.BlockSpec((TM, C), lambda i: (i, 0)),   # attention rows (bf16)
            _const1((1, C)),                           # ln2_g
            _const1((1, C)),                           # ln2_b
            _const1((C, hidden)),                      # w1
            _const1((1, hidden)),                      # b1
            _const1((hidden, C)),                      # w2
            _const1((1, C)),                           # b2
        ],
        out_specs=pl.BlockSpec((TM, C), lambda i: (i, 0)),
        compiler_params=pltpu.CompilerParams(
            dimension_semantics=("parallel",)),
    )(x_flat, attn_flat, params["ln2_g"], params["ln2_b"],
      w1, params["b1"], w2, params["b2"])

    return out[:rows].reshape(B, L, C)


# --------------------------------------------------------------------------
# Deterministic parameters, shift mask, and a pure-JAX reference
# --------------------------------------------------------------------------
def make_params(key, dim, num_heads, window_size, hidden):
    ks = jax.random.split(key, 13)

    def nrm(k, shape, s=0.02):
        return s * jax.random.normal(k, shape, jnp.float32)

    return {
        "ln1_g": 1.0 + 0.05 * jax.random.normal(ks[0], (1, dim), jnp.float32),
        "ln1_b": nrm(ks[1], (1, dim)),
        "wqkv": nrm(ks[2], (dim, 3 * dim)),
        "bqkv": nrm(ks[3], (1, 3 * dim)),
        "wproj": nrm(ks[4], (dim, dim)),
        "bproj": nrm(ks[5], (1, dim)),
        "rpb_table": nrm(ks[6], ((2 * window_size - 1) ** 2, num_heads)),
        "ln2_g": 1.0 + 0.05 * jax.random.normal(ks[7], (1, dim), jnp.float32),
        "ln2_b": nrm(ks[8], (1, dim)),
        "w1": nrm(ks[9], (dim, hidden)),
        "b1": nrm(ks[10], (1, hidden)),
        "w2": nrm(ks[11], (hidden, dim)),
        "b2": nrm(ks[12], (1, dim)),
    }


def create_attn_mask(Hp, Wp, ws, shift):
    img_mask = jnp.zeros((1, Hp, Wp, 1), jnp.float32)
    h_slices = (slice(0, -ws), slice(-ws, -shift), slice(-shift, None))
    w_slices = (slice(0, -ws), slice(-ws, -shift), slice(-shift, None))
    cnt = 0
    for hs in h_slices:
        for wsl in w_slices:
            img_mask = img_mask.at[:, hs, wsl, :].set(float(cnt))
            cnt += 1
    mask_windows = window_partition(img_mask, ws).reshape(-1, ws * ws)
    attn_mask = mask_windows[:, None, :] - mask_windows[:, :, None]
    return jnp.where(attn_mask != 0, -100.0, 0.0).astype(jnp.float32)


def ref_forward(x, attn_mask, params, *, H, W, window_size, shift_size,
                num_heads):
    B, L, C = x.shape
    ws = window_size
    nh = num_heads
    N = ws * ws
    hd = C // nh
    scale = hd ** (-0.5)

    shortcut = x
    xs = _layernorm(x, params["ln1_g"], params["ln1_b"]).reshape(B, H, W, C)
    pad_r = (ws - W % ws) % ws
    pad_b = (ws - H % ws) % ws
    if pad_r or pad_b:
        xs = jnp.pad(xs, ((0, 0), (0, pad_b), (0, pad_r), (0, 0)))
    Hp, Wp = H + pad_b, W + pad_r
    if shift_size > 0:
        xs = jnp.roll(xs, (-shift_size, -shift_size), axis=(1, 2))
    xw = window_partition(xs, ws).reshape(-1, N, C)

    qkv = xw @ params["wqkv"] + params["bqkv"]
    qkv = qkv.reshape(-1, N, 3, nh, hd).transpose(2, 0, 3, 1, 4)
    q, k, v = qkv[0], qkv[1], qkv[2]                     # (BW, nh, N, hd)
    attn = (q * scale) @ jnp.swapaxes(k, -2, -1)
    attn = attn + get_rel_bias(params["rpb_table"], ws, nh)[None]
    if shift_size > 0:
        nW = attn_mask.shape[0]
        attn = attn.reshape(-1, nW, nh, N, N) + attn_mask[None, :, None]
        attn = attn.reshape(-1, nh, N, N)
    attn = jax.nn.softmax(attn, axis=-1)
    out = jnp.swapaxes(attn @ v, 1, 2).reshape(-1, N, C)
    out = out @ params["wproj"] + params["bproj"]

    out = out.reshape(-1, ws, ws, C)
    xs2 = window_reverse(out, ws, Hp, Wp)
    if shift_size > 0:
        xs2 = jnp.roll(xs2, (shift_size, shift_size), axis=(1, 2))
    if pad_r or pad_b:
        xs2 = xs2[:, :H, :W, :]
    y = shortcut + xs2.reshape(B, L, C)

    z = _layernorm(y, params["ln2_g"], params["ln2_b"])
    h = _gelu(z @ params["w1"] + params["b1"])
    return y + h @ params["w2"] + params["b2"]


if __name__ == "__main__":
    B, H, W, C = 2, 16, 16, 128
    window_size, shift_size, num_heads = 8, 4, 4
    mlp_ratio = 4.0
    L = H * W

    key = jax.random.PRNGKey(0)
    kx, kp = jax.random.split(key)
    x = jax.random.normal(kx, (B, L, C), jnp.float32)
    params = make_params(kp, C, num_heads, window_size, int(C * mlp_ratio))
    attn_mask = create_attn_mask(H, W, window_size, shift_size)   # (nW, N, N)

    out = swin_block_forward(x, attn_mask, params, H=H, W=W,
                             window_size=window_size, shift_size=shift_size,
                             num_heads=num_heads)
    out = jax.block_until_ready(out)

    ref = jax.block_until_ready(
        ref_forward(x, attn_mask, params, H=H, W=W, window_size=window_size,
                    shift_size=shift_size, num_heads=num_heads))

    assert out.shape == (B, L, C), out.shape
    max_err = float(jnp.max(jnp.abs(out - ref)))
    # bf16 matmuls (f32 accum), bf16 attention handoff and approx reciprocal in
    # the kernels vs an all-f32 reference -> 2e-2 tolerance.
    assert jnp.allclose(out, ref, rtol=2e-2, atol=2e-2), max_err
    print("KERNEL_OK")
</pallas_src>

<mosaic_0001>
module attributes {stable_mosaic.version = 11 : i64} {
  func.func @body(%arg0: i32, %arg1: i32, %arg2: memref<1x8x16x128xf32, #tpu.memory_space<vmem>>, %arg3: memref<1x128xf32, #tpu.memory_space<vmem>>, %arg4: memref<1x128xf32, #tpu.memory_space<vmem>>, %arg5: memref<128x384xbf16, #tpu.memory_space<vmem>>, %arg6: memref<1x384xf32, #tpu.memory_space<vmem>>, %arg7: memref<128x128xbf16, #tpu.memory_space<vmem>>, %arg8: memref<1x128xf32, #tpu.memory_space<vmem>>, %arg9: memref<1x8x64x64xf32, #tpu.memory_space<vmem>>, %arg10: memref<1x8x16x128xbf16, #tpu.memory_space<vmem>>) attributes {dimension_semantics = [#tpu.dimension_semantics<parallel>, #tpu.dimension_semantics<parallel>], iteration_bounds = array<i64: 2, 2>, scalar_prefetch = 0 : i64, scratch_operands = 0 : i64, tpu.core_type = #tpu.core_type<tc>, window_params = [{transform_indices = @transform_0, window_bounds = array<i64: 1, 8, 16, 128>}, {pipeline_mode = #tpu.pipeline_mode<synchronous>, transform_indices = @transform_1, window_bounds = array<i64: 1, 128>}, {pipeline_mode = #tpu.pipeline_mode<synchronous>, transform_indices = @transform_2, window_bounds = array<i64: 1, 128>}, {pipeline_mode = #tpu.pipeline_mode<synchronous>, transform_indices = @transform_3, window_bounds = array<i64: 128, 384>}, {pipeline_mode = #tpu.pipeline_mode<synchronous>, transform_indices = @transform_4, window_bounds = array<i64: 1, 384>}, {pipeline_mode = #tpu.pipeline_mode<synchronous>, transform_indices = @transform_5, window_bounds = array<i64: 128, 128>}, {pipeline_mode = #tpu.pipeline_mode<synchronous>, transform_indices = @transform_6, window_bounds = array<i64: 1, 128>}, {transform_indices = @transform_7, window_bounds = array<i64: 1, 8, 64, 64>}, {transform_indices = @transform_8, window_bounds = array<i64: 1, 8, 16, 128>}]} {
    %c0 = arith.constant 0 : index
    %c0_0 = arith.constant 0 : index
    %c0_1 = arith.constant 0 : index
    %c0_2 = arith.constant 0 : index
    %0 = vector.load %arg2[%c0, %c0_0, %c0_1, %c0_2] : memref<1x8x16x128xf32, #tpu.memory_space<vmem>>, vector<1x8x16x128xf32>
    %1 = vector.shape_cast %0 : vector<1x8x16x128xf32> to vector<8x16x128xf32>
    %2 = vector.extract_strided_slice %1 {offsets = [0, 0, 0], sizes = [8, 8, 128], strides = [1, 1, 1]} : vector<8x16x128xf32> to vector<8x8x128xf32>
    %3 = vector.shape_cast %2 : vector<8x8x128xf32> to vector<64x128xf32>
    %4 = vector.extract_strided_slice %1 {offsets = [0, 8, 0], sizes = [8, 8, 128], strides = [1, 1, 1]} : vector<8x16x128xf32> to vector<8x8x128xf32>
    %5 = vector.shape_cast %4 : vector<8x8x128xf32> to vector<64x128xf32>
    %6 = vector.shape_cast %3 : vector<64x128xf32> to vector<1x64x128xf32>
    %7 = vector.shape_cast %5 : vector<64x128xf32> to vector<1x64x128xf32>
    %8 = tpu.concatenate %6, %7 in 0 : vector<1x64x128xf32>, vector<1x64x128xf32> -> vector<2x64x128xf32>
    %9 = vector.shape_cast %8 : vector<2x64x128xf32> to vector<128x128xf32>
    %cst = arith.constant dense<0.000000e+00> : vector<128xf32>
    %10 = vector.multi_reduction <add>, %9, %cst [1] : vector<128x128xf32> to vector<128xf32>
    %11 = vector.shape_cast %10 : vector<128xf32> to vector<128x1xf32>
    %cst_3 = arith.constant 1.280000e+02 : f32
    %12 = vector.broadcast %cst_3 : f32 to vector<128x1xf32>
    %13 = arith.divf %11, %12 : vector<128x1xf32>
    %14 = vector.broadcast %13 : vector<128x1xf32> to vector<128x128xf32>
    %15 = arith.subf %9, %14 : vector<128x128xf32>
    %16 = arith.mulf %15, %15 : vector<128x128xf32>
    %cst_4 = arith.constant dense<0.000000e+00> : vector<128xf32>
    %17 = vector.multi_reduction <add>, %16, %cst_4 [1] : vector<128x128xf32> to vector<128xf32>
    %18 = vector.shape_cast %17 : vector<128xf32> to vector<128x1xf32>
    %cst_5 = arith.constant 1.280000e+02 : f32
    %19 = vector.broadcast %cst_5 : f32 to vector<128x1xf32>
    %20 = arith.divf %18, %19 : vector<128x1xf32>
    %21 = vector.broadcast %13 : vector<128x1xf32> to vector<128x128xf32>
    %22 = arith.subf %9, %21 : vector<128x128xf32>
    %cst_6 = arith.constant 9.99999974E-6 : f32
    %23 = vector.broadcast %cst_6 : f32 to vector<128x1xf32>
    %24 = arith.addf %20, %23 : vector<128x1xf32>
    %25 = math.rsqrt %24 : vector<128x1xf32>
    %26 = vector.broadcast %25 : vector<128x1xf32> to vector<128x128xf32>
    %27 = arith.mulf %22, %26 : vector<128x128xf32>
    %c0_7 = arith.constant 0 : index
    %c0_8 = arith.constant 0 : index
    %28 = vector.load %arg3[%c0_7, %c0_8] : memref<1x128xf32, #tpu.memory_space<vmem>>, vector<1x128xf32>
    %29 = vector.broadcast %28 : vector<1x128xf32> to vector<128x128xf32>
    %30 = arith.mulf %27, %29 : vector<128x128xf32>
    %c0_9 = arith.constant 0 : index
    %c0_10 = arith.constant 0 : index
    %31 = vector.load %arg4[%c0_9, %c0_10] : memref<1x128xf32, #tpu.memory_space<vmem>>, vector<1x128xf32>
    %32 = vector.broadcast %31 : vector<1x128xf32> to vector<128x128xf32>
    %33 = arith.addf %30, %32 : vector<128x128xf32>
    %34 = arith.truncf %33 : vector<128x128xf32> to vector<128x128xbf16>
    %c0_11 = arith.constant 0 : index
    %c0_12 = arith.constant 0 : index
    %35 = vector.load %arg5[%c0_11, %c0_12] : memref<128x384xbf16, #tpu.memory_space<vmem>>, vector<128x384xbf16>
    %cst_13 = arith.constant dense<0.000000e+00> : vector<128x384xf32>
    %36 = tpu.matmul %34, %35, %cst_13 {dimension_numbers = #tpu.dot_dimension_numbers<[1], [0], [0], [1], [0, 0, 1, 1], [], []>} : vector<128x128xbf16>, vector<128x384xbf16>, vector<128x384xf32> -> vector<128x384xf32>
    %c0_14 = arith.constant 0 : index
    %c0_15 = arith.constant 0 : index
    %37 = vector.load %arg6[%c0_14, %c0_15] : memref<1x384xf32, #tpu.memory_space<vmem>>, vector<1x384xf32>
    %38 = vector.broadcast %37 : vector<1x384xf32> to vector<128x384xf32>
    %39 = arith.addf %36, %38 : vector<128x384xf32>
    %40 = vector.shape_cast %39 : vector<128x384xf32> to vector<2x64x384xf32>
    %c0_16 = arith.constant 0 : index
    %c0_17 = arith.constant 0 : index
    %c0_18 = arith.constant 0 : index
    %c0_19 = arith.constant 0 : index
    %41 = vector.load %arg9[%c0_16, %c0_17, %c0_18, %c0_19] : memref<1x8x64x64xf32, #tpu.memory_space<vmem>>, vector<1x8x64x64xf32>
    %42 = vector.shape_cast %41 : vector<1x8x64x64xf32> to vector<8x64x64xf32>
    %43 = vector.extract_strided_slice %40 {offsets = [0, 0, 0], sizes = [2, 64, 32], strides = [1, 1, 1]} : vector<2x64x384xf32> to vector<2x64x32xf32>
    %44 = arith.truncf %43 : vector<2x64x32xf32> to vector<2x64x32xbf16>
    %45 = vector.extract_strided_slice %40 {offsets = [0, 0, 128], sizes = [2, 64, 32], strides = [1, 1, 1]} : vector<2x64x384xf32> to vector<2x64x32xf32>
    %46 = arith.truncf %45 : vector<2x64x32xf32> to vector<2x64x32xbf16>
    %47 = vector.extract_strided_slice %40 {offsets = [0, 0, 256], sizes = [2, 64, 32], strides = [1, 1, 1]} : vector<2x64x384xf32> to vector<2x64x32xf32>
    %48 = arith.truncf %47 : vector<2x64x32xf32> to vector<2x64x32xbf16>
    "tpu.trace_start"() <{level = 10 : i32, message = "bnd,bmd->bnm"}> : () -> ()
    %cst_20 = arith.constant dense<0.000000e+00> : vector<2x64x64xf32>
    %49 = tpu.matmul %44, %46, %cst_20 {dimension_numbers = #tpu.dot_dimension_numbers<[2], [2], [1], [1], [0, 0, 0, 1, 1, 1], [0], [0]>} : vector<2x64x32xbf16>, vector<2x64x32xbf16>, vector<2x64x64xf32> -> vector<2x64x64xf32>
    "tpu.trace_stop"() : () -> ()
    %50 = vector.extract_strided_slice %42 {offsets = [0, 0, 0], sizes = [2, 64, 64], strides = [1, 1, 1]} : vector<8x64x64xf32> to vector<2x64x64xf32>
    %51 = arith.addf %49, %50 : vector<2x64x64xf32>
    %cst_21 = arith.constant dense<0xFF800000> : vector<2x64xf32>
    %52 = vector.multi_reduction <maximumf>, %51, %cst_21 [2] : vector<2x64x64xf32> to vector<2x64xf32>
    %53 = vector.shape_cast %52 : vector<2x64xf32> to vector<2x64x1xf32>
    %54 = vector.broadcast %53 : vector<2x64x1xf32> to vector<2x64x64xf32>
    %55 = arith.subf %51, %54 : vector<2x64x64xf32>
    %56 = math.exp %55 : vector<2x64x64xf32>
    %cst_22 = arith.constant dense<0.000000e+00> : vector<2x64xf32>
    %57 = vector.multi_reduction <add>, %56, %cst_22 [2] : vector<2x64x64xf32> to vector<2x64xf32>
    %58 = vector.shape_cast %57 : vector<2x64xf32> to vector<2x64x1xf32>
    %59 = arith.truncf %56 : vector<2x64x64xf32> to vector<2x64x64xbf16>
    "tpu.trace_start"() <{level = 10 : i32, message = "bnm,bmd->bnd"}> : () -> ()
    %cst_23 = arith.constant dense<0.000000e+00> : vector<2x64x32xf32>
    %60 = tpu.matmul %59, %48, %cst_23 {dimension_numbers = #tpu.dot_dimension_numbers<[2], [1], [1], [2], [0, 0, 0, 1, 1, 2], [0], [0]>} : vector<2x64x64xbf16>, vector<2x64x32xbf16>, vector<2x64x32xf32> -> vector<2x64x32xf32>
    "tpu.trace_stop"() : () -> ()
    %61 = tpu.reciprocal %58 {approx = true} : vector<2x64x1xf32> -> vector<2x64x1xf32>
    %62 = vector.broadcast %61 : vector<2x64x1xf32> to vector<2x64x32xf32>
    %63 = arith.mulf %60, %62 : vector<2x64x32xf32>
    %64 = vector.extract_strided_slice %40 {offsets = [0, 0, 32], sizes = [2, 64, 32], strides = [1, 1, 1]} : vector<2x64x384xf32> to vector<2x64x32xf32>
    %65 = arith.truncf %64 : vector<2x64x32xf32> to vector<2x64x32xbf16>
    %66 = vector.extract_strided_slice %40 {offsets = [0, 0, 160], sizes = [2, 64, 32], strides = [1, 1, 1]} : vector<2x64x384xf32> to vector<2x64x32xf32>
    %67 = arith.truncf %66 : vector<2x64x32xf32> to vector<2x64x32xbf16>
    %68 = vector.extract_strided_slice %40 {offsets = [0, 0, 288], sizes = [2, 64, 32], strides = [1, 1, 1]} : vector<2x64x384xf32> to vector<2x64x32xf32>
    %69 = arith.truncf %68 : vector<2x64x32xf32> to vector<2x64x32xbf16>
    "tpu.trace_start"() <{level = 10 : i32, message = "bnd,bmd->bnm"}> : () -> ()
    %cst_24 = arith.constant dense<0.000000e+00> : vector<2x64x64xf32>
    %70 = tpu.matmul %65, %67, %cst_24 {dimension_numbers = #tpu.dot_dimension_numbers<[2], [2], [1], [1], [0, 0, 0, 1, 1, 1], [0], [0]>} : vector<2x64x32xbf16>, vector<2x64x32xbf16>, vector<2x64x64xf32> -> vector<2x64x64xf32>
    "tpu.trace_stop"() : () -> ()
    %71 = vector.extract_strided_slice %42 {offsets = [2, 0, 0], sizes = [2, 64, 64], strides = [1, 1, 1]} : vector<8x64x64xf32> to vector<2x64x64xf32>
    %72 = arith.addf %70, %71 : vector<2x64x64xf32>
    %cst_25 = arith.constant dense<0xFF800000> : vector<2x64xf32>
    %73 = vector.multi_reduction <maximumf>, %72, %cst_25 [2] : vector<2x64x64xf32> to vector<2x64xf32>
    %74 = vector.shape_cast %73 : vector<2x64xf32> to vector<2x64x1xf32>
    %75 = vector.broadcast %74 : vector<2x64x1xf32> to vector<2x64x64xf32>
    %76 = arith.subf %72, %75 : vector<2x64x64xf32>
    %77 = math.exp %76 : vector<2x64x64xf32>
    %cst_26 = arith.constant dense<0.000000e+00> : vector<2x64xf32>
    %78 = vector.multi_reduction <add>, %77, %cst_26 [2] : vector<2x64x64xf32> to vector<2x64xf32>
    %79 = vector.shape_cast %78 : vector<2x64xf32> to vector<2x64x1xf32>
    %80 = arith.truncf %77 : vector<2x64x64xf32> to vector<2x64x64xbf16>
    "tpu.trace_start"() <{level = 10 : i32, message = "bnm,bmd->bnd"}> : () -> ()
    %cst_27 = arith.constant dense<0.000000e+00> : vector<2x64x32xf32>
    %81 = tpu.matmul %80, %69, %cst_27 {dimension_numbers = #tpu.dot_dimension_numbers<[2], [1], [1], [2], [0, 0, 0, 1, 1, 2], [0], [0]>} : vector<2x64x64xbf16>, vector<2x64x32xbf16>, vector<2x64x32xf32> -> vector<2x64x32xf32>
    "tpu.trace_stop"() : () -> ()
    %82 = tpu.reciprocal %79 {approx = true} : vector<2x64x1xf32> -> vector<2x64x1xf32>
    %83 = vector.broadcast %82 : vector<2x64x1xf32> to vector<2x64x32xf32>
    %84 = arith.mulf %81, %83 : vector<2x64x32xf32>
    %85 = vector.extract_strided_slice %40 {offsets = [0, 0, 64], sizes = [2, 64, 32], strides = [1, 1, 1]} : vector<2x64x384xf32> to vector<2x64x32xf32>
    %86 = arith.truncf %85 : vector<2x64x32xf32> to vector<2x64x32xbf16>
    %87 = vector.extract_strided_slice %40 {offsets = [0, 0, 192], sizes = [2, 64, 32], strides = [1, 1, 1]} : vector<2x64x384xf32> to vector<2x64x32xf32>
    %88 = arith.truncf %87 : vector<2x64x32xf32> to vector<2x64x32xbf16>
    %89 = vector.extract_strided_slice %40 {offsets = [0, 0, 320], sizes = [2, 64, 32], strides = [1, 1, 1]} : vector<2x64x384xf32> to vector<2x64x32xf32>
    %90 = arith.truncf %89 : vector<2x64x32xf32> to vector<2x64x32xbf16>
    "tpu.trace_start"() <{level = 10 : i32, message = "bnd,bmd->bnm"}> : () -> ()
    %cst_28 = arith.constant dense<0.000000e+00> : vector<2x64x64xf32>
    %91 = tpu.matmul %86, %88, %cst_28 {dimension_numbers = #tpu.dot_dimension_numbers<[2], [2], [1], [1], [0, 0, 0, 1, 1, 1], [0], [0]>} : vector<2x64x32xbf16>, vector<2x64x32xbf16>, vector<2x64x64xf32> -> vector<2x64x64xf32>
    "tpu.trace_stop"() : () -> ()
    %92 = vector.extract_strided_slice %42 {offsets = [4, 0, 0], sizes = [2, 64, 64], strides = [1, 1, 1]} : vector<8x64x64xf32> to vector<2x64x64xf32>
    %93 = arith.addf %91, %92 : vector<2x64x64xf32>
    %cst_29 = arith.constant dense<0xFF800000> : vector<2x64xf32>
    %94 = vector.multi_reduction <maximumf>, %93, %cst_29 [2] : vector<2x64x64xf32> to vector<2x64xf32>
    %95 = vector.shape_cast %94 : vector<2x64xf32> to vector<2x64x1xf32>
    %96 = vector.broadcast %95 : vector<2x64x1xf32> to vector<2x64x64xf32>
    %97 = arith.subf %93, %96 : vector<2x64x64xf32>
    %98 = math.exp %97 : vector<2x64x64xf32>
    %cst_30 = arith.constant dense<0.000000e+00> : vector<2x64xf32>
    %99 = vector.multi_reduction <add>, %98, %cst_30 [2] : vector<2x64x64xf32> to vector<2x64xf32>
    %100 = vector.shape_cast %99 : vector<2x64xf32> to vector<2x64x1xf32>
    %101 = arith.truncf %98 : vector<2x64x64xf32> to vector<2x64x64xbf16>
    "tpu.trace_start"() <{level = 10 : i32, message = "bnm,bmd->bnd"}> : () -> ()
    %cst_31 = arith.constant dense<0.000000e+00> : vector<2x64x32xf32>
    %102 = tpu.matmul %101, %90, %cst_31 {dimension_numbers = #tpu.dot_dimension_numbers<[2], [1], [1], [2], [0, 0, 0, 1, 1, 2], [0], [0]>} : vector<2x64x64xbf16>, vector<2x64x32xbf16>, vector<2x64x32xf32> -> vector<2x64x32xf32>
    "tpu.trace_stop"() : () -> ()
    %103 = tpu.reciprocal %100 {approx = true} : vector<2x64x1xf32> -> vector<2x64x1xf32>
    %104 = vector.broadcast %103 : vector<2x64x1xf32> to vector<2x64x32xf32>
    %105 = arith.mulf %102, %104 : vector<2x64x32xf32>
    %106 = vector.extract_strided_slice %40 {offsets = [0, 0, 96], sizes = [2, 64, 32], strides = [1, 1, 1]} : vector<2x64x384xf32> to vector<2x64x32xf32>
    %107 = arith.truncf %106 : vector<2x64x32xf32> to vector<2x64x32xbf16>
    %108 = vector.extract_strided_slice %40 {offsets = [0, 0, 224], sizes = [2, 64, 32], strides = [1, 1, 1]} : vector<2x64x384xf32> to vector<2x64x32xf32>
    %109 = arith.truncf %108 : vector<2x64x32xf32> to vector<2x64x32xbf16>
    %110 = vector.extract_strided_slice %40 {offsets = [0, 0, 352], sizes = [2, 64, 32], strides = [1, 1, 1]} : vector<2x64x384xf32> to vector<2x64x32xf32>
    %111 = arith.truncf %110 : vector<2x64x32xf32> to vector<2x64x32xbf16>
    "tpu.trace_start"() <{level = 10 : i32, message = "bnd,bmd->bnm"}> : () -> ()
    %cst_32 = arith.constant dense<0.000000e+00> : vector<2x64x64xf32>
    %112 = tpu.matmul %107, %109, %cst_32 {dimension_numbers = #tpu.dot_dimension_numbers<[2], [2], [1], [1], [0, 0, 0, 1, 1, 1], [0], [0]>} : vector<2x64x32xbf16>, vector<2x64x32xbf16>, vector<2x64x64xf32> -> vector<2x64x64xf32>
    "tpu.trace_stop"() : () -> ()
    %113 = vector.extract_strided_slice %42 {offsets = [6, 0, 0], sizes = [2, 64, 64], strides = [1, 1, 1]} : vector<8x64x64xf32> to vector<2x64x64xf32>
    %114 = arith.addf %112, %113 : vector<2x64x64xf32>
    %cst_33 = arith.constant dense<0xFF800000> : vector<2x64xf32>
    %115 = vector.multi_reduction <maximumf>, %114, %cst_33 [2] : vector<2x64x64xf32> to vector<2x64xf32>
    %116 = vector.shape_cast %115 : vector<2x64xf32> to vector<2x64x1xf32>
    %117 = vector.broadcast %116 : vector<2x64x1xf32> to vector<2x64x64xf32>
    %118 = arith.subf %114, %117 : vector<2x64x64xf32>
    %119 = math.exp %118 : vector<2x64x64xf32>
    %cst_34 = arith.constant dense<0.000000e+00> : vector<2x64xf32>
    %120 = vector.multi_reduction <add>, %119, %cst_34 [2] : vector<2x64x64xf32> to vector<2x64xf32>
    %121 = vector.shape_cast %120 : vector<2x64xf32> to vector<2x64x1xf32>
    %122 = arith.truncf %119 : vector<2x64x64xf32> to vector<2x64x64xbf16>
    "tpu.trace_start"() <{level = 10 : i32, message = "bnm,bmd->bnd"}> : () -> ()
    %cst_35 = arith.constant dense<0.000000e+00> : vector<2x64x32xf32>
    %123 = tpu.matmul %122, %111, %cst_35 {dimension_numbers = #tpu.dot_dimension_numbers<[2], [1], [1], [2], [0, 0, 0, 1, 1, 2], [0], [0]>} : vector<2x64x64xbf16>, vector<2x64x32xbf16>, vector<2x64x32xf32> -> vector<2x64x32xf32>
    "tpu.trace_stop"() : () -> ()
    %124 = tpu.reciprocal %121 {approx = true} : vector<2x64x1xf32> -> vector<2x64x1xf32>
    %125 = vector.broadcast %124 : vector<2x64x1xf32> to vector<2x64x32xf32>
    %126 = arith.mulf %123, %125 : vector<2x64x32xf32>
    %127 = tpu.concatenate %63, %84, %105, %126 in 2 : vector<2x64x32xf32>, vector<2x64x32xf32>, vector<2x64x32xf32>, vector<2x64x32xf32> -> vector<2x64x128xf32>
    %128 = vector.shape_cast %127 : vector<2x64x128xf32> to vector<128x128xf32>
    %129 = arith.truncf %128 : vector<128x128xf32> to vector<128x128xbf16>
    %c0_36 = arith.constant 0 : index
    %c0_37 = arith.constant 0 : index
    %130 = vector.load %arg7[%c0_36, %c0_37] : memref<128x128xbf16, #tpu.memory_space<vmem>>, vector<128x128xbf16>
    %cst_38 = arith.constant dense<0.000000e+00> : vector<128x128xf32>
    %131 = tpu.matmul %129, %130, %cst_38 {dimension_numbers = #tpu.dot_dimension_numbers<[1], [0], [0], [1], [0, 0, 1, 1], [], []>} : vector<128x128xbf16>, vector<128x128xbf16>, vector<128x128xf32> -> vector<128x128xf32>
    %c0_39 = arith.constant 0 : index
    %c0_40 = arith.constant 0 : index
    %132 = vector.load %arg8[%c0_39, %c0_40] : memref<1x128xf32, #tpu.memory_space<vmem>>, vector<1x128xf32>
    %133 = vector.broadcast %132 : vector<1x128xf32> to vector<128x128xf32>
    %134 = arith.addf %131, %133 : vector<128x128xf32>
    %135 = vector.shape_cast %134 : vector<128x128xf32> to vector<2x8x8x128xf32>
    %136 = arith.truncf %135 : vector<2x8x8x128xf32> to vector<2x8x8x128xbf16>
    %137 = vector.extract_strided_slice %136 {offsets = [0, 0, 0, 0], sizes = [1, 8, 8, 128], strides = [1, 1, 1, 1]} : vector<2x8x8x128xbf16> to vector<1x8x8x128xbf16>
    %138 = vector.shape_cast %137 : vector<1x8x8x128xbf16> to vector<8x8x128xbf16>
    %139 = vector.extract_strided_slice %136 {offsets = [1, 0, 0, 0], sizes = [1, 8, 8, 128], strides = [1, 1, 1, 1]} : vector<2x8x8x128xbf16> to vector<1x8x8x128xbf16>
    %140 = vector.shape_cast %139 : vector<1x8x8x128xbf16> to vector<8x8x128xbf16>
    %141 = tpu.concatenate %138, %140 in 1 : vector<8x8x128xbf16>, vector<8x8x128xbf16> -> vector<8x16x128xbf16>
    %c0_41 = arith.constant 0 : index
    %c0_42 = arith.constant 0 : index
    %c0_43 = arith.constant 0 : index
    %c0_44 = arith.constant 0 : index
    %142 = vector.load %arg10[%c0_41, %c0_42, %c0_43, %c0_44] : memref<1x8x16x128xbf16, #tpu.memory_space<vmem>>, vector<1x8x16x128xbf16>
    %143 = vector.shape_cast %142 : vector<1x8x16x128xbf16> to vector<8x16x128xbf16>
    %144 = vector.shape_cast %141 : vector<8x16x128xbf16> to vector<1x8x16x128xbf16>
    tpu.vector_store %arg10[%c0_41, %c0_42, %c0_43, %c0_44], %144 {strides = array<i32>} : memref<1x8x16x128xbf16, #tpu.memory_space<vmem>>, vector<1x8x16x128xbf16>,
    return
  }
  func.func @transform_0(%arg0: i32, %arg1: i32) -> (i32, i32, i32, i32) {
    %c0_i32 = arith.constant 0 : i32
    %c0_i32_0 = arith.constant 0 : i32
    %c0_i32_1 = arith.constant 0 : i32
    return %arg0, %arg1, %c0_i32, %c0_i32_0 : i32, i32, i32, i32
  }
  func.func @transform_1(%arg0: i32, %arg1: i32) -> (i32, i32) {
    %c0_i32 = arith.constant 0 : i32
    %c0_i32_0 = arith.constant 0 : i32
    %c0_i32_1 = arith.constant 0 : i32
    return %c0_i32, %c0_i32_0 : i32, i32
  }
  func.func @transform_2(%arg0: i32, %arg1: i32) -> (i32, i32) {
    %c0_i32 = arith.constant 0 : i32
    %c0_i32_0 = arith.constant 0 : i32
    %c0_i32_1 = arith.constant 0 : i32
    return %c0_i32, %c0_i32_0 : i32, i32
  }
  func.func @transform_3(%arg0: i32, %arg1: i32) -> (i32, i32) {
    %c0_i32 = arith.constant 0 : i32
    %c0_i32_0 = arith.constant 0 : i32
    %c0_i32_1 = arith.constant 0 : i32
    return %c0_i32, %c0_i32_0 : i32, i32
  }
  func.func @transform_4(%arg0: i32, %arg1: i32) -> (i32, i32) {
    %c0_i32 = arith.constant 0 : i32
    %c0_i32_0 = arith.constant 0 : i32
    %c0_i32_1 = arith.constant 0 : i32
    return %c0_i32, %c0_i32_0 : i32, i32
  }
  func.func @transform_5(%arg0: i32, %arg1: i32) -> (i32, i32) {
    %c0_i32 = arith.constant 0 : i32
    %c0_i32_0 = arith.constant 0 : i32
    %c0_i32_1 = arith.constant 0 : i32
    return %c0_i32, %c0_i32_0 : i32, i32
  }
  func.func @transform_6(%arg0: i32, %arg1: i32) -> (i32, i32) {
    %c0_i32 = arith.constant 0 : i32
    %c0_i32_0 = arith.constant 0 : i32
    %c0_i32_1 = arith.constant 0 : i32
    return %c0_i32, %c0_i32_0 : i32, i32
  }
  func.func @transform_7(%arg0: i32, %arg1: i32) -> (i32, i32, i32, i32) {
    %c0_i32 = arith.constant 0 : i32
    %c0_i32_0 = arith.constant 0 : i32
    %c0_i32_1 = arith.constant 0 : i32
    %c0_i32_2 = arith.constant 0 : i32
    return %arg1, %c0_i32, %c0_i32_0, %c0_i32_1 : i32, i32, i32, i32
  }
  func.func @transform_8(%arg0: i32, %arg1: i32) -> (i32, i32, i32, i32) {
    %c0_i32 = arith.constant 0 : i32
    %c0_i32_0 = arith.constant 0 : i32
    %c0_i32_1 = arith.constant 0 : i32
    return %arg0, %arg1, %c0_i32, %c0_i32_0 : i32, i32, i32, i32
  }
}

</mosaic_0001>

<llo_original>
// kernel: tpu_custom_call.1
$region0: #{tpu_custom_call.1}
  #allocation0 [shape = 'u32[]', space=smem, size = 0x4, offset = 0x4, fixed_abs, tag = 'smem constant byte address 0x4 - core index']
  #allocation1 [shape = 'u32[72,128]{1,0:T(1,128)}', space=vmem, size = 0x9000, scoped, tag = 'internal scratch']
  %s0 = inlined_call_operand.hbm [shape: f32[2,16,16,128], index: 0, kind: input, shape index: {}]
  %s1 = inlined_call_operand.hbm [shape: f32[1,128], index: 1, kind: input, shape index: {}]
  %s2 = inlined_call_operand.hbm [shape: f32[1,128], index: 2, kind: input, shape index: {}]
  %s3 = inlined_call_operand.hbm [shape: bf16[128,384], index: 3, kind: input, shape index: {}]
  %s4 = inlined_call_operand.vmem [shape: f32[1,384], index: 4, kind: input, shape index: {}]
  %s5 = inlined_call_operand.hbm [shape: bf16[128,128], index: 5, kind: input, shape index: {}]
  %s6 = inlined_call_operand.vmem [shape: f32[1,128], index: 6, kind: input, shape index: {}]
  %s7 = inlined_call_operand.hbm [shape: f32[2,8,64,64], index: 7, kind: input, shape index: {}]
  %s8 = inlined_call_operand.hbm [shape: bf16[2,16,16,128], index: 8, kind: output, shape index: {}]
  %s9 = sld [smem:[#allocation0]]
  $region89: #{tpu_custom_call.1} parent=0
    _
  %s11 = ssub.s32 1, %s9
  %s12 = scalar_select 0, %s11, %s9
  $region1: #{tpu_custom_call.1} parent=0
    #allocation2 [shape = 'u8[131072]{0}', space=vmem, size = 0x20000, scoped, tag = 'input window, operand 0']
    #allocation3 [shape = 's32[2]{0}', space=sflag, size = 0x8, scoped, tag = 'scoped memory for tpu_custom_call.1']
    #allocation4 [shape = 's32[2]{0}', space=sflag, size = 0x8, scoped, tag = 'scoped memory for tpu_custom_call.1']
    #allocation5 [shape = 'u8[512]{0}', space=vmem, size = 0x400, scoped, tag = 'input window, operand 1, single buffered']
    #allocation6 [shape = 's32[1]{0}', space=sflag, size = 0x4, scoped, tag = 'scoped memory for tpu_custom_call.1']
    #allocation7 [shape = 'u8[512]{0}', space=vmem, size = 0x400, scoped, tag = 'input window, operand 2, single buffered']
    #allocation8 [shape = 'u8[98304]{0}', space=vmem, size = 0x18000, scoped, tag = 'input window, operand 3, single buffered']
    #allocation9 [shape = 's32[1]{0}', space=sflag, size = 0x4, scoped, tag = 'scoped memory for tpu_custom_call.1']
    #allocation10 [shape = 'u8[32768]{0}', space=vmem, size = 0x8000, scoped, tag = 'input window, operand 5, single buffered']
    #allocation11 [shape = 'u8[524288]{0}', space=vmem, size = 0x80000, scoped, tag = 'input window, operand 7']
    #allocation12 [shape = 's32[2]{0}', space=sflag, size = 0x8, scoped, tag = 'scoped memory for tpu_custom_call.1']
    #allocation13 [shape = 'u8[65536]{0}', space=vmem, size = 0x10000, scoped, tag = 'output window, operand 0']
    %13 = vsyncpa [#allocation3], 0
    %s14 = scalar_lea.sflag [#allocation3], 1
    %15 = vsyncpa %s14, 0
    %16 = vsyncpa [#allocation6], 0
    %17 = vsyncpa [#allocation9], 0
    %18 = vsyncpa [#allocation12], 0
    %s19 = scalar_lea.sflag [#allocation12], 1
    %20 = vsyncpa %s19, 0
    %21 = vsyncpa [#allocation4], 0
    %s22 = scalar_lea.sflag [#allocation4], 1
    %23 = vsyncpa %s22, 0
    loop: start=0, step=1, limit=6
    $region2: #{tpu_custom_call.1} parent=1 // loop_pre_header
      _
    $region3: #{tpu_custom_call.1} parent=1 // loop_header
      %s25 = sphi 0, %s29
      %p26 = scmp.ge.s32.totalorder %s25, 6
      %s32 = sphi 0, %s44
      %s33 = sphi 0, %s40
      %s34 = sphi 0, %s32
      %s35 = sphi 0, %s33
      %s36 = sphi 0, %s34
      %s37 = sphi 0, %s35
      %s49 = sphi 0, %s51
      %s52 = sphi 0, %s49
      %s53 = sphi 0, %s52
      %s69 = sphi 0, %s53
      %s73 = sphi 0, %s73
      %s75 = sphi 0, %s73
      %s76 = sphi 0, %s75
      %s90 = sphi 0, %s76
      %s94 = sphi 0, %s94
      %s96 = sphi 0, %s94
      %s97 = sphi 0, %s96
      %s111 = sphi 0, %s97
      %s115 = sphi 0, %s115
      %s117 = sphi 0, %s115
      %s118 = sphi 0, %s117
      %s132 = sphi 0, %s118
      %s136 = sphi 0, %s136
      %s138 = sphi 0, %s136
      %s139 = sphi 0, %s138
      %s153 = sphi 0, %s139
      %s157 = sphi 0, %s157
      %s159 = sphi 0, %s157
      %s160 = sphi 0, %s159
      %s174 = sphi 0, %s160
      %s178 = sphi 0, %s178
      %s180 = sphi 0, %s178
      %s181 = sphi 0, %s180
      %s195 = sphi 0, %s181
      %s201 = sphi 0, %s203
      %s204 = sphi 0, %s201
      %s205 = sphi 0, %s204
      %s221 = sphi 0, %s205
      %s229 = sphi 0, %s231
      %s232 = sphi 0, %s229
      %s233 = sphi 0, %s232
      %s249 = sphi 0, %s233
    $region4: #{tpu_custom_call.1} parent=1 // loop_header_branch
      %28 = sbr.rel (%p26) target = $region8
    $region5: #{tpu_custom_call.1} parent=1 // loop_body
      %s30 = ssub.s32 %s25, 1
      %s31 = ssub.s32 %s25, 2
      %s38 = sadd.s32 1, %s33
      %p39 = scmp.ge.s32.totalorder %s38, 2
      %s40 = scalar_select %p39, 0, %s38
      %s41 = sadd.s32 1, %s32
      %s42 = scalar_select %p39, %s41, %s32
      %p43 = scmp.ge.s32.totalorder %s42, 2
      %s44 = scalar_select %p43, 0, %s42
      %s45 = ssub.s32 %s32, %s44
      %s46 = ssub.s32 %s33, %s40
      %s47 = sor.u32 %s45, %s46
      %p48 = scmp.eq.s32.totalorder %s47, 0
      %s50 = sadd.s32 %s49, 1
      %s51 = scalar_select %p48, %s49, %s50
      %p54 = pneg %p48
      %p55 = scmp.eq.s32.totalorder %s25, 3
      %p56 = por %p54, %p55
      %p57 = scmp.ne.s32.totalorder %s49, %s52
      %p58 = scmp.eq.s32.totalorder %s25, 0
      %p59 = por %p57, %p58
      %p60 = scmp.ne.s32.totalorder %s49, %s52
      %p61 = scmp.eq.s32.totalorder %s30, 3
      %p62 = por %p60, %p61
      %p63 = scmp.ne.s32.totalorder %s52, %s53
      %p64 = scmp.eq.s32.totalorder %s30, 0
      %p65 = por %p63, %p64
      %p66 = scmp.ne.s32.totalorder %s52, %s53
      %p67 = scmp.eq.s32.totalorder %s31, 3
      %p68 = por %p66, %p67
      %p70 = scmp.ne.s32.totalorder %s53, %s69
      %p71 = scmp.eq.s32.totalorder %s31, 0
      %p72 = por %p70, %p71
      %s74 = sadd.s32 %s73, 1
      %p77 = scmp.eq.s32.totalorder %s25, 3
      %p78 = scmp.ne.s32.totalorder %s73, %s75
      %p79 = scmp.eq.s32.totalorder %s25, 0
      %p80 = por %p78, %p79
      %p81 = scmp.ne.s32.totalorder %s73, %s75
      %p82 = scmp.eq.s32.totalorder %s30, 3
      %p83 = por %p81, %p82
      %p84 = scmp.ne.s32.totalorder %s75, %s76
      %p85 = scmp.eq.s32.totalorder %s30, 0
      %p86 = por %p84, %p85
      %p87 = scmp.ne.s32.totalorder %s75, %s76
      %p88 = scmp.eq.s32.totalorder %s31, 3
      %p89 = por %p87, %p88
      %p91 = scmp.ne.s32.totalorder %s76, %s90
      %p92 = scmp.eq.s32.totalorder %s31, 0
      %p93 = por %p91, %p92
      %s95 = sadd.s32 %s94, 1
      %p98 = scmp.eq.s32.totalorder %s25, 3
      %p99 = scmp.ne.s32.totalorder %s94, %s96
      %p100 = scmp.eq.s32.totalorder %s25, 0
      %p101 = por %p99, %p100
      %p102 = scmp.ne.s32.totalorder %s94, %s96
      %p103 = scmp.eq.s32.totalorder %s30, 3
      %p104 = por %p102, %p103
      %p105 = scmp.ne.s32.totalorder %s96, %s97
      %p106 = scmp.eq.s32.totalorder %s30, 0
      %p107 = por %p105, %p106
      %p108 = scmp.ne.s32.totalorder %s96, %s97
      %p109 = scmp.eq.s32.totalorder %s31, 3
      %p110 = por %p108, %p109
      %p112 = scmp.ne.s32.totalorder %s97, %s111
      %p113 = scmp.eq.s32.totalorder %s31, 0
      %p114 = por %p112, %p113
      %s116 = sadd.s32 %s115, 1
      %p119 = scmp.eq.s32.totalorder %s25, 3
      %p120 = scmp.ne.s32.totalorder %s115, %s117
      %p121 = scmp.eq.s32.totalorder %s25, 0
      %p122 = por %p120, %p121
      %p123 = scmp.ne.s32.totalorder %s115, %s117
      %p124 = scmp.eq.s32.totalorder %s30, 3
      %p125 = por %p123, %p124
      %p126 = scmp.ne.s32.totalorder %s117, %s118
      %p127 = scmp.eq.s32.totalorder %s30, 0
      %p128 = por %p126, %p127
      %p129 = scmp.ne.s32.totalorder %s117, %s118
      %p130 = scmp.eq.s32.totalorder %s31, 3
      %p131 = por %p129, %p130
      %p133 = scmp.ne.s32.totalorder %s118, %s132
      %p134 = scmp.eq.s32.totalorder %s31, 0
      %p135 = por %p133, %p134
      %s137 = sadd.s32 %s136, 1
      %p140 = scmp.eq.s32.totalorder %s25, 3
      %p141 = scmp.ne.s32.totalorder %s136, %s138
      %p142 = scmp.eq.s32.totalorder %s25, 0
      %p143 = por %p141, %p142
      %p144 = scmp.ne.s32.totalorder %s136, %s138
      %p145 = scmp.eq.s32.totalorder %s30, 3
      %p146 = por %p144, %p145
      %p147 = scmp.ne.s32.totalorder %s138, %s139
      %p148 = scmp.eq.s32.totalorder %s30, 0
      %p149 = por %p147, %p148
      %p150 = scmp.ne.s32.totalorder %s138, %s139
      %p151 = scmp.eq.s32.totalorder %s31, 3
      %p152 = por %p150, %p151
      %p154 = scmp.ne.s32.totalorder %s139, %s153
      %p155 = scmp.eq.s32.totalorder %s31, 0
      %p156 = por %p154, %p155
      %s158 = sadd.s32 %s157, 1
      %p161 = scmp.eq.s32.totalorder %s25, 3
      %p162 = scmp.ne.s32.totalorder %s157, %s159
      %p163 = scmp.eq.s32.totalorder %s25, 0
      %p164 = por %p162, %p163
      %p165 = scmp.ne.s32.totalorder %s157, %s159
      %p166 = scmp.eq.s32.totalorder %s30, 3
      %p167 = por %p165, %p166
      %p168 = scmp.ne.s32.totalorder %s159, %s160
      %p169 = scmp.eq.s32.totalorder %s30, 0
      %p170 = por %p168, %p169
      %p171 = scmp.ne.s32.totalorder %s159, %s160
      %p172 = scmp.eq.s32.totalorder %s31, 3
      %p173 = por %p171, %p172
      %p175 = scmp.ne.s32.totalorder %s160, %s174
      %p176 = scmp.eq.s32.totalorder %s31, 0
      %p177 = por %p175, %p176
      %s179 = sadd.s32 %s178, 1
      %p182 = scmp.eq.s32.totalorder %s25, 3
      %p183 = scmp.ne.s32.totalorder %s178, %s180
      %p184 = scmp.eq.s32.totalorder %s25, 0
      %p185 = por %p183, %p184
      %p186 = scmp.ne.s32.totalorder %s178, %s180
      %p187 = scmp.eq.s32.totalorder %s30, 3
      %p188 = por %p186, %p187
      %p189 = scmp.ne.s32.totalorder %s180, %s181
      %p190 = scmp.eq.s32.totalorder %s30, 0
      %p191 = por %p189, %p190
      %p192 = scmp.ne.s32.totalorder %s180, %s181
      %p193 = scmp.eq.s32.totalorder %s31, 3
      %p194 = por %p192, %p193
      %p196 = scmp.ne.s32.totalorder %s181, %s195
      %p197 = scmp.eq.s32.totalorder %s31, 0
      %p198 = por %p196, %p197
      %s199 = ssub.s32 %s33, %s40
      %p200 = scmp.eq.s32.totalorder %s199, 0
      %s202 = sadd.s32 %s201, 1
      %s203 = scalar_select %p200, %s201, %s202
      %p206 = pneg %p200
      %p207 = scmp.eq.s32.totalorder %s25, 3
      %p208 = por %p206, %p207
      %p209 = scmp.ne.s32.totalorder %s201, %s204
      %p210 = scmp.eq.s32.totalorder %s25, 0
      %p211 = por %p209, %p210
      %p212 = scmp.ne.s32.totalorder %s201, %s204
      %p213 = scmp.eq.s32.totalorder %s30, 3
      %p214 = por %p212, %p213
      %p215 = scmp.ne.s32.totalorder %s204, %s205
      %p216 = scmp.eq.s32.totalorder %s30, 0
      %p217 = por %p215, %p216
      %p218 = scmp.ne.s32.totalorder %s204, %s205
      %p219 = scmp.eq.s32.totalorder %s31, 3
      %p220 = por %p218, %p219
      %p222 = scmp.ne.s32.totalorder %s205, %s221
      %p223 = scmp.eq.s32.totalorder %s31, 0
      %p224 = por %p222, %p223
      %s225 = ssub.s32 %s32, %s44
      %s226 = ssub.s32 %s33, %s40
      %s227 = sor.u32 %s225, %s226
      %p228 = scmp.eq.s32.totalorder %s227, 0
      %s230 = sadd.s32 %s229, 1
      %s231 = scalar_select %p228, %s229, %s230
      %p234 = pneg %p228
      %p235 = scmp.eq.s32.totalorder %s25, 3
      %p236 = por %p234, %p235
      %p237 = scmp.ne.s32.totalorder %s229, %s232
      %p238 = scmp.eq.s32.totalorder %s25, 0
      %p239 = por %p237, %p238
      %p240 = scmp.ne.s32.totalorder %s229, %s232
      %p241 = scmp.eq.s32.totalorder %s30, 3
      %p242 = por %p240, %p241
      %p243 = scmp.ne.s32.totalorder %s232, %s233
      %p244 = scmp.eq.s32.totalorder %s30, 0
      %p245 = por %p243, %p244
      %p246 = scmp.ne.s32.totalorder %s232, %s233
      %p247 = scmp.eq.s32.totalorder %s31, 3
      %p248 = por %p246, %p247
      %p250 = scmp.ne.s32.totalorder %s233, %s249
      %p251 = scmp.eq.s32.totalorder %s31, 0
      %p252 = por %p250, %p251
      %p253 = scmp.le.s32.totalorder 1, %s25
      %p254 = scmp.lt.s32.totalorder %s25, 5
      %p255 = pnand %p253, %p254
      %p256 = pneg %p255
      // Predicated region
      $region9: #{tpu_custom_call.1} parent=5 // pred_check
        _
      $region10: #{tpu_custom_call.1} parent=5 // pred_check_branch
        %258 = sbr.rel (%p255) target = $region12
      $region11: #{tpu_custom_call.1} parent=5 // pred_region
        %s259 = ssub.s32 %s25, 1
        // Predicated region
        $region13: #{tpu_custom_call.1} parent=11 // pred_check
          %p260 = pneg %p86
        $region14: #{tpu_custom_call.1} parent=11 // pred_check_branch
          %262 = sbr.rel (%p260) target = $region16
        $region15: #{tpu_custom_call.1} parent=11 // pred_region
          %264 = vsyncadd [#allocation6], 0
          %s266 = sshll.u32 %s1, 4
          %s267 = int_to_ptr.hbm [resolvable:$true] %s266
          %s268 = sshll.u32 [#allocation5], 4
          %s269 = int_to_ptr.vmem [resolvable:$true] %s268
          %271 = dma.hbm_to_vmem [thread:$0]  %s267, 16, %s269, [#allocation6]
        $region16: #{tpu_custom_call.1} parent=11 // pred_fallthru
          _
        // Predicated region
        $region17: #{tpu_custom_call.1} parent=11 // pred_check
          %p272 = pneg %p107
        $region18: #{tpu_custom_call.1} parent=11 // pred_check_branch
          %274 = sbr.rel (%p272) target = $region20
        $region19: #{tpu_custom_call.1} parent=11 // pred_region
          %276 = vsyncadd [#allocation6], 0
          %s278 = sshll.u32 %s2, 4
          %s279 = int_to_ptr.hbm [resolvable:$true] %s278
          %s280 = sshll.u32 [#allocation7], 4
          %s281 = int_to_ptr.vmem [resolvable:$true] %s280
          %283 = dma.hbm_to_vmem [thread:$0]  %s279, 16, %s281, [#allocation6]
        $region20: #{tpu_custom_call.1} parent=11 // pred_fallthru
          _
        // Predicated region
        $region21: #{tpu_custom_call.1} parent=11 // pred_check
          %p284 = pneg %p128
        $region22: #{tpu_custom_call.1} parent=11 // pred_check_branch
          %286 = sbr.rel (%p284) target = $region24
        $region23: #{tpu_custom_call.1} parent=11 // pred_region
          %288 = vsyncadd [#allocation9], 0
          %s289 = sshll.u32 %s3, 4
          %s290 = int_to_ptr.hbm [resolvable:$true] %s289
          %s291 = sshll.u32 [#allocation8], 4
          %s292 = int_to_ptr.vmem [resolvable:$true] %s291
          %297 = dma.hbm_to_vmem [thread:$0]  %s290, 3072, %s292, [#allocation9], 192, 192, 12
        $region24: #{tpu_custom_call.1} parent=11 // pred_fallthru
          _
        // Predicated region
        $region25: #{tpu_custom_call.1} parent=11 // pred_check
          %p298 = pneg %p149
        $region26: #{tpu_custom_call.1} parent=11 // pred_check_branch
          %300 = sbr.rel (%p298) target = $region28
        $region27: #{tpu_custom_call.1} parent=11 // pred_region
          _
        $region28: #{tpu_custom_call.1} parent=11 // pred_fallthru
          _
        // Predicated region
        $region29: #{tpu_custom_call.1} parent=11 // pred_check
          %p301 = pneg %p170
        $region30: #{tpu_custom_call.1} parent=11 // pred_check_branch
          %303 = sbr.rel (%p301) target = $region32
        $region31: #{tpu_custom_call.1} parent=11 // pred_region
          %305 = vsyncadd [#allocation9], 0
          %s306 = sshll.u32 %s5, 4
          %s307 = int_to_ptr.hbm [resolvable:$true] %s306
          %s308 = sshll.u32 [#allocation10], 4
          %s309 = int_to_ptr.vmem [resolvable:$true] %s308
          %314 = dma.hbm_to_vmem [thread:$0]  %s307, 1024, %s309, [#allocation9], 64, 64, 4
        $region32: #{tpu_custom_call.1} parent=11 // pred_fallthru
          _
        // Predicated region
        $region33: #{tpu_custom_call.1} parent=11 // pred_check
          %p315 = pneg %p191
        $region34: #{tpu_custom_call.1} parent=11 // pred_check_branch
          %317 = sbr.rel (%p315) target = $region36
        $region35: #{tpu_custom_call.1} parent=11 // pred_region
          _
        $region36: #{tpu_custom_call.1} parent=11 // pred_fallthru
          _
      $region12: #{tpu_custom_call.1} parent=5 // pred_fallthru
        _
      %p318 = scmp.lt.s32.totalorder %s25, 4
      // Predicated region
      $region37: #{tpu_custom_call.1} parent=5 // pred_check
        %p319 = pneg %p318
      $region38: #{tpu_custom_call.1} parent=5 // pred_check_branch
        %321 = sbr.rel (%p319) target = $region40
      $region39: #{tpu_custom_call.1} parent=5 // pred_region
        // Predicated region
        $region41: #{tpu_custom_call.1} parent=39 // pred_check
          %p322 = pneg %p59
        $region42: #{tpu_custom_call.1} parent=39 // pred_check_branch
          %324 = sbr.rel (%p322) target = $region44
        $region43: #{tpu_custom_call.1} parent=39 // pred_region
          %s325 = sand.u32 %s49, 1
          %s326 = scalar_lea.sflag [#allocation3], %s325
          %s327 = sand.u32 %s49, 1
          %s328 = smul.addr %s327, 128
          %s329 = scalar_lea.vmem [#allocation2], %s328
          %s330 = smul.u32 8, %s33
          %332 = vsyncadd %s326, 0
          %s333 = smul.addr %s330, 2
          %s334 = smul.addr %s32, 32
          %s335 = sadd.s32 %s333, %s334
          %s336 = smul.addr %s335, 8
          %s337 = scalar_lea.hbm %s0, %s336
          %s338 = sshll.u32 %s337, 4
          %s339 = int_to_ptr.hbm [resolvable:$true] %s338
          %s340 = sshll.u32 %s329, 4
          %s341 = int_to_ptr.vmem [resolvable:$true] %s340
          %346 = dma.hbm_to_vmem [thread:$0]  %s339, 2048, %s341, %s326, 128, 128, 8
        $region44: #{tpu_custom_call.1} parent=39 // pred_fallthru
          _
        // Predicated region
        $region45: #{tpu_custom_call.1} parent=39 // pred_check
          %p347 = pneg %p211
        $region46: #{tpu_custom_call.1} parent=39 // pred_check_branch
          %349 = sbr.rel (%p347) target = $region48
        $region47: #{tpu_custom_call.1} parent=39 // pred_region
          %s350 = sand.u32 %s201, 1
          %s351 = scalar_lea.sflag [#allocation12], %s350
          %s352 = sand.u32 %s201, 1
          %s353 = smul.addr %s352, 512
          %s354 = scalar_lea.vmem [#allocation11], %s353
          %356 = vsyncadd %s351, 0
          %s357 = smul.addr %s33, 64
          %s358 = smul.addr %s357, 8
          %s359 = scalar_lea.hbm %s7, %s358
          %s360 = sshll.u32 %s359, 4
          %s361 = int_to_ptr.hbm [resolvable:$true] %s360
          %s362 = sshll.u32 %s354, 4
          %s363 = int_to_ptr.vmem [resolvable:$true] %s362
          %368 = dma.hbm_to_vmem [thread:$0]  %s361, 8192, %s363, %s351, 128, 128, 8
        $region48: #{tpu_custom_call.1} parent=39 // pred_fallthru
          _
      $region40: #{tpu_custom_call.1} parent=5 // pred_fallthru
        _
      %p369 = scmp.le.s32.totalorder 1, %s25
      %p370 = scmp.lt.s32.totalorder %s25, 5
      %p371 = pnand %p369, %p370
      %p372 = pneg %p371
      // Predicated region
      $region49: #{tpu_custom_call.1} parent=5 // pred_check
        _
      $region50: #{tpu_custom_call.1} parent=5 // pred_check_branch
        %374 = sbr.rel (%p371) target = $region52
      $region51: #{tpu_custom_call.1} parent=5 // pred_region
        %s375 = ssub.s32 %s25, 1
        %s376 = sand.u32 %s52, 1
        %s377 = scalar_lea.sflag [#allocation3], %s376
        %s378 = sand.u32 %s52, 1
        %s379 = smul.addr %s378, 128
        %s380 = scalar_lea.vmem [#allocation2], %s379
        // Predicated region
        $region53: #{tpu_custom_call.1} parent=51 // pred_check
          %p381 = pneg %p65
        $region54: #{tpu_custom_call.1} parent=51 // pred_check_branch
          %383 = sbr.rel (%p381) target = $region56
        $region55: #{tpu_custom_call.1} parent=51 // pred_region
          %385 = dma.done %s377, 2048
        $region56: #{tpu_custom_call.1} parent=51 // pred_fallthru
          _
        // Predicated region
        $region57: #{tpu_custom_call.1} parent=51 // pred_check
          %p386 = pneg %p86
        $region58: #{tpu_custom_call.1} parent=51 // pred_check_branch
          %388 = sbr.rel (%p386) target = $region60
        $region59: #{tpu_custom_call.1} parent=51 // pred_region
          %390 = dma.done [#allocation6], 16
        $region60: #{tpu_custom_call.1} parent=51 // pred_fallthru
          _
        // Predicated region
        $region61: #{tpu_custom_call.1} parent=51 // pred_check
          %p391 = pneg %p107
        $region62: #{tpu_custom_call.1} parent=51 // pred_check_branch
          %393 = sbr.rel (%p391) target = $region64
        $region63: #{tpu_custom_call.1} parent=51 // pred_region
          %395 = dma.done [#allocation6], 16
        $region64: #{tpu_custom_call.1} parent=51 // pred_fallthru
          _
        // Predicated region
        $region65: #{tpu_custom_call.1} parent=51 // pred_check
          %p396 = pneg %p128
        $region66: #{tpu_custom_call.1} parent=51 // pred_check_branch
          %398 = sbr.rel (%p396) target = $region68
        $region67: #{tpu_custom_call.1} parent=51 // pred_region
          %400 = dma.done [#allocation9], 3072
        $region68: #{tpu_custom_call.1} parent=51 // pred_fallthru
          _
        // Predicated region
        $region69: #{tpu_custom_call.1} parent=51 // pred_check
          %p401 = pneg %p170
        $region70: #{tpu_custom_call.1} parent=51 // pred_check_branch
          %403 = sbr.rel (%p401) target = $region72
        $region71: #{tpu_custom_call.1} parent=51 // pred_region
          %405 = dma.done [#allocation9], 1024
        $region72: #{tpu_custom_call.1} parent=51 // pred_fallthru
          _
        %s406 = sand.u32 %s204, 1
        %s407 = scalar_lea.sflag [#allocation12], %s406
        %s408 = sand.u32 %s204, 1
        %s409 = smul.addr %s408, 512
        %s410 = scalar_lea.vmem [#allocation11], %s409
        // Predicated region
        $region73: #{tpu_custom_call.1} parent=51 // pred_check
          %p411 = pneg %p217
        $region74: #{tpu_custom_call.1} parent=51 // pred_check_branch
          %413 = sbr.rel (%p411) target = $region76
        $region75: #{tpu_custom_call.1} parent=51 // pred_region
          %415 = dma.done %s407, 8192
        $region76: #{tpu_custom_call.1} parent=51 // pred_fallthru
          _
        %s416 = sand.u32 %s52, 1
        %s417 = scalar_lea.sflag [#allocation3], %s416
        %s418 = sand.u32 %s52, 1
        %s419 = smul.addr %s418, 128
        %s420 = scalar_lea.vmem [#allocation2], %s419
        %p421 = pneg %p65
        %p422 = pneg %p62
        %p423 = pneg %p86
        %p424 = pneg %p83
        %p425 = pneg %p107
        %p426 = pneg %p104
        %p427 = pneg %p128
        %p428 = pneg %p125
        %p429 = pneg %p149
        %p430 = pneg %p146
        %p431 = pneg %p170
        %p432 = pneg %p167
        %p433 = pneg %p191
        %p434 = pneg %p188
        %s435 = sand.u32 %s204, 1
        %s436 = scalar_lea.sflag [#allocation12], %s435
        %s437 = sand.u32 %s204, 1
        %s438 = smul.addr %s437, 512
        %s439 = scalar_lea.vmem [#allocation11], %s438
        %p440 = pneg %p217
        %p441 = pneg %p214
        %p442 = pneg %p245
        %p443 = pneg %p242
        %s444 = sand.u32 %s232, 1
        %s445 = scalar_lea.sflag [#allocation4], %s444
        %s446 = sand.u32 %s232, 1
        %s447 = smul.addr %s446, 64
        %s448 = scalar_lea.vmem [#allocation13], %s447
        %s449 = smul.u32 8, %s35
        %s450 = smul.u32 8, %s35
        %v452 = vld [vmem:[%s380] sm:$0xff]
        %v453 = vld [vmem:[%s380 + $0x8] sm:$0xff]
        %v454 = vld [vmem:[%s380 + $0x10] sm:$0xff]
        %v455 = vld [vmem:[%s380 + $0x18] sm:$0xff]
        %v456 = vld [vmem:[%s380 + $0x20] sm:$0xff]
        %v457 = vld [vmem:[%s380 + $0x28] sm:$0xff]
        %v458 = vld [vmem:[%s380 + $0x30] sm:$0xff]
        %v459 = vld [vmem:[%s380 + $0x38] sm:$0xff]
        %v460 = vld [vmem:[%s380 + $0x40] sm:$0xff]
        %v461 = vld [vmem:[%s380 + $0x48] sm:$0xff]
        %v462 = vld [vmem:[%s380 + $0x50] sm:$0xff]
        %v463 = vld [vmem:[%s380 + $0x58] sm:$0xff]
        %v464 = vld [vmem:[%s380 + $0x60] sm:$0xff]
        %v465 = vld [vmem:[%s380 + $0x68] sm:$0xff]
        %v466 = vld [vmem:[%s380 + $0x70] sm:$0xff]
        %v467 = vld [vmem:[%s380 + $0x78] sm:$0xff]
        %468 = vadd.xlane.f32.xlu0 %v452
        %v469 = vpop.xlane.xlu0 %468
        %470 = vadd.xlane.f32.xlu0 %v454
        %v471 = vpop.xlane.xlu0 %470
        %472 = vadd.xlane.f32.xlu0 %v456
        %v473 = vpop.xlane.xlu0 %472
        %474 = vadd.xlane.f32.xlu0 %v458
        %v475 = vpop.xlane.xlu0 %474
        %476 = vadd.xlane.f32.xlu0 %v460
        %v477 = vpop.xlane.xlu0 %476
        %478 = vadd.xlane.f32.xlu0 %v462
        %v479 = vpop.xlane.xlu0 %478
        %480 = vadd.xlane.f32.xlu0 %v464
        %v481 = vpop.xlane.xlu0 %480
        %482 = vadd.xlane.f32.xlu0 %v466
        %v483 = vpop.xlane.xlu0 %482
        %484 = vadd.xlane.f32.xlu0 %v453
        %v485 = vpop.xlane.xlu0 %484
        %486 = vadd.xlane.f32.xlu0 %v455
        %v487 = vpop.xlane.xlu0 %486
        %488 = vadd.xlane.f32.xlu0 %v457
        %v489 = vpop.xlane.xlu0 %488
        %490 = vadd.xlane.f32.xlu0 %v459
        %v491 = vpop.xlane.xlu0 %490
        %492 = vadd.xlane.f32.xlu0 %v461
        %v493 = vpop.xlane.xlu0 %492
        %494 = vadd.xlane.f32.xlu0 %v463
        %v495 = vpop.xlane.xlu0 %494
        %496 = vadd.xlane.f32.xlu0 %v465
        %v497 = vpop.xlane.xlu0 %496
        %498 = vadd.xlane.f32.xlu0 %v467
        %v499 = vpop.xlane.xlu0 %498
        %v500 = vrcp.pop 128.0
        %v501 = vmul.f32 128.0, %v500
        %v502 = vsub.f32 1.0, %v501
        %v503 = vmul.f32 %v500, %v502
        %v504 = vadd.f32 %v500, %v503
        %vm505 = vweird.f32 %v500
        %v506 = vsel %vm505, %v500, %v504
        %v507 = vmul.f32 %v469, %v506
        %v508 = vmul.f32 %v471, %v506
        %v509 = vmul.f32 %v473, %v506
        %v510 = vmul.f32 %v475, %v506
        %v511 = vmul.f32 %v477, %v506
        %v512 = vmul.f32 %v479, %v506
        %v513 = vmul.f32 %v481, %v506
        %v514 = vmul.f32 %v483, %v506
        %v515 = vmul.f32 %v485, %v506
        %v516 = vmul.f32 %v487, %v506
        %v517 = vmul.f32 %v489, %v506
        %v518 = vmul.f32 %v491, %v506
        %v519 = vmul.f32 %v493, %v506
        %v520 = vmul.f32 %v495, %v506
        %v521 = vmul.f32 %v497, %v506
        %v522 = vmul.f32 %v499, %v506
        %v523 = vsub.f32 %v452, %v507
        %v524 = vsub.f32 %v454, %v508
        %v525 = vsub.f32 %v456, %v509
        %v526 = vsub.f32 %v458, %v510
        %v527 = vsub.f32 %v460, %v511
        %v528 = vsub.f32 %v462, %v512
        %v529 = vsub.f32 %v464, %v513
        %v530 = vsub.f32 %v466, %v514
        %v531 = vsub.f32 %v453, %v515
        %v532 = vsub.f32 %v455, %v516
        %v533 = vsub.f32 %v457, %v517
        %v534 = vsub.f32 %v459, %v518
        %v535 = vsub.f32 %v461, %v519
        %v536 = vsub.f32 %v463, %v520
        %v537 = vsub.f32 %v465, %v521
        %v538 = vsub.f32 %v467, %v522
        %v539 = vmul.f32 %v523, %v523
        %v540 = vmul.f32 %v524, %v524
        %v541 = vmul.f32 %v525, %v525
        %v542 = vmul.f32 %v526, %v526
        %v543 = vmul.f32 %v527, %v527
        %v544 = vmul.f32 %v528, %v528
        %v545 = vmul.f32 %v529, %v529
        %v546 = vmul.f32 %v530, %v530
        %v547 = vmul.f32 %v531, %v531
        %v548 = vmul.f32 %v532, %v532
        %v549 = vmul.f32 %v533, %v533
        %v550 = vmul.f32 %v534, %v534
        %v551 = vmul.f32 %v535, %v535
        %v552 = vmul.f32 %v536, %v536
        %v553 = vmul.f32 %v537, %v537
        %v554 = vmul.f32 %v538, %v538
        %555 = vadd.xlane.f32.xlu0 %v539
        %v556 = vpop.xlane.xlu0 %555
        %557 = vadd.xlane.f32.xlu0 %v540
        %v558 = vpop.xlane.xlu0 %557
        %559 = vadd.xlane.f32.xlu0 %v541
        %v560 = vpop.xlane.xlu0 %559
        %561 = vadd.xlane.f32.xlu0 %v542
        %v562 = vpop.xlane.xlu0 %561
        %563 = vadd.xlane.f32.xlu0 %v543
        %v564 = vpop.xlane.xlu0 %563
        %565 = vadd.xlane.f32.xlu0 %v544
        %v566 = vpop.xlane.xlu0 %565
        %567 = vadd.xlane.f32.xlu0 %v545
        %v568 = vpop.xlane.xlu0 %567
        %569 = vadd.xlane.f32.xlu0 %v546
        %v570 = vpop.xlane.xlu0 %569
        %571 = vadd.xlane.f32.xlu0 %v547
        %v572 = vpop.xlane.xlu0 %571
        %573 = vadd.xlane.f32.xlu0 %v548
        %v574 = vpop.xlane.xlu0 %573
        %575 = vadd.xlane.f32.xlu0 %v549
        %v576 = vpop.xlane.xlu0 %575
        %577 = vadd.xlane.f32.xlu0 %v550
        %v578 = vpop.xlane.xlu0 %577
        %579 = vadd.xlane.f32.xlu0 %v551
        %v580 = vpop.xlane.xlu0 %579
        %581 = vadd.xlane.f32.xlu0 %v552
        %v582 = vpop.xlane.xlu0 %581
        %583 = vadd.xlane.f32.xlu0 %v553
        %v584 = vpop.xlane.xlu0 %583
        %585 = vadd.xlane.f32.xlu0 %v554
        %v586 = vpop.xlane.xlu0 %585
        %v587 = vmul.f32 %v556, %v506
        %v588 = vmul.f32 %v558, %v506
        %v589 = vmul.f32 %v560, %v506
        %v590 = vmul.f32 %v562, %v506
        %v591 = vmul.f32 %v564, %v506
        %v592 = vmul.f32 %v566, %v506
        %v593 = vmul.f32 %v568, %v506
        %v594 = vmul.f32 %v570, %v506
        %v595 = vmul.f32 %v572, %v506
        %v596 = vmul.f32 %v574, %v506
        %v597 = vmul.f32 %v576, %v506
        %v598 = vmul.f32 %v578, %v506
        %v599 = vmul.f32 %v580, %v506
        %v600 = vmul.f32 %v582, %v506
        %v601 = vmul.f32 %v584, %v506
        %v602 = vmul.f32 %v586, %v506
        %v603 = vadd.f32 %v587, 1e-05
        %v604 = vadd.f32 %v588, 1e-05
        %v605 = vadd.f32 %v589, 1e-05
        %v606 = vadd.f32 %v590, 1e-05
        %v607 = vadd.f32 %v591, 1e-05
        %v608 = vadd.f32 %v592, 1e-05
        %v609 = vadd.f32 %v593, 1e-05
        %v610 = vadd.f32 %v594, 1e-05
        %v611 = vadd.f32 %v595, 1e-05
        %v612 = vadd.f32 %v596, 1e-05
        %v613 = vadd.f32 %v597, 1e-05
        %v614 = vadd.f32 %v598, 1e-05
        %v615 = vadd.f32 %v599, 1e-05
        %v616 = vadd.f32 %v600, 1e-05
        %v617 = vadd.f32 %v601, 1e-05
        %v618 = vadd.f32 %v602, 1e-05
        %v619 = vrsqrt.pop %v603
        %v620 = vmul.f32 %v619, %v603
        %v621 = vmul.f32 %v620, %v619
        %v622 = vmul.f32 0.5, %v621
        %v623 = vsub.f32 1.5, %v622
        %v624 = vmul.f32 %v619, %v623
        %vm625 = vweird.f32 %v603
        %vm626 = vweird.f32 %v619
        %vm627 = vmor %vm625, %vm626
        %v628 = vsel %vm627, %v619, %v624
        %v629 = vrsqrt.pop %v604
        %v630 = vmul.f32 %v629, %v604
        %v631 = vmul.f32 %v630, %v629
        %v632 = vmul.f32 0.5, %v631
        %v633 = vsub.f32 1.5, %v632
        %v634 = vmul.f32 %v629, %v633
        %vm635 = vweird.f32 %v604
        %vm636 = vweird.f32 %v629
        %vm637 = vmor %vm635, %vm636
        %v638 = vsel %vm637, %v629, %v634
        %v639 = vrsqrt.pop %v605
        %v640 = vmul.f32 %v639, %v605
        %v641 = vmul.f32 %v640, %v639
        %v642 = vmul.f32 0.5, %v641
        %v643 = vsub.f32 1.5, %v642
        %v644 = vmul.f32 %v639, %v643
        %vm645 = vweird.f32 %v605
        %vm646 = vweird.f32 %v639
        %vm647 = vmor %vm645, %vm646
        %v648 = vsel %vm647, %v639, %v644
        %v649 = vrsqrt.pop %v606
        %v650 = vmul.f32 %v649, %v606
        %v651 = vmul.f32 %v650, %v649
        %v652 = vmul.f32 0.5, %v651
        %v653 = vsub.f32 1.5, %v652
        %v654 = vmul.f32 %v649, %v653
        %vm655 = vweird.f32 %v606
        %vm656 = vweird.f32 %v649
        %vm657 = vmor %vm655, %vm656
        %v658 = vsel %vm657, %v649, %v654
        %v659 = vrsqrt.pop %v607
        %v660 = vmul.f32 %v659, %v607
        %v661 = vmul.f32 %v660, %v659
        %v662 = vmul.f32 0.5, %v661
        %v663 = vsub.f32 1.5, %v662
        %v664 = vmul.f32 %v659, %v663
        %vm665 = vweird.f32 %v607
        %vm666 = vweird.f32 %v659
        %vm667 = vmor %vm665, %vm666
        %v668 = vsel %vm667, %v659, %v664
        %v669 = vrsqrt.pop %v608
        %v670 = vmul.f32 %v669, %v608
        %v671 = vmul.f32 %v670, %v669
        %v672 = vmul.f32 0.5, %v671
        %v673 = vsub.f32 1.5, %v672
        %v674 = vmul.f32 %v669, %v673
        %vm675 = vweird.f32 %v608
        %vm676 = vweird.f32 %v669
        %vm677 = vmor %vm675, %vm676
        %v678 = vsel %vm677, %v669, %v674
        %v679 = vrsqrt.pop %v609
        %v680 = vmul.f32 %v679, %v609
        %v681 = vmul.f32 %v680, %v679
        %v682 = vmul.f32 0.5, %v681
        %v683 = vsub.f32 1.5, %v682
        %v684 = vmul.f32 %v679, %v683
        %vm685 = vweird.f32 %v609
        %vm686 = vweird.f32 %v679
        %vm687 = vmor %vm685, %vm686
        %v688 = vsel %vm687, %v679, %v684
        %v689 = vrsqrt.pop %v610
        %v690 = vmul.f32 %v689, %v610
        %v691 = vmul.f32 %v690, %v689
        %v692 = vmul.f32 0.5, %v691
        %v693 = vsub.f32 1.5, %v692
        %v694 = vmul.f32 %v689, %v693
        %vm695 = vweird.f32 %v610
        %vm696 = vweird.f32 %v689
        %vm697 = vmor %vm695, %vm696
        %v698 = vsel %vm697, %v689, %v694
        %v699 = vrsqrt.pop %v611
        %v700 = vmul.f32 %v699, %v611
        %v701 = vmul.f32 %v700, %v699
        %v702 = vmul.f32 0.5, %v701
        %v703 = vsub.f32 1.5, %v702
        %v704 = vmul.f32 %v699, %v703
        %vm705 = vweird.f32 %v611
        %vm706 = vweird.f32 %v699
        %vm707 = vmor %vm705, %vm706
        %v708 = vsel %vm707, %v699, %v704
        %v709 = vrsqrt.pop %v612
        %v710 = vmul.f32 %v709, %v612
        %v711 = vmul.f32 %v710, %v709
        %v712 = vmul.f32 0.5, %v711
        %v713 = vsub.f32 1.5, %v712
        %v714 = vmul.f32 %v709, %v713
        %vm715 = vweird.f32 %v612
        %vm716 = vweird.f32 %v709
        %vm717 = vmor %vm715, %vm716
        %v718 = vsel %vm717, %v709, %v714
        %v719 = vrsqrt.pop %v613
        %v720 = vmul.f32 %v719, %v613
        %v721 = vmul.f32 %v720, %v719
        %v722 = vmul.f32 0.5, %v721
        %v723 = vsub.f32 1.5, %v722
        %v724 = vmul.f32 %v719, %v723
        %vm725 = vweird.f32 %v613
        %vm726 = vweird.f32 %v719
        %vm727 = vmor %vm725, %vm726
        %v728 = vsel %vm727, %v719, %v724
        %v729 = vrsqrt.pop %v614
        %v730 = vmul.f32 %v729, %v614
        %v731 = vmul.f32 %v730, %v729
        %v732 = vmul.f32 0.5, %v731
        %v733 = vsub.f32 1.5, %v732
        %v734 = vmul.f32 %v729, %v733
        %vm735 = vweird.f32 %v614
        %vm736 = vweird.f32 %v729
        %vm737 = vmor %vm735, %vm736
        %v738 = vsel %vm737, %v729, %v734
        %v739 = vrsqrt.pop %v615
        %v740 = vmul.f32 %v739, %v615
        %v741 = vmul.f32 %v740, %v739
        %v742 = vmul.f32 0.5, %v741
        %v743 = vsub.f32 1.5, %v742
        %v744 = vmul.f32 %v739, %v743
        %vm745 = vweird.f32 %v615
        %vm746 = vweird.f32 %v739
        %vm747 = vmor %vm745, %vm746
        %v748 = vsel %vm747, %v739, %v744
        %v749 = vrsqrt.pop %v616
        %v750 = vmul.f32 %v749, %v616
        %v751 = vmul.f32 %v750, %v749
        %v752 = vmul.f32 0.5, %v751
        %v753 = vsub.f32 1.5, %v752
        %v754 = vmul.f32 %v749, %v753
        %vm755 = vweird.f32 %v616
        %vm756 = vweird.f32 %v749
        %vm757 = vmor %vm755, %vm756
        %v758 = vsel %vm757, %v749, %v754
        %v759 = vrsqrt.pop %v617
        %v760 = vmul.f32 %v759, %v617
        %v761 = vmul.f32 %v760, %v759
        %v762 = vmul.f32 0.5, %v761
        %v763 = vsub.f32 1.5, %v762
        %v764 = vmul.f32 %v759, %v763
        %vm765 = vweird.f32 %v617
        %vm766 = vweird.f32 %v759
        %vm767 = vmor %vm765, %vm766
        %v768 = vsel %vm767, %v759, %v764
        %v769 = vrsqrt.pop %v618
        %v770 = vmul.f32 %v769, %v618
        %v771 = vmul.f32 %v770, %v769
        %v772 = vmul.f32 0.5, %v771
        %v773 = vsub.f32 1.5, %v772
        %v774 = vmul.f32 %v769, %v773
        %vm775 = vweird.f32 %v618
        %vm776 = vweird.f32 %v769
        %vm777 = vmor %vm775, %vm776
        %v778 = vsel %vm777, %v769, %v774
        %v779 = vmul.f32 %v523, %v628
        %v780 = vmul.f32 %v524, %v638
        %v781 = vmul.f32 %v525, %v648
        %v782 = vmul.f32 %v526, %v658
        %v783 = vmul.f32 %v527, %v668
        %v784 = vmul.f32 %v528, %v678
        %v785 = vmul.f32 %v529, %v688
        %v786 = vmul.f32 %v530, %v698
        %v787 = vmul.f32 %v531, %v708
        %v788 = vmul.f32 %v532, %v718
        %v789 = vmul.f32 %v533, %v728
        %v790 = vmul.f32 %v534, %v738
        %v791 = vmul.f32 %v535, %v748
        %v792 = vmul.f32 %v536, %v758
        %v793 = vmul.f32 %v537, %v768
        %v794 = vmul.f32 %v538, %v778
        %v795 = vld [vmem:[#allocation5] sm:$0x1]
        %v797 = vperm.slane %v795, 0
        %v799 = vmul.f32 %v779, %v797
        %v800 = vmul.f32 %v780, %v797
        %v801 = vmul.f32 %v781, %v797
        %v802 = vmul.f32 %v782, %v797
        %v803 = vmul.f32 %v783, %v797
        %v804 = vmul.f32 %v784, %v797
        %v805 = vmul.f32 %v785, %v797
        %v806 = vmul.f32 %v786, %v797
        %v807 = vmul.f32 %v787, %v797
        %v808 = vmul.f32 %v788, %v797
        %v809 = vmul.f32 %v789, %v797
        %v810 = vmul.f32 %v790, %v797
        %v811 = vmul.f32 %v791, %v797
        %v812 = vmul.f32 %v792, %v797
        %v813 = vmul.f32 %v793, %v797
        %v814 = vmul.f32 %v794, %v797
        %v815 = vld [vmem:[#allocation7] sm:$0x1]
        %v817 = vperm.slane %v815, 0
        %v819 = vadd.f32 %v799, %v817
        %v820 = vadd.f32 %v800, %v817
        %v821 = vadd.f32 %v801, %v817
        %v822 = vadd.f32 %v802, %v817
        %v823 = vadd.f32 %v803, %v817
        %v824 = vadd.f32 %v804, %v817
        %v825 = vadd.f32 %v805, %v817
        %v826 = vadd.f32 %v806, %v817
        %v827 = vadd.f32 %v807, %v817
        %v828 = vadd.f32 %v808, %v817
        %v829 = vadd.f32 %v809, %v817
        %v830 = vadd.f32 %v810, %v817
        %v831 = vadd.f32 %v811, %v817
        %v832 = vadd.f32 %v812, %v817
        %v833 = vadd.f32 %v813, %v817
        %v834 = vadd.f32 %v814, %v817
        %v835 = vpack.c.bf16 %v820, %v819
        %v836 = vpack.c.bf16 %v822, %v821
        %v837 = vpack.c.bf16 %v824, %v823
        %v838 = vpack.c.bf16 %v826, %v825
        %v839 = vpack.c.bf16 %v828, %v827
        %v840 = vpack.c.bf16 %v830, %v829
        %v841 = vpack.c.bf16 %v832, %v831
        %v842 = vpack.c.bf16 %v834, %v833
        %v843 = vld [vmem:[#allocation8] sm:$0xff]
        %v844 = vld [vmem:[#allocation8 + $0x8] sm:$0xf]
        %v845 = vld [vmem:[#allocation8 + $0xc] sm:$0xff]
        %v846 = vld [vmem:[#allocation8 + $0x14] sm:$0xf]
        %v847 = vld [vmem:[#allocation8 + $0x18] sm:$0xff]
        %v848 = vld [vmem:[#allocation8 + $0x20] sm:$0xf]
        %v849 = vld [vmem:[#allocation8 + $0x24] sm:$0xff]
        %v850 = vld [vmem:[#allocation8 + $0x2c] sm:$0xf]
        %v851 = vld [vmem:[#allocation8 + $0x30] sm:$0xff]
        %v852 = vld [vmem:[#allocation8 + $0x38] sm:$0xf]
        %v853 = vld [vmem:[#allocation8 + $0x3c] sm:$0xff]
        %v854 = vld [vmem:[#allocation8 + $0x44] sm:$0xf]
        %v855 = vld [vmem:[#allocation8 + $0x48] sm:$0xff]
        %v856 = vld [vmem:[#allocation8 + $0x50] sm:$0xf]
        %v857 = vld [vmem:[#allocation8 + $0x54] sm:$0xff]
        %v858 = vld [vmem:[#allocation8 + $0x5c] sm:$0xf]
        %v859 = vld [vmem:[#allocation8 + $0x60] sm:$0xff]
        %v860 = vld [vmem:[#allocation8 + $0x68] sm:$0xf]
        %v861 = vld [vmem:[#allocation8 + $0x6c] sm:$0xff]
        %v862 = vld [vmem:[#allocation8 + $0x74] sm:$0xf]
        %v863 = vld [vmem:[#allocation8 + $0x78] sm:$0xff]
        %v864 = vld [vmem:[#allocation8 + $0x80] sm:$0xf]
        %v865 = vld [vmem:[#allocation8 + $0x84] sm:$0xff]
        %v866 = vld [vmem:[#allocation8 + $0x8c] sm:$0xf]
        %v867 = vld [vmem:[#allocation8 + $0x90] sm:$0xff]
        %v868 = vld [vmem:[#allocation8 + $0x98] sm:$0xf]
        %v869 = vld [vmem:[#allocation8 + $0x9c] sm:$0xff]
        %v870 = vld [vmem:[#allocation8 + $0xa4] sm:$0xf]
        %v871 = vld [vmem:[#allocation8 + $0xa8] sm:$0xff]
        %v872 = vld [vmem:[#allocation8 + $0xb0] sm:$0xf]
        %v873 = vld [vmem:[#allocation8 + $0xb4] sm:$0xff]
        %v874 = vld [vmem:[#allocation8 + $0xbc] sm:$0xf]
        %v875 = vld [vmem:[%s4] sm:$0x7]
        %v877 = vperm.slane %v875, 0
        %v878 = vperm.slane %v875, 1
        %v879 = vperm.slane %v875, 2
        %v915 = vunpack.c.l.b16 %v843
        %v916 = vunpack.c.h.b16 %v843
        %v917 = vunpack.c.l.b16 %v844
        %v918 = vunpack.c.l.b16 %v845
        %v919 = vunpack.c.h.b16 %v845
        %v920 = vunpack.c.l.b16 %v846
        %v921 = vunpack.c.l.b16 %v847
        %v922 = vunpack.c.h.b16 %v847
        %v923 = vunpack.c.l.b16 %v848
        %v924 = vunpack.c.l.b16 %v849
        %v925 = vunpack.c.h.b16 %v849
        %v926 = vunpack.c.l.b16 %v850
        %v927 = vunpack.c.l.b16 %v851
        %v928 = vunpack.c.h.b16 %v851
        %v929 = vunpack.c.l.b16 %v852
        %v930 = vunpack.c.l.b16 %v853
        %v931 = vunpack.c.h.b16 %v853
        %v932 = vunpack.c.l.b16 %v854
        %v933 = vunpack.c.l.b16 %v855
        %v934 = vunpack.c.h.b16 %v855
        %v935 = vunpack.c.l.b16 %v856
        %v936 = vunpack.c.l.b16 %v857
        %v937 = vunpack.c.h.b16 %v857
        %v938 = vunpack.c.l.b16 %v858
        %v939 = vunpack.c.l.b16 %v859
        %v940 = vunpack.c.h.b16 %v859
        %v941 = vunpack.c.l.b16 %v860
        %v942 = vunpack.c.l.b16 %v861
        %v943 = vunpack.c.h.b16 %v861
        %v944 = vunpack.c.l.b16 %v862
        %v945 = vunpack.c.l.b16 %v863
        %v946 = vunpack.c.h.b16 %v863
        %v947 = vunpack.c.l.b16 %v864
        %v948 = vunpack.c.l.b16 %v865
        %v949 = vunpack.c.h.b16 %v865
        %v950 = vunpack.c.l.b16 %v866
        %v951 = vunpack.c.l.b16 %v867
        %v952 = vunpack.c.h.b16 %v867
        %v953 = vunpack.c.l.b16 %v868
        %v954 = vunpack.c.l.b16 %v869
        %v955 = vunpack.c.h.b16 %v869
        %v956 = vunpack.c.l.b16 %v870
        %v957 = vunpack.c.l.b16 %v871
        %v958 = vunpack.c.h.b16 %v871
        %v959 = vunpack.c.l.b16 %v872
        %v960 = vunpack.c.l.b16 %v873
        %v961 = vunpack.c.h.b16 %v873
        %v962 = vunpack.c.l.b16 %v874
        %v963 = vpack.c.b16 %v918, %v915
        %v964 = vpack.c.b16 %v919, %v916
        %v965 = vpack.c.b16 %v920, %v917
        %v966 = vpack.c.b16 %v924, %v921
        %v967 = vpack.c.b16 %v925, %v922
        %v968 = vpack.c.b16 %v926, %v923
        %v969 = vpack.c.b16 %v930, %v927
        %v970 = vpack.c.b16 %v931, %v928
        %v971 = vpack.c.b16 %v932, %v929
        %v972 = vpack.c.b16 %v936, %v933
        %v973 = vpack.c.b16 %v937, %v934
        %v974 = vpack.c.b16 %v938, %v935
        %v975 = vpack.c.b16 %v942, %v939
        %v976 = vpack.c.b16 %v943, %v940
        %v977 = vpack.c.b16 %v944, %v941
        %v978 = vpack.c.b16 %v948, %v945
        %v979 = vpack.c.b16 %v949, %v946
        %v980 = vpack.c.b16 %v950, %v947
        %v981 = vpack.c.b16 %v954, %v951
        %v982 = vpack.c.b16 %v955, %v952
        %v983 = vpack.c.b16 %v956, %v953
        %v984 = vpack.c.b16 %v960, %v957
        %v985 = vpack.c.b16 %v961, %v958
        %v986 = vpack.c.b16 %v962, %v959
        %1011 = vmatpush.bf16.msra.mxu0 %v984
        %1012 = vmatpush.bf16.msra.mxu0 %v981
        %1013 = vmatpush.bf16.msra.mxu0 %v978
        %1014 = vmatpush.bf16.msra.mxu0 %v975
        %1015 = vmatpush.bf16.msra.mxu0 %v972
        %1016 = vmatpush.bf16.msra.mxu0 %v969
        %1017 = vmatpush.bf16.msra.mxu0 %v966
        %1018 = vmatpush.bf16.msra.mxu0 %v963
        %1019 = vmatmul.bf16.gmra.mxu0 %v835
        %v1020 = vpop.f32.mrf.mxu0
        %v1021 = vadd.f32 %v877, %v1020
        %v1022 = vpop.f32.mrf.mxu0
        %v1023 = vadd.f32 %v877, %v1022
        %1024 = vmatmul.bf16.gmra.mxu0 %v836
        %v1025 = vpop.f32.mrf.mxu0
        %v1026 = vadd.f32 %v877, %v1025
        %v1027 = vpop.f32.mrf.mxu0
        %v1028 = vadd.f32 %v877, %v1027
        %1029 = vmatmul.bf16.gmra.mxu0 %v837
        %v1030 = vpop.f32.mrf.mxu0
        %v1031 = vadd.f32 %v877, %v1030
        %v1032 = vpop.f32.mrf.mxu0
        %v1033 = vadd.f32 %v877, %v1032
        %1034 = vmatmul.bf16.gmra.mxu0 %v838
        %v1035 = vpop.f32.mrf.mxu0
        %v1036 = vadd.f32 %v877, %v1035
        %v1037 = vpop.f32.mrf.mxu0
        %v1038 = vadd.f32 %v877, %v1037
        %1039 = vmatmul.bf16.gmra.mxu0 %v839
        %v1040 = vpop.f32.mrf.mxu0
        %v1041 = vadd.f32 %v877, %v1040
        %v1042 = vpop.f32.mrf.mxu0
        %v1043 = vadd.f32 %v877, %v1042
        %1044 = vmatmul.bf16.gmra.mxu0 %v840
        %v1045 = vpop.f32.mrf.mxu0
        %v1046 = vadd.f32 %v877, %v1045
        %v1047 = vpop.f32.mrf.mxu0
        %v1048 = vadd.f32 %v877, %v1047
        %1049 = vmatmul.bf16.gmra.mxu0 %v841
        %v1050 = vpop.f32.mrf.mxu0
        %v1051 = vadd.f32 %v877, %v1050
        %v1052 = vpop.f32.mrf.mxu0
        %v1053 = vadd.f32 %v877, %v1052
        %1054 = vmatmul.bf16.gmra.mxu0 %v842
        %v1055 = vpop.f32.mrf.mxu0
        %v1056 = vadd.f32 %v877, %v1055
        %v1057 = vpop.f32.mrf.mxu0
        %v1058 = vadd.f32 %v877, %v1057
        %1059 = vdwg.mxu0
        %1060 = vmatpush.bf16.msra.mxu0 %v985
        %1061 = vmatpush.bf16.msra.mxu0 %v982
        %1062 = vmatpush.bf16.msra.mxu0 %v979
        %1063 = vmatpush.bf16.msra.mxu0 %v976
        %1064 = vmatpush.bf16.msra.mxu0 %v973
        %1065 = vmatpush.bf16.msra.mxu0 %v970
        %1066 = vmatpush.bf16.msra.mxu0 %v967
        %1067 = vmatpush.bf16.msra.mxu0 %v964
        %1068 = vmatmul.bf16.gmra.mxu0 %v835
        %v1069 = vpop.f32.mrf.mxu0
        %v1070 = vadd.f32 %v878, %v1069
        %v1071 = vpop.f32.mrf.mxu0
        %v1072 = vadd.f32 %v878, %v1071
        %1073 = vmatmul.bf16.gmra.mxu0 %v836
        %v1074 = vpop.f32.mrf.mxu0
        %v1075 = vadd.f32 %v878, %v1074
        %v1076 = vpop.f32.mrf.mxu0
        %v1077 = vadd.f32 %v878, %v1076
        %1078 = vmatmul.bf16.gmra.mxu0 %v837
        %v1079 = vpop.f32.mrf.mxu0
        %v1080 = vadd.f32 %v878, %v1079
        %v1081 = vpop.f32.mrf.mxu0
        %v1082 = vadd.f32 %v878, %v1081
        %1083 = vmatmul.bf16.gmra.mxu0 %v838
        %v1084 = vpop.f32.mrf.mxu0
        %v1085 = vadd.f32 %v878, %v1084
        %v1086 = vpop.f32.mrf.mxu0
        %v1087 = vadd.f32 %v878, %v1086
        %1088 = vmatmul.bf16.gmra.mxu0 %v839
        %v1089 = vpop.f32.mrf.mxu0
        %v1090 = vadd.f32 %v878, %v1089
        %v1091 = vpop.f32.mrf.mxu0
        %v1092 = vadd.f32 %v878, %v1091
        %1093 = vmatmul.bf16.gmra.mxu0 %v840
        %v1094 = vpop.f32.mrf.mxu0
        %v1095 = vadd.f32 %v878, %v1094
        %v1096 = vpop.f32.mrf.mxu0
        %v1097 = vadd.f32 %v878, %v1096
        %1098 = vmatmul.bf16.gmra.mxu0 %v841
        %v1099 = vpop.f32.mrf.mxu0
        %v1100 = vadd.f32 %v878, %v1099
        %v1101 = vpop.f32.mrf.mxu0
        %v1102 = vadd.f32 %v878, %v1101
        %1103 = vmatmul.bf16.gmra.mxu0 %v842
        %v1104 = vpop.f32.mrf.mxu0
        %v1105 = vadd.f32 %v878, %v1104
        %v1106 = vpop.f32.mrf.mxu0
        %v1107 = vadd.f32 %v878, %v1106
        %1108 = vdwg.mxu0
        %1109 = vmatpush.bf16.msra.mxu0 %v986
        %1110 = vmatpush.bf16.msra.mxu0 %v983
        %1111 = vmatpush.bf16.msra.mxu0 %v980
        %1112 = vmatpush.bf16.msra.mxu0 %v977
        %1113 = vmatpush.bf16.msra.mxu0 %v974
        %1114 = vmatpush.bf16.msra.mxu0 %v971
        %1115 = vmatpush.bf16.msra.mxu0 %v968
        %1116 = vmatpush.bf16.msra.mxu0 %v965
        %1117 = vmatmul.bf16.gmra.mxu0 %v835
        %v1118 = vpop.f32.mrf.mxu0
        %v1119 = vadd.f32 %v879, %v1118
        %v1120 = vpop.f32.mrf.mxu0
        %v1121 = vadd.f32 %v879, %v1120
        %1122 = vmatmul.bf16.gmra.mxu0 %v836
        %v1123 = vpop.f32.mrf.mxu0
        %v1124 = vadd.f32 %v879, %v1123
        %v1125 = vpop.f32.mrf.mxu0
        %v1126 = vadd.f32 %v879, %v1125
        %1127 = vmatmul.bf16.gmra.mxu0 %v837
        %v1128 = vpop.f32.mrf.mxu0
        %v1129 = vadd.f32 %v879, %v1128
        %v1130 = vpop.f32.mrf.mxu0
        %v1131 = vadd.f32 %v879, %v1130
        %1132 = vmatmul.bf16.gmra.mxu0 %v838
        %v1133 = vpop.f32.mrf.mxu0
        %v1134 = vadd.f32 %v879, %v1133
        %v1135 = vpop.f32.mrf.mxu0
        %v1136 = vadd.f32 %v879, %v1135
        %1137 = vmatmul.bf16.gmra.mxu0 %v839
        %v1138 = vpop.f32.mrf.mxu0
        %v1139 = vadd.f32 %v879, %v1138
        %v1140 = vpop.f32.mrf.mxu0
        %v1141 = vadd.f32 %v879, %v1140
        %1142 = vmatmul.bf16.gmra.mxu0 %v840
        %v1143 = vpop.f32.mrf.mxu0
        %v1144 = vadd.f32 %v879, %v1143
        %v1145 = vpop.f32.mrf.mxu0
        %v1146 = vadd.f32 %v879, %v1145
        %1147 = vmatmul.bf16.gmra.mxu0 %v841
        %v1148 = vpop.f32.mrf.mxu0
        %v1149 = vadd.f32 %v879, %v1148
        %v1150 = vpop.f32.mrf.mxu0
        %v1151 = vadd.f32 %v879, %v1150
        %1152 = vmatmul.bf16.gmra.mxu0 %v842
        %v1153 = vpop.f32.mrf.mxu0
        %v1154 = vadd.f32 %v879, %v1153
        %v1155 = vpop.f32.mrf.mxu0
        %v1156 = vadd.f32 %v879, %v1155
        %1157 = vdwg.mxu0
        %v1158 = vld [vmem:[%s410] sm:$0xff]
        %v1159 = vld [vmem:[%s410 + $0x8] sm:$0xff]
        %v1160 = vld [vmem:[%s410 + $0x10] sm:$0xff]
        %v1161 = vld [vmem:[%s410 + $0x18] sm:$0xff]
        %v1162 = vld [vmem:[%s410 + $0x20] sm:$0xff]
        %v1163 = vld [vmem:[%s410 + $0x28] sm:$0xff]
        %v1164 = vld [vmem:[%s410 + $0x30] sm:$0xff]
        %v1165 = vld [vmem:[%s410 + $0x38] sm:$0xff]
        %v1166 = vld [vmem:[%s410 + $0x40] sm:$0xff]
        %v1167 = vld [vmem:[%s410 + $0x48] sm:$0xff]
        %v1168 = vld [vmem:[%s410 + $0x50] sm:$0xff]
        %v1169 = vld [vmem:[%s410 + $0x58] sm:$0xff]
        %v1170 = vld [vmem:[%s410 + $0x60] sm:$0xff]
        %v1171 = vld [vmem:[%s410 + $0x68] sm:$0xff]
        %v1172 = vld [vmem:[%s410 + $0x70] sm:$0xff]
        %v1173 = vld [vmem:[%s410 + $0x78] sm:$0xff]
        %v1174 = vld [vmem:[%s410 + $0x80] sm:$0xff]
        %v1175 = vld [vmem:[%s410 + $0x88] sm:$0xff]
        %v1176 = vld [vmem:[%s410 + $0x90] sm:$0xff]
        %v1177 = vld [vmem:[%s410 + $0x98] sm:$0xff]
        %v1178 = vld [vmem:[%s410 + $0xa0] sm:$0xff]
        %v1179 = vld [vmem:[%s410 + $0xa8] sm:$0xff]
        %v1180 = vld [vmem:[%s410 + $0xb0] sm:$0xff]
        %v1181 = vld [vmem:[%s410 + $0xb8] sm:$0xff]
        %v1182 = vld [vmem:[%s410 + $0xc0] sm:$0xff]
        %v1183 = vld [vmem:[%s410 + $0xc8] sm:$0xff]
        %v1184 = vld [vmem:[%s410 + $0xd0] sm:$0xff]
        %v1185 = vld [vmem:[%s410 + $0xd8] sm:$0xff]
        %v1186 = vld [vmem:[%s410 + $0xe0] sm:$0xff]
        %v1187 = vld [vmem:[%s410 + $0xe8] sm:$0xff]
        %v1188 = vld [vmem:[%s410 + $0xf0] sm:$0xff]
        %v1189 = vld [vmem:[%s410 + $0xf8] sm:$0xff]
        %v1190 = vld [vmem:[%s410 + $0x100] sm:$0xff]
        %v1191 = vld [vmem:[%s410 + $0x108] sm:$0xff]
        %v1192 = vld [vmem:[%s410 + $0x110] sm:$0xff]
        %v1193 = vld [vmem:[%s410 + $0x118] sm:$0xff]
        %v1194 = vld [vmem:[%s410 + $0x120] sm:$0xff]
        %v1195 = vld [vmem:[%s410 + $0x128] sm:$0xff]
        %v1196 = vld [vmem:[%s410 + $0x130] sm:$0xff]
        %v1197 = vld [vmem:[%s410 + $0x138] sm:$0xff]
        %v1198 = vld [vmem:[%s410 + $0x140] sm:$0xff]
        %v1199 = vld [vmem:[%s410 + $0x148] sm:$0xff]
        %v1200 = vld [vmem:[%s410 + $0x150] sm:$0xff]
        %v1201 = vld [vmem:[%s410 + $0x158] sm:$0xff]
        %v1202 = vld [vmem:[%s410 + $0x160] sm:$0xff]
        %v1203 = vld [vmem:[%s410 + $0x168] sm:$0xff]
        %v1204 = vld [vmem:[%s410 + $0x170] sm:$0xff]
        %v1205 = vld [vmem:[%s410 + $0x178] sm:$0xff]
        %v1206 = vld [vmem:[%s410 + $0x180] sm:$0xff]
        %v1207 = vld [vmem:[%s410 + $0x188] sm:$0xff]
        %v1208 = vld [vmem:[%s410 + $0x190] sm:$0xff]
        %v1209 = vld [vmem:[%s410 + $0x198] sm:$0xff]
        %v1210 = vld [vmem:[%s410 + $0x1a0] sm:$0xff]
        %v1211 = vld [vmem:[%s410 + $0x1a8] sm:$0xff]
        %v1212 = vld [vmem:[%s410 + $0x1b0] sm:$0xff]
        %v1213 = vld [vmem:[%s410 + $0x1b8] sm:$0xff]
        %v1214 = vld [vmem:[%s410 + $0x1c0] sm:$0xff]
        %v1215 = vld [vmem:[%s410 + $0x1c8] sm:$0xff]
        %v1216 = vld [vmem:[%s410 + $0x1d0] sm:$0xff]
        %v1217 = vld [vmem:[%s410 + $0x1d8] sm:$0xff]
        %v1218 = vld [vmem:[%s410 + $0x1e0] sm:$0xff]
        %v1219 = vld [vmem:[%s410 + $0x1e8] sm:$0xff]
        %v1220 = vld [vmem:[%s410 + $0x1f0] sm:$0xff]
        %v1221 = vld [vmem:[%s410 + $0x1f8] sm:$0xff]
        %v1222 = vpack.c.bf16 %v1021, %v1021
        %v1223 = vpack.c.bf16 %v1023, %v1023
        %v1224 = vpack.c.bf16 %v1026, %v1026
        %v1225 = vpack.c.bf16 %v1028, %v1028
        %v1226 = vpack.c.bf16 %v1031, %v1031
        %v1227 = vpack.c.bf16 %v1033, %v1033
        %v1228 = vpack.c.bf16 %v1036, %v1036
        %v1229 = vpack.c.bf16 %v1038, %v1038
        %v1230 = vpack.c.bf16 %v1041, %v1041
        %v1231 = vpack.c.bf16 %v1043, %v1043
        %v1232 = vpack.c.bf16 %v1046, %v1046
        %v1233 = vpack.c.bf16 %v1048, %v1048
        %v1234 = vpack.c.bf16 %v1051, %v1051
        %v1235 = vpack.c.bf16 %v1053, %v1053
        %v1236 = vpack.c.bf16 %v1056, %v1056
        %v1237 = vpack.c.bf16 %v1058, %v1058
        %v1238 = vpack.c.bf16 %v1070, %v1070
        %v1239 = vpack.c.bf16 %v1072, %v1072
        %v1240 = vpack.c.bf16 %v1075, %v1075
        %v1241 = vpack.c.bf16 %v1077, %v1077
        %v1242 = vpack.c.bf16 %v1080, %v1080
        %v1243 = vpack.c.bf16 %v1082, %v1082
        %v1244 = vpack.c.bf16 %v1085, %v1085
        %v1245 = vpack.c.bf16 %v1087, %v1087
        %v1246 = vpack.c.bf16 %v1090, %v1090
        %v1247 = vpack.c.bf16 %v1092, %v1092
        %v1248 = vpack.c.bf16 %v1095, %v1095
        %v1249 = vpack.c.bf16 %v1097, %v1097
        %v1250 = vpack.c.bf16 %v1100, %v1100
        %v1251 = vpack.c.bf16 %v1102, %v1102
        %v1252 = vpack.c.bf16 %v1105, %v1105
        %v1253 = vpack.c.bf16 %v1107, %v1107
        %v1254 = vpack.c.bf16 %v1119, %v1119
        %v1255 = vpack.c.bf16 %v1121, %v1121
        %v1256 = vpack.c.bf16 %v1124, %v1124
        %v1257 = vpack.c.bf16 %v1126, %v1126
        %v1258 = vpack.c.bf16 %v1129, %v1129
        %v1259 = vpack.c.bf16 %v1131, %v1131
        %v1260 = vpack.c.bf16 %v1134, %v1134
        %v1261 = vpack.c.bf16 %v1136, %v1136
        %v1262 = vpack.c.bf16 %v1139, %v1139
        %v1263 = vpack.c.bf16 %v1141, %v1141
        %v1264 = vpack.c.bf16 %v1144, %v1144
        %v1265 = vpack.c.bf16 %v1146, %v1146
        %v1266 = vpack.c.bf16 %v1149, %v1149
        %v1267 = vpack.c.bf16 %v1151, %v1151
        %v1268 = vpack.c.bf16 %v1154, %v1154
        %v1269 = vpack.c.bf16 %v1156, %v1156
        %v1278 = vunpack.c.l.b16 %v1222
        %v1279 = vunpack.c.l.b16 %v1223
        %v1280 = vunpack.c.l.b16 %v1224
        %v1281 = vunpack.c.l.b16 %v1225
        %v1282 = vunpack.c.l.b16 %v1226
        %v1283 = vunpack.c.l.b16 %v1227
        %v1284 = vunpack.c.l.b16 %v1228
        %v1285 = vunpack.c.l.b16 %v1229
        %v1286 = vpack.c.b16 %v1279, %v1278
        %v1287 = vpack.c.b16 %v1281, %v1280
        %v1288 = vpack.c.b16 %v1283, %v1282
        %v1289 = vpack.c.b16 %v1285, %v1284
        %v1298 = vunpack.c.l.b16 %v1238
        %v1299 = vunpack.c.l.b16 %v1239
        %v1300 = vunpack.c.l.b16 %v1240
        %v1301 = vunpack.c.l.b16 %v1241
        %v1302 = vunpack.c.l.b16 %v1242
        %v1303 = vunpack.c.l.b16 %v1243
        %v1304 = vunpack.c.l.b16 %v1244
        %v1305 = vunpack.c.l.b16 %v1245
        %v1306 = vpack.c.b16 %v1299, %v1298
        %v1307 = vpack.c.b16 %v1301, %v1300
        %v1308 = vpack.c.b16 %v1303, %v1302
        %v1309 = vpack.c.b16 %v1305, %v1304
        %vm1310 = vcmask 261120
        %v1312 = vsel %vm1310, %v1286, 0
        %v1315 = vsel %vm1310, %v1287, 0
        %v1318 = vsel %vm1310, %v1288, 0
        %v1321 = vsel %vm1310, %v1289, 0
        %v1324 = vsel %vm1310, %v1306, 0
        %v1327 = vsel %vm1310, %v1307, 0
        %v1330 = vsel %vm1310, %v1308, 0
        %v1333 = vsel %vm1310, %v1309, 0
        %1335 = vmatpush.bf16.xpose.msra.mxu0 0
        %1336 = vmatpush.bf16.xpose.msra.mxu0 0
        %1337 = vmatpush.bf16.xpose.msra.mxu0 0
        %1338 = vmatpush.bf16.xpose.msra.mxu0 0
        %1339 = vmatpush.bf16.xpose.msra.mxu0 %v1333
        %1340 = vmatpush.bf16.xpose.msra.mxu0 %v1330
        %1341 = vmatpush.bf16.xpose.msra.mxu0 %v1327
        %1342 = vmatpush.bf16.xpose.msra.mxu0 %v1324
        %1343 = vmatmul.bf16.gmra.mxu0 %v1312
        %v1344 = vpop.f32.mrf.mxu0
        %v1345 = vadd.f32 %v1158, %v1344
        %v1346 = vpop.f32.mrf.mxu0
        %v1347 = vadd.f32 %v1159, %v1346
        %1348 = vmatmul.bf16.gmra.mxu0 %v1315
        %v1349 = vpop.f32.mrf.mxu0
        %v1350 = vadd.f32 %v1160, %v1349
        %v1351 = vpop.f32.mrf.mxu0
        %v1352 = vadd.f32 %v1161, %v1351
        %1353 = vmatmul.bf16.gmra.mxu0 %v1318
        %v1354 = vpop.f32.mrf.mxu0
        %v1355 = vadd.f32 %v1162, %v1354
        %v1356 = vpop.f32.mrf.mxu0
        %v1357 = vadd.f32 %v1163, %v1356
        %1358 = vmatmul.bf16.gmra.mxu0 %v1321
        %v1359 = vpop.f32.mrf.mxu0
        %v1360 = vadd.f32 %v1164, %v1359
        %v1361 = vpop.f32.mrf.mxu0
        %v1362 = vadd.f32 %v1165, %v1361
        %1363 = vdwg.mxu0
        %v1372 = vunpack.c.l.b16 %v1230
        %v1373 = vunpack.c.l.b16 %v1231
        %v1374 = vunpack.c.l.b16 %v1232
        %v1375 = vunpack.c.l.b16 %v1233
        %v1376 = vunpack.c.l.b16 %v1234
        %v1377 = vunpack.c.l.b16 %v1235
        %v1378 = vunpack.c.l.b16 %v1236
        %v1379 = vunpack.c.l.b16 %v1237
        %v1380 = vpack.c.b16 %v1373, %v1372
        %v1381 = vpack.c.b16 %v1375, %v1374
        %v1382 = vpack.c.b16 %v1377, %v1376
        %v1383 = vpack.c.b16 %v1379, %v1378
        %v1392 = vunpack.c.l.b16 %v1246
        %v1393 = vunpack.c.l.b16 %v1247
        %v1394 = vunpack.c.l.b16 %v1248
        %v1395 = vunpack.c.l.b16 %v1249
        %v1396 = vunpack.c.l.b16 %v1250
        %v1397 = vunpack.c.l.b16 %v1251
        %v1398 = vunpack.c.l.b16 %v1252
        %v1399 = vunpack.c.l.b16 %v1253
        %v1400 = vpack.c.b16 %v1393, %v1392
        %v1401 = vpack.c.b16 %v1395, %v1394
        %v1402 = vpack.c.b16 %v1397, %v1396
        %v1403 = vpack.c.b16 %v1399, %v1398
        %v1405 = vsel %vm1310, %v1380, 0
        %v1408 = vsel %vm1310, %v1381, 0
        %v1411 = vsel %vm1310, %v1382, 0
        %v1414 = vsel %vm1310, %v1383, 0
        %v1417 = vsel %vm1310, %v1400, 0
        %v1420 = vsel %vm1310, %v1401, 0
        %v1423 = vsel %vm1310, %v1402, 0
        %v1426 = vsel %vm1310, %v1403, 0
        %1428 = vmatpush.bf16.xpose.msra.mxu0 0
        %1429 = vmatpush.bf16.xpose.msra.mxu0 0
        %1430 = vmatpush.bf16.xpose.msra.mxu0 0
        %1431 = vmatpush.bf16.xpose.msra.mxu0 0
        %1432 = vmatpush.bf16.xpose.msra.mxu0 %v1426
        %1433 = vmatpush.bf16.xpose.msra.mxu0 %v1423
        %1434 = vmatpush.bf16.xpose.msra.mxu0 %v1420
        %1435 = vmatpush.bf16.xpose.msra.mxu0 %v1417
        %1436 = vmatmul.bf16.gmra.mxu0 %v1405
        %v1437 = vpop.f32.mrf.mxu0
        %v1438 = vadd.f32 %v1166, %v1437
        %v1439 = vpop.f32.mrf.mxu0
        %v1440 = vadd.f32 %v1167, %v1439
        %1441 = vmatmul.bf16.gmra.mxu0 %v1408
        %v1442 = vpop.f32.mrf.mxu0
        %v1443 = vadd.f32 %v1168, %v1442
        %v1444 = vpop.f32.mrf.mxu0
        %v1445 = vadd.f32 %v1169, %v1444
        %1446 = vmatmul.bf16.gmra.mxu0 %v1411
        %v1447 = vpop.f32.mrf.mxu0
        %v1448 = vadd.f32 %v1170, %v1447
        %v1449 = vpop.f32.mrf.mxu0
        %v1450 = vadd.f32 %v1171, %v1449
        %1451 = vmatmul.bf16.gmra.mxu0 %v1414
        %v1452 = vpop.f32.mrf.mxu0
        %v1453 = vadd.f32 %v1172, %v1452
        %v1454 = vpop.f32.mrf.mxu0
        %v1455 = vadd.f32 %v1173, %v1454
        %1456 = vdwg.mxu0
        %vm1457 = vcmask 523264
        %v1458 = vsel %vm1457, %v1345, -inf
        %1459 = vmax.xlane.f32.xlu0 %v1458
        %v1460 = vpop.xlane.xlu0 %1459
        %v1461 = vsel %vm1457, %v1347, -inf
        %1462 = vmax.xlane.f32.xlu0 %v1461
        %v1463 = vpop.xlane.xlu0 %1462
        %v1464 = vsel %vm1457, %v1350, -inf
        %1465 = vmax.xlane.f32.xlu0 %v1464
        %v1466 = vpop.xlane.xlu0 %1465
        %v1467 = vsel %vm1457, %v1352, -inf
        %1468 = vmax.xlane.f32.xlu0 %v1467
        %v1469 = vpop.xlane.xlu0 %1468
        %v1470 = vsel %vm1457, %v1355, -inf
        %1471 = vmax.xlane.f32.xlu0 %v1470
        %v1472 = vpop.xlane.xlu0 %1471
        %v1473 = vsel %vm1457, %v1357, -inf
        %1474 = vmax.xlane.f32.xlu0 %v1473
        %v1475 = vpop.xlane.xlu0 %1474
        %v1476 = vsel %vm1457, %v1360, -inf
        %1477 = vmax.xlane.f32.xlu0 %v1476
        %v1478 = vpop.xlane.xlu0 %1477
        %v1479 = vsel %vm1457, %v1362, -inf
        %1480 = vmax.xlane.f32.xlu0 %v1479
        %v1481 = vpop.xlane.xlu0 %1480
        %v1482 = vsel %vm1457, %v1438, -inf
        %1483 = vmax.xlane.f32.xlu0 %v1482
        %v1484 = vpop.xlane.xlu0 %1483
        %v1485 = vsel %vm1457, %v1440, -inf
        %1486 = vmax.xlane.f32.xlu0 %v1485
        %v1487 = vpop.xlane.xlu0 %1486
        %v1488 = vsel %vm1457, %v1443, -inf
        %1489 = vmax.xlane.f32.xlu0 %v1488
        %v1490 = vpop.xlane.xlu0 %1489
        %v1491 = vsel %vm1457, %v1445, -inf
        %1492 = vmax.xlane.f32.xlu0 %v1491
        %v1493 = vpop.xlane.xlu0 %1492
        %v1494 = vsel %vm1457, %v1448, -inf
        %1495 = vmax.xlane.f32.xlu0 %v1494
        %v1496 = vpop.xlane.xlu0 %1495
        %v1497 = vsel %vm1457, %v1450, -inf
        %1498 = vmax.xlane.f32.xlu0 %v1497
        %v1499 = vpop.xlane.xlu0 %1498
        %v1500 = vsel %vm1457, %v1453, -inf
        %1501 = vmax.xlane.f32.xlu0 %v1500
        %v1502 = vpop.xlane.xlu0 %1501
        %v1503 = vsel %vm1457, %v1455, -inf
        %1504 = vmax.xlane.f32.xlu0 %v1503
        %v1505 = vpop.xlane.xlu0 %1504
        %v1506 = vsub.f32 %v1345, %v1460
        %v1507 = vsub.f32 %v1347, %v1463
        %v1508 = vsub.f32 %v1350, %v1466
        %v1509 = vsub.f32 %v1352, %v1469
        %v1510 = vsub.f32 %v1355, %v1472
        %v1511 = vsub.f32 %v1357, %v1475
        %v1512 = vsub.f32 %v1360, %v1478
        %v1513 = vsub.f32 %v1362, %v1481
        %v1514 = vsub.f32 %v1438, %v1484
        %v1515 = vsub.f32 %v1440, %v1487
        %v1516 = vsub.f32 %v1443, %v1490
        %v1517 = vsub.f32 %v1445, %v1493
        %v1518 = vsub.f32 %v1448, %v1496
        %v1519 = vsub.f32 %v1450, %v1499
        %v1520 = vsub.f32 %v1453, %v1502
        %v1521 = vsub.f32 %v1455, %v1505
        %v1522 = vmul.f32 %v1506, 1.442695
        %v1523 = vpow.pop %v1522
        %v1524 = vmul.f32 %v1507, 1.442695
        %v1525 = vpow.pop %v1524
        %v1526 = vmul.f32 %v1508, 1.442695
        %v1527 = vpow.pop %v1526
        %v1528 = vmul.f32 %v1509, 1.442695
        %v1529 = vpow.pop %v1528
        %v1530 = vmul.f32 %v1510, 1.442695
        %v1531 = vpow.pop %v1530
        %v1532 = vmul.f32 %v1511, 1.442695
        %v1533 = vpow.pop %v1532
        %v1534 = vmul.f32 %v1512, 1.442695
        %v1535 = vpow.pop %v1534
        %v1536 = vmul.f32 %v1513, 1.442695
        %v1537 = vpow.pop %v1536
        %v1538 = vmul.f32 %v1514, 1.442695
        %v1539 = vpow.pop %v1538
        %v1540 = vmul.f32 %v1515, 1.442695
        %v1541 = vpow.pop %v1540
        %v1542 = vmul.f32 %v1516, 1.442695
        %v1543 = vpow.pop %v1542
        %v1544 = vmul.f32 %v1517, 1.442695
        %v1545 = vpow.pop %v1544
        %v1546 = vmul.f32 %v1518, 1.442695
        %v1547 = vpow.pop %v1546
        %v1548 = vmul.f32 %v1519, 1.442695
        %v1549 = vpow.pop %v1548
        %v1550 = vmul.f32 %v1520, 1.442695
        %v1551 = vpow.pop %v1550
        %v1552 = vmul.f32 %v1521, 1.442695
        %v1553 = vpow.pop %v1552
        %v1554 = vsel %vm1457, %v1523, 0.0
        %1555 = vadd.xlane.f32.xlu0 %v1554
        %v1556 = vpop.xlane.xlu0 %1555
        %v1557 = vsel %vm1457, %v1525, 0.0
        %1558 = vadd.xlane.f32.xlu0 %v1557
        %v1559 = vpop.xlane.xlu0 %1558
        %v1560 = vsel %vm1457, %v1527, 0.0
        %1561 = vadd.xlane.f32.xlu0 %v1560
        %v1562 = vpop.xlane.xlu0 %1561
        %v1563 = vsel %vm1457, %v1529, 0.0
        %1564 = vadd.xlane.f32.xlu0 %v1563
        %v1565 = vpop.xlane.xlu0 %1564
        %v1566 = vsel %vm1457, %v1531, 0.0
        %1567 = vadd.xlane.f32.xlu0 %v1566
        %v1568 = vpop.xlane.xlu0 %1567
        %v1569 = vsel %vm1457, %v1533, 0.0
        %1570 = vadd.xlane.f32.xlu0 %v1569
        %v1571 = vpop.xlane.xlu0 %1570
        %v1572 = vsel %vm1457, %v1535, 0.0
        %1573 = vadd.xlane.f32.xlu0 %v1572
        %v1574 = vpop.xlane.xlu0 %1573
        %v1575 = vsel %vm1457, %v1537, 0.0
        %1576 = vadd.xlane.f32.xlu0 %v1575
        %v1577 = vpop.xlane.xlu0 %1576
        %v1578 = vsel %vm1457, %v1539, 0.0
        %1579 = vadd.xlane.f32.xlu0 %v1578
        %v1580 = vpop.xlane.xlu0 %1579
        %v1581 = vsel %vm1457, %v1541, 0.0
        %1582 = vadd.xlane.f32.xlu0 %v1581
        %v1583 = vpop.xlane.xlu0 %1582
        %v1584 = vsel %vm1457, %v1543, 0.0
        %1585 = vadd.xlane.f32.xlu0 %v1584
        %v1586 = vpop.xlane.xlu0 %1585
        %v1587 = vsel %vm1457, %v1545, 0.0
        %1588 = vadd.xlane.f32.xlu0 %v1587
        %v1589 = vpop.xlane.xlu0 %1588
        %v1590 = vsel %vm1457, %v1547, 0.0
        %1591 = vadd.xlane.f32.xlu0 %v1590
        %v1592 = vpop.xlane.xlu0 %1591
        %v1593 = vsel %vm1457, %v1549, 0.0
        %1594 = vadd.xlane.f32.xlu0 %v1593
        %v1595 = vpop.xlane.xlu0 %1594
        %v1596 = vsel %vm1457, %v1551, 0.0
        %1597 = vadd.xlane.f32.xlu0 %v1596
        %v1598 = vpop.xlane.xlu0 %1597
        %v1599 = vsel %vm1457, %v1553, 0.0
        %1600 = vadd.xlane.f32.xlu0 %v1599
        %v1601 = vpop.xlane.xlu0 %1600
        %v1602 = vpack.c.bf16 %v1523, %v1523
        %v1603 = vpack.c.bf16 %v1525, %v1525
        %v1604 = vpack.c.bf16 %v1527, %v1527
        %v1605 = vpack.c.bf16 %v1529, %v1529
        %v1606 = vpack.c.bf16 %v1531, %v1531
        %v1607 = vpack.c.bf16 %v1533, %v1533
        %v1608 = vpack.c.bf16 %v1535, %v1535
        %v1609 = vpack.c.bf16 %v1537, %v1537
        %v1610 = vpack.c.bf16 %v1539, %v1539
        %v1611 = vpack.c.bf16 %v1541, %v1541
        %v1612 = vpack.c.bf16 %v1543, %v1543
        %v1613 = vpack.c.bf16 %v1545, %v1545
        %v1614 = vpack.c.bf16 %v1547, %v1547
        %v1615 = vpack.c.bf16 %v1549, %v1549
        %v1616 = vpack.c.bf16 %v1551, %v1551
        %v1617 = vpack.c.bf16 %v1553, %v1553
        %v1626 = vunpack.c.l.b16 %v1602
        %v1627 = vunpack.c.l.b16 %v1603
        %v1628 = vunpack.c.l.b16 %v1604
        %v1629 = vunpack.c.l.b16 %v1605
        %v1630 = vunpack.c.l.b16 %v1606
        %v1631 = vunpack.c.l.b16 %v1607
        %v1632 = vunpack.c.l.b16 %v1608
        %v1633 = vunpack.c.l.b16 %v1609
        %v1634 = vpack.c.b16 %v1627, %v1626
        %v1635 = vpack.c.b16 %v1629, %v1628
        %v1636 = vpack.c.b16 %v1631, %v1630
        %v1637 = vpack.c.b16 %v1633, %v1632
        %v1646 = vunpack.c.l.b16 %v1254
        %v1647 = vunpack.c.l.b16 %v1255
        %v1648 = vunpack.c.l.b16 %v1256
        %v1649 = vunpack.c.l.b16 %v1257
        %v1650 = vunpack.c.l.b16 %v1258
        %v1651 = vunpack.c.l.b16 %v1259
        %v1652 = vunpack.c.l.b16 %v1260
        %v1653 = vunpack.c.l.b16 %v1261
        %v1654 = vpack.c.b16 %v1647, %v1646
        %v1655 = vpack.c.b16 %v1649, %v1648
        %v1656 = vpack.c.b16 %v1651, %v1650
        %v1657 = vpack.c.b16 %v1653, %v1652
        %v1663 = vsel %vm1457, %v1634, 0
        %v1666 = vsel %vm1457, %v1635, 0
        %v1669 = vsel %vm1457, %v1636, 0
        %v1672 = vsel %vm1457, %v1637, 0
        %1674 = vmatpush.bf16.msra.mxu0 0
        %1675 = vmatpush.bf16.msra.mxu0 0
        %1676 = vmatpush.bf16.msra.mxu0 0
        %1677 = vmatpush.bf16.msra.mxu0 0
        %1678 = vmatpush.bf16.msra.mxu0 %v1657
        %1679 = vmatpush.bf16.msra.mxu0 %v1656
        %1680 = vmatpush.bf16.msra.mxu0 %v1655
        %1681 = vmatpush.bf16.msra.mxu0 %v1654
        %1682 = vmatmul.bf16.gmra.mxu0 %v1663
        %v1683 = vpop.f32.mrf.mxu0
        %v1684 = vadd.f32 0.0, %v1683
        %v1685 = vpop.f32.mrf.mxu0
        %v1686 = vadd.f32 0.0, %v1685
        %1687 = vmatmul.bf16.gmra.mxu0 %v1666
        %v1688 = vpop.f32.mrf.mxu0
        %v1689 = vadd.f32 0.0, %v1688
        %v1690 = vpop.f32.mrf.mxu0
        %v1691 = vadd.f32 0.0, %v1690
        %1692 = vmatmul.bf16.gmra.mxu0 %v1669
        %v1693 = vpop.f32.mrf.mxu0
        %v1694 = vadd.f32 0.0, %v1693
        %v1695 = vpop.f32.mrf.mxu0
        %v1696 = vadd.f32 0.0, %v1695
        %1697 = vmatmul.bf16.gmra.mxu0 %v1672
        %v1698 = vpop.f32.mrf.mxu0
        %v1699 = vadd.f32 0.0, %v1698
        %v1700 = vpop.f32.mrf.mxu0
        %v1701 = vadd.f32 0.0, %v1700
        %1702 = vdwg.mxu0
        %v1711 = vunpack.c.l.b16 %v1610
        %v1712 = vunpack.c.l.b16 %v1611
        %v1713 = vunpack.c.l.b16 %v1612
        %v1714 = vunpack.c.l.b16 %v1613
        %v1715 = vunpack.c.l.b16 %v1614
        %v1716 = vunpack.c.l.b16 %v1615
        %v1717 = vunpack.c.l.b16 %v1616
        %v1718 = vunpack.c.l.b16 %v1617
        %v1719 = vpack.c.b16 %v1712, %v1711
        %v1720 = vpack.c.b16 %v1714, %v1713
        %v1721 = vpack.c.b16 %v1716, %v1715
        %v1722 = vpack.c.b16 %v1718, %v1717
        %v1731 = vunpack.c.l.b16 %v1262
        %v1732 = vunpack.c.l.b16 %v1263
        %v1733 = vunpack.c.l.b16 %v1264
        %v1734 = vunpack.c.l.b16 %v1265
        %v1735 = vunpack.c.l.b16 %v1266
        %v1736 = vunpack.c.l.b16 %v1267
        %v1737 = vunpack.c.l.b16 %v1268
        %v1738 = vunpack.c.l.b16 %v1269
        %v1739 = vpack.c.b16 %v1732, %v1731
        %v1740 = vpack.c.b16 %v1734, %v1733
        %v1741 = vpack.c.b16 %v1736, %v1735
        %v1742 = vpack.c.b16 %v1738, %v1737
        %v1748 = vsel %vm1457, %v1719, 0
        %v1751 = vsel %vm1457, %v1720, 0
        %v1754 = vsel %vm1457, %v1721, 0
        %v1757 = vsel %vm1457, %v1722, 0
        %1759 = vmatpush.bf16.msra.mxu0 0
        %1760 = vmatpush.bf16.msra.mxu0 0
        %1761 = vmatpush.bf16.msra.mxu0 0
        %1762 = vmatpush.bf16.msra.mxu0 0
        %1763 = vmatpush.bf16.msra.mxu0 %v1742
        %1764 = vmatpush.bf16.msra.mxu0 %v1741
        %1765 = vmatpush.bf16.msra.mxu0 %v1740
        %1766 = vmatpush.bf16.msra.mxu0 %v1739
        %1767 = vmatmul.bf16.gmra.mxu0 %v1748
        %v1768 = vpop.f32.mrf.mxu0
        %v1769 = vadd.f32 0.0, %v1768
        %v1770 = vpop.f32.mrf.mxu0
        %v1771 = vadd.f32 0.0, %v1770
        %1772 = vmatmul.bf16.gmra.mxu0 %v1751
        %v1773 = vpop.f32.mrf.mxu0
        %v1774 = vadd.f32 0.0, %v1773
        %v1775 = vpop.f32.mrf.mxu0
        %v1776 = vadd.f32 0.0, %v1775
        %1777 = vmatmul.bf16.gmra.mxu0 %v1754
        %v1778 = vpop.f32.mrf.mxu0
        %v1779 = vadd.f32 0.0, %v1778
        %v1780 = vpop.f32.mrf.mxu0
        %v1781 = vadd.f32 0.0, %v1780
        %1782 = vmatmul.bf16.gmra.mxu0 %v1757
        %v1783 = vpop.f32.mrf.mxu0
        %v1784 = vadd.f32 0.0, %v1783
        %v1785 = vpop.f32.mrf.mxu0
        %v1786 = vadd.f32 0.0, %v1785
        %1787 = vdwg.mxu0
        %v1788 = vrcp.pop %v1556
        %v1789 = vrcp.pop %v1559
        %v1790 = vrcp.pop %v1562
        %v1791 = vrcp.pop %v1565
        %v1792 = vrcp.pop %v1568
        %v1793 = vrcp.pop %v1571
        %v1794 = vrcp.pop %v1574
        %v1795 = vrcp.pop %v1577
        %v1796 = vrcp.pop %v1580
        %v1797 = vrcp.pop %v1583
        %v1798 = vrcp.pop %v1586
        %v1799 = vrcp.pop %v1589
        %v1800 = vrcp.pop %v1592
        %v1801 = vrcp.pop %v1595
        %v1802 = vrcp.pop %v1598
        %v1803 = vrcp.pop %v1601
        %v1804 = vmul.f32 %v1684, %v1788
        %v1805 = vmul.f32 %v1686, %v1789
        %v1806 = vmul.f32 %v1689, %v1790
        %v1807 = vmul.f32 %v1691, %v1791
        %v1808 = vmul.f32 %v1694, %v1792
        %v1809 = vmul.f32 %v1696, %v1793
        %v1810 = vmul.f32 %v1699, %v1794
        %v1811 = vmul.f32 %v1701, %v1795
        %v1812 = vmul.f32 %v1769, %v1796
        %v1813 = vmul.f32 %v1771, %v1797
        %v1814 = vmul.f32 %v1774, %v1798
        %v1815 = vmul.f32 %v1776, %v1799
        %v1816 = vmul.f32 %v1779, %v1800
        %v1817 = vmul.f32 %v1781, %v1801
        %v1818 = vmul.f32 %v1784, %v1802
        %v1819 = vmul.f32 %v1786, %v1803
        %1820 = vrot.lane.b32.xlu0 %v1286, 96
        %v1821 = vpop.permute.xlu0 %1820
        %1822 = vrot.lane.b32.xlu0 %v1287, 96
        %v1823 = vpop.permute.xlu0 %1822
        %1824 = vrot.lane.b32.xlu0 %v1288, 96
        %v1825 = vpop.permute.xlu0 %1824
        %1826 = vrot.lane.b32.xlu0 %v1289, 96
        %v1827 = vpop.permute.xlu0 %1826
        %1828 = vrot.lane.b32.xlu0 %v1306, 96
        %v1829 = vpop.permute.xlu0 %1828
        %1830 = vrot.lane.b32.xlu0 %v1307, 96
        %v1831 = vpop.permute.xlu0 %1830
        %1832 = vrot.lane.b32.xlu0 %v1308, 96
        %v1833 = vpop.permute.xlu0 %1832
        %1834 = vrot.lane.b32.xlu0 %v1309, 96
        %v1835 = vpop.permute.xlu0 %1834
        %v1837 = vsel %vm1310, %v1821, 0
        %v1840 = vsel %vm1310, %v1823, 0
        %v1843 = vsel %vm1310, %v1825, 0
        %v1846 = vsel %vm1310, %v1827, 0
        %v1849 = vsel %vm1310, %v1829, 0
        %v1852 = vsel %vm1310, %v1831, 0
        %v1855 = vsel %vm1310, %v1833, 0
        %v1858 = vsel %vm1310, %v1835, 0
        %1860 = vmatpush.bf16.xpose.msra.mxu0 0
        %1861 = vmatpush.bf16.xpose.msra.mxu0 0
        %1862 = vmatpush.bf16.xpose.msra.mxu0 0
        %1863 = vmatpush.bf16.xpose.msra.mxu0 0
        %1864 = vmatpush.bf16.xpose.msra.mxu0 %v1858
        %1865 = vmatpush.bf16.xpose.msra.mxu0 %v1855
        %1866 = vmatpush.bf16.xpose.msra.mxu0 %v1852
        %1867 = vmatpush.bf16.xpose.msra.mxu0 %v1849
        %1868 = vmatmul.bf16.gmra.mxu0 %v1837
        %v1869 = vpop.f32.mrf.mxu0
        %v1870 = vadd.f32 %v1174, %v1869
        %v1871 = vpop.f32.mrf.mxu0
        %v1872 = vadd.f32 %v1175, %v1871
        %1873 = vmatmul.bf16.gmra.mxu0 %v1840
        %v1874 = vpop.f32.mrf.mxu0
        %v1875 = vadd.f32 %v1176, %v1874
        %v1876 = vpop.f32.mrf.mxu0
        %v1877 = vadd.f32 %v1177, %v1876
        %1878 = vmatmul.bf16.gmra.mxu0 %v1843
        %v1879 = vpop.f32.mrf.mxu0
        %v1880 = vadd.f32 %v1178, %v1879
        %v1881 = vpop.f32.mrf.mxu0
        %v1882 = vadd.f32 %v1179, %v1881
        %1883 = vmatmul.bf16.gmra.mxu0 %v1846
        %v1884 = vpop.f32.mrf.mxu0
        %v1885 = vadd.f32 %v1180, %v1884
        %v1886 = vpop.f32.mrf.mxu0
        %v1887 = vadd.f32 %v1181, %v1886
        %1888 = vdwg.mxu0
        %1889 = vrot.lane.b32.xlu0 %v1380, 96
        %v1890 = vpop.permute.xlu0 %1889
        %1891 = vrot.lane.b32.xlu0 %v1381, 96
        %v1892 = vpop.permute.xlu0 %1891
        %1893 = vrot.lane.b32.xlu0 %v1382, 96
        %v1894 = vpop.permute.xlu0 %1893
        %1895 = vrot.lane.b32.xlu0 %v1383, 96
        %v1896 = vpop.permute.xlu0 %1895
        %1897 = vrot.lane.b32.xlu0 %v1400, 96
        %v1898 = vpop.permute.xlu0 %1897
        %1899 = vrot.lane.b32.xlu0 %v1401, 96
        %v1900 = vpop.permute.xlu0 %1899
        %1901 = vrot.lane.b32.xlu0 %v1402, 96
        %v1902 = vpop.permute.xlu0 %1901
        %1903 = vrot.lane.b32.xlu0 %v1403, 96
        %v1904 = vpop.permute.xlu0 %1903
        %v1906 = vsel %vm1310, %v1890, 0
        %v1909 = vsel %vm1310, %v1892, 0
        %v1912 = vsel %vm1310, %v1894, 0
        %v1915 = vsel %vm1310, %v1896, 0
        %v1918 = vsel %vm1310, %v1898, 0
        %v1921 = vsel %vm1310, %v1900, 0
        %v1924 = vsel %vm1310, %v1902, 0
        %v1927 = vsel %vm1310, %v1904, 0
        %1929 = vmatpush.bf16.xpose.msra.mxu0 0
        %1930 = vmatpush.bf16.xpose.msra.mxu0 0
        %1931 = vmatpush.bf16.xpose.msra.mxu0 0
        %1932 = vmatpush.bf16.xpose.msra.mxu0 0
        %1933 = vmatpush.bf16.xpose.msra.mxu0 %v1927
        %1934 = vmatpush.bf16.xpose.msra.mxu0 %v1924
        %1935 = vmatpush.bf16.xpose.msra.mxu0 %v1921
        %1936 = vmatpush.bf16.xpose.msra.mxu0 %v1918
        %1937 = vmatmul.bf16.gmra.mxu0 %v1906
        %v1938 = vpop.f32.mrf.mxu0
        %v1939 = vadd.f32 %v1182, %v1938
        %v1940 = vpop.f32.mrf.mxu0
        %v1941 = vadd.f32 %v1183, %v1940
        %1942 = vmatmul.bf16.gmra.mxu0 %v1909
        %v1943 = vpop.f32.mrf.mxu0
        %v1944 = vadd.f32 %v1184, %v1943
        %v1945 = vpop.f32.mrf.mxu0
        %v1946 = vadd.f32 %v1185, %v1945
        %1947 = vmatmul.bf16.gmra.mxu0 %v1912
        %v1948 = vpop.f32.mrf.mxu0
        %v1949 = vadd.f32 %v1186, %v1948
        %v1950 = vpop.f32.mrf.mxu0
        %v1951 = vadd.f32 %v1187, %v1950
        %1952 = vmatmul.bf16.gmra.mxu0 %v1915
        %v1953 = vpop.f32.mrf.mxu0
        %v1954 = vadd.f32 %v1188, %v1953
        %v1955 = vpop.f32.mrf.mxu0
        %v1956 = vadd.f32 %v1189, %v1955
        %1957 = vdwg.mxu0
        %v1958 = vsel %vm1457, %v1870, -inf
        %1959 = vmax.xlane.f32.xlu0 %v1958
        %v1960 = vpop.xlane.xlu0 %1959
        %v1961 = vsel %vm1457, %v1872, -inf
        %1962 = vmax.xlane.f32.xlu0 %v1961
        %v1963 = vpop.xlane.xlu0 %1962
        %v1964 = vsel %vm1457, %v1875, -inf
        %1965 = vmax.xlane.f32.xlu0 %v1964
        %v1966 = vpop.xlane.xlu0 %1965
        %v1967 = vsel %vm1457, %v1877, -inf
        %1968 = vmax.xlane.f32.xlu0 %v1967
        %v1969 = vpop.xlane.xlu0 %1968
        %v1970 = vsel %vm1457, %v1880, -inf
        %1971 = vmax.xlane.f32.xlu0 %v1970
        %v1972 = vpop.xlane.xlu0 %1971
        %v1973 = vsel %vm1457, %v1882, -inf
        %1974 = vmax.xlane.f32.xlu0 %v1973
        %v1975 = vpop.xlane.xlu0 %1974
        %v1976 = vsel %vm1457, %v1885, -inf
        %1977 = vmax.xlane.f32.xlu0 %v1976
        %v1978 = vpop.xlane.xlu0 %1977
        %v1979 = vsel %vm1457, %v1887, -inf
        %1980 = vmax.xlane.f32.xlu0 %v1979
        %v1981 = vpop.xlane.xlu0 %1980
        %v1982 = vsel %vm1457, %v1939, -inf
        %1983 = vmax.xlane.f32.xlu0 %v1982
        %v1984 = vpop.xlane.xlu0 %1983
        %v1985 = vsel %vm1457, %v1941, -inf
        %1986 = vmax.xlane.f32.xlu0 %v1985
        %v1987 = vpop.xlane.xlu0 %1986
        %v1988 = vsel %vm1457, %v1944, -inf
        %1989 = vmax.xlane.f32.xlu0 %v1988
        %v1990 = vpop.xlane.xlu0 %1989
        %v1991 = vsel %vm1457, %v1946, -inf
        %1992 = vmax.xlane.f32.xlu0 %v1991
        %v1993 = vpop.xlane.xlu0 %1992
        %v1994 = vsel %vm1457, %v1949, -inf
        %1995 = vmax.xlane.f32.xlu0 %v1994
        %v1996 = vpop.xlane.xlu0 %1995
        %v1997 = vsel %vm1457, %v1951, -inf
        %1998 = vmax.xlane.f32.xlu0 %v1997
        %v1999 = vpop.xlane.xlu0 %1998
        %v2000 = vsel %vm1457, %v1954, -inf
        %2001 = vmax.xlane.f32.xlu0 %v2000
        %v2002 = vpop.xlane.xlu0 %2001
        %v2003 = vsel %vm1457, %v1956, -inf
        %2004 = vmax.xlane.f32.xlu0 %v2003
        %v2005 = vpop.xlane.xlu0 %2004
        %v2006 = vsub.f32 %v1870, %v1960
        %v2007 = vsub.f32 %v1872, %v1963
        %v2008 = vsub.f32 %v1875, %v1966
        %v2009 = vsub.f32 %v1877, %v1969
        %v2010 = vsub.f32 %v1880, %v1972
        %v2011 = vsub.f32 %v1882, %v1975
        %v2012 = vsub.f32 %v1885, %v1978
        %v2013 = vsub.f32 %v1887, %v1981
        %v2014 = vsub.f32 %v1939, %v1984
        %v2015 = vsub.f32 %v1941, %v1987
        %v2016 = vsub.f32 %v1944, %v1990
        %v2017 = vsub.f32 %v1946, %v1993
        %v2018 = vsub.f32 %v1949, %v1996
        %v2019 = vsub.f32 %v1951, %v1999
        %v2020 = vsub.f32 %v1954, %v2002
        %v2021 = vsub.f32 %v1956, %v2005
        %v2022 = vmul.f32 %v2006, 1.442695
        %v2023 = vpow.pop %v2022
        %v2024 = vmul.f32 %v2007, 1.442695
        %v2025 = vpow.pop %v2024
        %v2026 = vmul.f32 %v2008, 1.442695
        %v2027 = vpow.pop %v2026
        %v2028 = vmul.f32 %v2009, 1.442695
        %v2029 = vpow.pop %v2028
        %v2030 = vmul.f32 %v2010, 1.442695
        %v2031 = vpow.pop %v2030
        %v2032 = vmul.f32 %v2011, 1.442695
        %v2033 = vpow.pop %v2032
        %v2034 = vmul.f32 %v2012, 1.442695
        %v2035 = vpow.pop %v2034
        %v2036 = vmul.f32 %v2013, 1.442695
        %v2037 = vpow.pop %v2036
        %v2038 = vmul.f32 %v2014, 1.442695
        %v2039 = vpow.pop %v2038
        %v2040 = vmul.f32 %v2015, 1.442695
        %v2041 = vpow.pop %v2040
        %v2042 = vmul.f32 %v2016, 1.442695
        %v2043 = vpow.pop %v2042
        %v2044 = vmul.f32 %v2017, 1.442695
        %v2045 = vpow.pop %v2044
        %v2046 = vmul.f32 %v2018, 1.442695
        %v2047 = vpow.pop %v2046
        %v2048 = vmul.f32 %v2019, 1.442695
        %v2049 = vpow.pop %v2048
        %v2050 = vmul.f32 %v2020, 1.442695
        %v2051 = vpow.pop %v2050
        %v2052 = vmul.f32 %v2021, 1.442695
        %v2053 = vpow.pop %v2052
        %v2054 = vsel %vm1457, %v2023, 0.0
        %2055 = vadd.xlane.f32.xlu0 %v2054
        %v2056 = vpop.xlane.xlu0 %2055
        %v2057 = vsel %vm1457, %v2025, 0.0
        %2058 = vadd.xlane.f32.xlu0 %v2057
        %v2059 = vpop.xlane.xlu0 %2058
        %v2060 = vsel %vm1457, %v2027, 0.0
        %2061 = vadd.xlane.f32.xlu0 %v2060
        %v2062 = vpop.xlane.xlu0 %2061
        %v2063 = vsel %vm1457, %v2029, 0.0
        %2064 = vadd.xlane.f32.xlu0 %v2063
        %v2065 = vpop.xlane.xlu0 %2064
        %v2066 = vsel %vm1457, %v2031, 0.0
        %2067 = vadd.xlane.f32.xlu0 %v2066
        %v2068 = vpop.xlane.xlu0 %2067
        %v2069 = vsel %vm1457, %v2033, 0.0
        %2070 = vadd.xlane.f32.xlu0 %v2069
        %v2071 = vpop.xlane.xlu0 %2070
        %v2072 = vsel %vm1457, %v2035, 0.0
        %2073 = vadd.xlane.f32.xlu0 %v2072
        %v2074 = vpop.xlane.xlu0 %2073
        %v2075 = vsel %vm1457, %v2037, 0.0
        %2076 = vadd.xlane.f32.xlu0 %v2075
        %v2077 = vpop.xlane.xlu0 %2076
        %v2078 = vsel %vm1457, %v2039, 0.0
        %2079 = vadd.xlane.f32.xlu0 %v2078
        %v2080 = vpop.xlane.xlu0 %2079
        %v2081 = vsel %vm1457, %v2041, 0.0
        %2082 = vadd.xlane.f32.xlu0 %v2081
        %v2083 = vpop.xlane.xlu0 %2082
        %v2084 = vsel %vm1457, %v2043, 0.0
        %2085 = vadd.xlane.f32.xlu0 %v2084
        %v2086 = vpop.xlane.xlu0 %2085
        %v2087 = vsel %vm1457, %v2045, 0.0
        %2088 = vadd.xlane.f32.xlu0 %v2087
        %v2089 = vpop.xlane.xlu0 %2088
        %v2090 = vsel %vm1457, %v2047, 0.0
        %2091 = vadd.xlane.f32.xlu0 %v2090
        %v2092 = vpop.xlane.xlu0 %2091
        %v2093 = vsel %vm1457, %v2049, 0.0
        %2094 = vadd.xlane.f32.xlu0 %v2093
        %v2095 = vpop.xlane.xlu0 %2094
        %v2096 = vsel %vm1457, %v2051, 0.0
        %2097 = vadd.xlane.f32.xlu0 %v2096
        %v2098 = vpop.xlane.xlu0 %2097
        %v2099 = vsel %vm1457, %v2053, 0.0
        %2100 = vadd.xlane.f32.xlu0 %v2099
        %v2101 = vpop.xlane.xlu0 %2100
        %v2102 = vpack.c.bf16 %v2023, %v2023
        %v2103 = vpack.c.bf16 %v2025, %v2025
        %v2104 = vpack.c.bf16 %v2027, %v2027
        %v2105 = vpack.c.bf16 %v2029, %v2029
        %v2106 = vpack.c.bf16 %v2031, %v2031
        %v2107 = vpack.c.bf16 %v2033, %v2033
        %v2108 = vpack.c.bf16 %v2035, %v2035
        %v2109 = vpack.c.bf16 %v2037, %v2037
        %v2110 = vpack.c.bf16 %v2039, %v2039
        %v2111 = vpack.c.bf16 %v2041, %v2041
        %v2112 = vpack.c.bf16 %v2043, %v2043
        %v2113 = vpack.c.bf16 %v2045, %v2045
        %v2114 = vpack.c.bf16 %v2047, %v2047
        %v2115 = vpack.c.bf16 %v2049, %v2049
        %v2116 = vpack.c.bf16 %v2051, %v2051
        %v2117 = vpack.c.bf16 %v2053, %v2053
        %v2126 = vunpack.c.l.b16 %v2102
        %v2127 = vunpack.c.l.b16 %v2103
        %v2128 = vunpack.c.l.b16 %v2104
        %v2129 = vunpack.c.l.b16 %v2105
        %v2130 = vunpack.c.l.b16 %v2106
        %v2131 = vunpack.c.l.b16 %v2107
        %v2132 = vunpack.c.l.b16 %v2108
        %v2133 = vunpack.c.l.b16 %v2109
        %v2134 = vpack.c.b16 %v2127, %v2126
        %v2135 = vpack.c.b16 %v2129, %v2128
        %v2136 = vpack.c.b16 %v2131, %v2130
        %v2137 = vpack.c.b16 %v2133, %v2132
        %2138 = vrot.lane.b32.xlu0 %v1654, 96
        %v2139 = vpop.permute.xlu0 %2138
        %2140 = vrot.lane.b32.xlu0 %v1655, 96
        %v2141 = vpop.permute.xlu0 %2140
        %2142 = vrot.lane.b32.xlu0 %v1656, 96
        %v2143 = vpop.permute.xlu0 %2142
        %2144 = vrot.lane.b32.xlu0 %v1657, 96
        %v2145 = vpop.permute.xlu0 %2144
        %v2151 = vsel %vm1457, %v2134, 0
        %v2154 = vsel %vm1457, %v2135, 0
        %v2157 = vsel %vm1457, %v2136, 0
        %v2160 = vsel %vm1457, %v2137, 0
        %2162 = vmatpush.bf16.msra.mxu0 0
        %2163 = vmatpush.bf16.msra.mxu0 0
        %2164 = vmatpush.bf16.msra.mxu0 0
        %2165 = vmatpush.bf16.msra.mxu0 0
        %2166 = vmatpush.bf16.msra.mxu0 %v2145
        %2167 = vmatpush.bf16.msra.mxu0 %v2143
        %2168 = vmatpush.bf16.msra.mxu0 %v2141
        %2169 = vmatpush.bf16.msra.mxu0 %v2139
        %2170 = vmatmul.bf16.gmra.mxu0 %v2151
        %v2171 = vpop.f32.mrf.mxu0
        %v2172 = vadd.f32 0.0, %v2171
        %v2173 = vpop.f32.mrf.mxu0
        %v2174 = vadd.f32 0.0, %v2173
        %2175 = vmatmul.bf16.gmra.mxu0 %v2154
        %v2176 = vpop.f32.mrf.mxu0
        %v2177 = vadd.f32 0.0, %v2176
        %v2178 = vpop.f32.mrf.mxu0
        %v2179 = vadd.f32 0.0, %v2178
        %2180 = vmatmul.bf16.gmra.mxu0 %v2157
        %v2181 = vpop.f32.mrf.mxu0
        %v2182 = vadd.f32 0.0, %v2181
        %v2183 = vpop.f32.mrf.mxu0
        %v2184 = vadd.f32 0.0, %v2183
        %2185 = vmatmul.bf16.gmra.mxu0 %v2160
        %v2186 = vpop.f32.mrf.mxu0
        %v2187 = vadd.f32 0.0, %v2186
        %v2188 = vpop.f32.mrf.mxu0
        %v2189 = vadd.f32 0.0, %v2188
        %2190 = vdwg.mxu0
        %v2199 = vunpack.c.l.b16 %v2110
        %v2200 = vunpack.c.l.b16 %v2111
        %v2201 = vunpack.c.l.b16 %v2112
        %v2202 = vunpack.c.l.b16 %v2113
        %v2203 = vunpack.c.l.b16 %v2114
        %v2204 = vunpack.c.l.b16 %v2115
        %v2205 = vunpack.c.l.b16 %v2116
        %v2206 = vunpack.c.l.b16 %v2117
        %v2207 = vpack.c.b16 %v2200, %v2199
        %v2208 = vpack.c.b16 %v2202, %v2201
        %v2209 = vpack.c.b16 %v2204, %v2203
        %v2210 = vpack.c.b16 %v2206, %v2205
        %2211 = vrot.lane.b32.xlu0 %v1739, 96
        %v2212 = vpop.permute.xlu0 %2211
        %2213 = vrot.lane.b32.xlu0 %v1740, 96
        %v2214 = vpop.permute.xlu0 %2213
        %2215 = vrot.lane.b32.xlu0 %v1741, 96
        %v2216 = vpop.permute.xlu0 %2215
        %2217 = vrot.lane.b32.xlu0 %v1742, 96
        %v2218 = vpop.permute.xlu0 %2217
        %v2224 = vsel %vm1457, %v2207, 0
        %v2227 = vsel %vm1457, %v2208, 0
        %v2230 = vsel %vm1457, %v2209, 0
        %v2233 = vsel %vm1457, %v2210, 0
        %2235 = vmatpush.bf16.msra.mxu0 0
        %2236 = vmatpush.bf16.msra.mxu0 0
        %2237 = vmatpush.bf16.msra.mxu0 0
        %2238 = vmatpush.bf16.msra.mxu0 0
        %2239 = vmatpush.bf16.msra.mxu0 %v2218
        %2240 = vmatpush.bf16.msra.mxu0 %v2216
        %2241 = vmatpush.bf16.msra.mxu0 %v2214
        %2242 = vmatpush.bf16.msra.mxu0 %v2212
        %2243 = vmatmul.bf16.gmra.mxu0 %v2224
        %v2244 = vpop.f32.mrf.mxu0
        %v2245 = vadd.f32 0.0, %v2244
        %v2246 = vpop.f32.mrf.mxu0
        %v2247 = vadd.f32 0.0, %v2246
        %2248 = vmatmul.bf16.gmra.mxu0 %v2227
        %v2249 = vpop.f32.mrf.mxu0
        %v2250 = vadd.f32 0.0, %v2249
        %v2251 = vpop.f32.mrf.mxu0
        %v2252 = vadd.f32 0.0, %v2251
        %2253 = vmatmul.bf16.gmra.mxu0 %v2230
        %v2254 = vpop.f32.mrf.mxu0
        %v2255 = vadd.f32 0.0, %v2254
        %v2256 = vpop.f32.mrf.mxu0
        %v2257 = vadd.f32 0.0, %v2256
        %2258 = vmatmul.bf16.gmra.mxu0 %v2233
        %v2259 = vpop.f32.mrf.mxu0
        %v2260 = vadd.f32 0.0, %v2259
        %v2261 = vpop.f32.mrf.mxu0
        %v2262 = vadd.f32 0.0, %v2261
        %2263 = vdwg.mxu0
        %v2264 = vrcp.pop %v2056
        %v2265 = vrcp.pop %v2059
        %v2266 = vrcp.pop %v2062
        %v2267 = vrcp.pop %v2065
        %v2268 = vrcp.pop %v2068
        %v2269 = vrcp.pop %v2071
        %v2270 = vrcp.pop %v2074
        %v2271 = vrcp.pop %v2077
        %v2272 = vrcp.pop %v2080
        %v2273 = vrcp.pop %v2083
        %v2274 = vrcp.pop %v2086
        %v2275 = vrcp.pop %v2089
        %v2276 = vrcp.pop %v2092
        %v2277 = vrcp.pop %v2095
        %v2278 = vrcp.pop %v2098
        %v2279 = vrcp.pop %v2101
        %v2280 = vmul.f32 %v2172, %v2264
        %v2281 = vmul.f32 %v2174, %v2265
        %v2282 = vmul.f32 %v2177, %v2266
        %v2283 = vmul.f32 %v2179, %v2267
        %v2284 = vmul.f32 %v2182, %v2268
        %v2285 = vmul.f32 %v2184, %v2269
        %v2286 = vmul.f32 %v2187, %v2270
        %v2287 = vmul.f32 %v2189, %v2271
        %v2288 = vmul.f32 %v2245, %v2272
        %v2289 = vmul.f32 %v2247, %v2273
        %v2290 = vmul.f32 %v2250, %v2274
        %v2291 = vmul.f32 %v2252, %v2275
        %v2292 = vmul.f32 %v2255, %v2276
        %v2293 = vmul.f32 %v2257, %v2277
        %v2294 = vmul.f32 %v2260, %v2278
        %v2295 = vmul.f32 %v2262, %v2279
        %2296 = vrot.lane.b32.xlu0 %v1286, 64
        %v2297 = vpop.permute.xlu0 %2296
        %2298 = vrot.lane.b32.xlu0 %v1287, 64
        %v2299 = vpop.permute.xlu0 %2298
        %2300 = vrot.lane.b32.xlu0 %v1288, 64
        %v2301 = vpop.permute.xlu0 %2300
        %2302 = vrot.lane.b32.xlu0 %v1289, 64
        %v2303 = vpop.permute.xlu0 %2302
        %2304 = vrot.lane.b32.xlu0 %v1306, 64
        %v2305 = vpop.permute.xlu0 %2304
        %2306 = vrot.lane.b32.xlu0 %v1307, 64
        %v2307 = vpop.permute.xlu0 %2306
        %2308 = vrot.lane.b32.xlu0 %v1308, 64
        %v2309 = vpop.permute.xlu0 %2308
        %2310 = vrot.lane.b32.xlu0 %v1309, 64
        %v2311 = vpop.permute.xlu0 %2310
        %v2313 = vsel %vm1310, %v2297, 0
        %v2316 = vsel %vm1310, %v2299, 0
        %v2319 = vsel %vm1310, %v2301, 0
        %v2322 = vsel %vm1310, %v2303, 0
        %v2325 = vsel %vm1310, %v2305, 0
        %v2328 = vsel %vm1310, %v2307, 0
        %v2331 = vsel %vm1310, %v2309, 0
        %v2334 = vsel %vm1310, %v2311, 0
        %2336 = vmatpush.bf16.xpose.msra.mxu0 0
        %2337 = vmatpush.bf16.xpose.msra.mxu0 0
        %2338 = vmatpush.bf16.xpose.msra.mxu0 0
        %2339 = vmatpush.bf16.xpose.msra.mxu0 0
        %2340 = vmatpush.bf16.xpose.msra.mxu0 %v2334
        %2341 = vmatpush.bf16.xpose.msra.mxu0 %v2331
        %2342 = vmatpush.bf16.xpose.msra.mxu0 %v2328
        %2343 = vmatpush.bf16.xpose.msra.mxu0 %v2325
        %2344 = vmatmul.bf16.gmra.mxu0 %v2313
        %v2345 = vpop.f32.mrf.mxu0
        %v2346 = vadd.f32 %v1190, %v2345
        %v2347 = vpop.f32.mrf.mxu0
        %v2348 = vadd.f32 %v1191, %v2347
        %2349 = vmatmul.bf16.gmra.mxu0 %v2316
        %v2350 = vpop.f32.mrf.mxu0
        %v2351 = vadd.f32 %v1192, %v2350
        %v2352 = vpop.f32.mrf.mxu0
        %v2353 = vadd.f32 %v1193, %v2352
        %2354 = vmatmul.bf16.gmra.mxu0 %v2319
        %v2355 = vpop.f32.mrf.mxu0
        %v2356 = vadd.f32 %v1194, %v2355
        %v2357 = vpop.f32.mrf.mxu0
        %v2358 = vadd.f32 %v1195, %v2357
        %2359 = vmatmul.bf16.gmra.mxu0 %v2322
        %v2360 = vpop.f32.mrf.mxu0
        %v2361 = vadd.f32 %v1196, %v2360
        %v2362 = vpop.f32.mrf.mxu0
        %v2363 = vadd.f32 %v1197, %v2362
        %2364 = vdwg.mxu0
        %2365 = vrot.lane.b32.xlu0 %v1380, 64
        %v2366 = vpop.permute.xlu0 %2365
        %2367 = vrot.lane.b32.xlu0 %v1381, 64
        %v2368 = vpop.permute.xlu0 %2367
        %2369 = vrot.lane.b32.xlu0 %v1382, 64
        %v2370 = vpop.permute.xlu0 %2369
        %2371 = vrot.lane.b32.xlu0 %v1383, 64
        %v2372 = vpop.permute.xlu0 %2371
        %2373 = vrot.lane.b32.xlu0 %v1400, 64
        %v2374 = vpop.permute.xlu0 %2373
        %2375 = vrot.lane.b32.xlu0 %v1401, 64
        %v2376 = vpop.permute.xlu0 %2375
        %2377 = vrot.lane.b32.xlu0 %v1402, 64
        %v2378 = vpop.permute.xlu0 %2377
        %2379 = vrot.lane.b32.xlu0 %v1403, 64
        %v2380 = vpop.permute.xlu0 %2379
        %v2382 = vsel %vm1310, %v2366, 0
        %v2385 = vsel %vm1310, %v2368, 0
        %v2388 = vsel %vm1310, %v2370, 0
        %v2391 = vsel %vm1310, %v2372, 0
        %v2394 = vsel %vm1310, %v2374, 0
        %v2397 = vsel %vm1310, %v2376, 0
        %v2400 = vsel %vm1310, %v2378, 0
        %v2403 = vsel %vm1310, %v2380, 0
        %2405 = vmatpush.bf16.xpose.msra.mxu0 0
        %2406 = vmatpush.bf16.xpose.msra.mxu0 0
        %2407 = vmatpush.bf16.xpose.msra.mxu0 0
        %2408 = vmatpush.bf16.xpose.msra.mxu0 0
        %2409 = vmatpush.bf16.xpose.msra.mxu0 %v2403
        %2410 = vmatpush.bf16.xpose.msra.mxu0 %v2400
        %2411 = vmatpush.bf16.xpose.msra.mxu0 %v2397
        %2412 = vmatpush.bf16.xpose.msra.mxu0 %v2394
        %2413 = vmatmul.bf16.gmra.mxu0 %v2382
        %v2414 = vpop.f32.mrf.mxu0
        %v2415 = vadd.f32 %v1198, %v2414
        %v2416 = vpop.f32.mrf.mxu0
        %v2417 = vadd.f32 %v1199, %v2416
        %2418 = vmatmul.bf16.gmra.mxu0 %v2385
        %v2419 = vpop.f32.mrf.mxu0
        %v2420 = vadd.f32 %v1200, %v2419
        %v2421 = vpop.f32.mrf.mxu0
        %v2422 = vadd.f32 %v1201, %v2421
        %2423 = vmatmul.bf16.gmra.mxu0 %v2388
        %v2424 = vpop.f32.mrf.mxu0
        %v2425 = vadd.f32 %v1202, %v2424
        %v2426 = vpop.f32.mrf.mxu0
        %v2427 = vadd.f32 %v1203, %v2426
        %2428 = vmatmul.bf16.gmra.mxu0 %v2391
        %v2429 = vpop.f32.mrf.mxu0
        %v2430 = vadd.f32 %v1204, %v2429
        %v2431 = vpop.f32.mrf.mxu0
        %v2432 = vadd.f32 %v1205, %v2431
        %2433 = vdwg.mxu0
        %v2434 = vsel %vm1457, %v2346, -inf
        %2435 = vmax.xlane.f32.xlu0 %v2434
        %v2436 = vpop.xlane.xlu0 %2435
        %v2437 = vsel %vm1457, %v2348, -inf
        %2438 = vmax.xlane.f32.xlu0 %v2437
        %v2439 = vpop.xlane.xlu0 %2438
        %v2440 = vsel %vm1457, %v2351, -inf
        %2441 = vmax.xlane.f32.xlu0 %v2440
        %v2442 = vpop.xlane.xlu0 %2441
        %v2443 = vsel %vm1457, %v2353, -inf
        %2444 = vmax.xlane.f32.xlu0 %v2443
        %v2445 = vpop.xlane.xlu0 %2444
        %v2446 = vsel %vm1457, %v2356, -inf
        %2447 = vmax.xlane.f32.xlu0 %v2446
        %v2448 = vpop.xlane.xlu0 %2447
        %v2449 = vsel %vm1457, %v2358, -inf
        %2450 = vmax.xlane.f32.xlu0 %v2449
        %v2451 = vpop.xlane.xlu0 %2450
        %v2452 = vsel %vm1457, %v2361, -inf
        %2453 = vmax.xlane.f32.xlu0 %v2452
        %v2454 = vpop.xlane.xlu0 %2453
        %v2455 = vsel %vm1457, %v2363, -inf
        %2456 = vmax.xlane.f32.xlu0 %v2455
        %v2457 = vpop.xlane.xlu0 %2456
        %v2458 = vsel %vm1457, %v2415, -inf
        %2459 = vmax.xlane.f32.xlu0 %v2458
        %v2460 = vpop.xlane.xlu0 %2459
        %v2461 = vsel %vm1457, %v2417, -inf
        %2462 = vmax.xlane.f32.xlu0 %v2461
        %v2463 = vpop.xlane.xlu0 %2462
        %v2464 = vsel %vm1457, %v2420, -inf
        %2465 = vmax.xlane.f32.xlu0 %v2464
        %v2466 = vpop.xlane.xlu0 %2465
        %v2467 = vsel %vm1457, %v2422, -inf
        %2468 = vmax.xlane.f32.xlu0 %v2467
        %v2469 = vpop.xlane.xlu0 %2468
        %v2470 = vsel %vm1457, %v2425, -inf
        %2471 = vmax.xlane.f32.xlu0 %v2470
        %v2472 = vpop.xlane.xlu0 %2471
        %v2473 = vsel %vm1457, %v2427, -inf
        %2474 = vmax.xlane.f32.xlu0 %v2473
        %v2475 = vpop.xlane.xlu0 %2474
        %v2476 = vsel %vm1457, %v2430, -inf
        %2477 = vmax.xlane.f32.xlu0 %v2476
        %v2478 = vpop.xlane.xlu0 %2477
        %v2479 = vsel %vm1457, %v2432, -inf
        %2480 = vmax.xlane.f32.xlu0 %v2479
        %v2481 = vpop.xlane.xlu0 %2480
        %v2482 = vsub.f32 %v2346, %v2436
        %v2483 = vsub.f32 %v2348, %v2439
        %v2484 = vsub.f32 %v2351, %v2442
        %v2485 = vsub.f32 %v2353, %v2445
        %v2486 = vsub.f32 %v2356, %v2448
        %v2487 = vsub.f32 %v2358, %v2451
        %v2488 = vsub.f32 %v2361, %v2454
        %v2489 = vsub.f32 %v2363, %v2457
        %v2490 = vsub.f32 %v2415, %v2460
        %v2491 = vsub.f32 %v2417, %v2463
        %v2492 = vsub.f32 %v2420, %v2466
        %v2493 = vsub.f32 %v2422, %v2469
        %v2494 = vsub.f32 %v2425, %v2472
        %v2495 = vsub.f32 %v2427, %v2475
        %v2496 = vsub.f32 %v2430, %v2478
        %v2497 = vsub.f32 %v2432, %v2481
        %v2498 = vmul.f32 %v2482, 1.442695
        %v2499 = vpow.pop %v2498
        %v2500 = vmul.f32 %v2483, 1.442695
        %v2501 = vpow.pop %v2500
        %v2502 = vmul.f32 %v2484, 1.442695
        %v2503 = vpow.pop %v2502
        %v2504 = vmul.f32 %v2485, 1.442695
        %v2505 = vpow.pop %v2504
        %v2506 = vmul.f32 %v2486, 1.442695
        %v2507 = vpow.pop %v2506
        %v2508 = vmul.f32 %v2487, 1.442695
        %v2509 = vpow.pop %v2508
        %v2510 = vmul.f32 %v2488, 1.442695
        %v2511 = vpow.pop %v2510
        %v2512 = vmul.f32 %v2489, 1.442695
        %v2513 = vpow.pop %v2512
        %v2514 = vmul.f32 %v2490, 1.442695
        %v2515 = vpow.pop %v2514
        %v2516 = vmul.f32 %v2491, 1.442695
        %v2517 = vpow.pop %v2516
        %v2518 = vmul.f32 %v2492, 1.442695
        %v2519 = vpow.pop %v2518
        %v2520 = vmul.f32 %v2493, 1.442695
        %v2521 = vpow.pop %v2520
        %v2522 = vmul.f32 %v2494, 1.442695
        %v2523 = vpow.pop %v2522
        %v2524 = vmul.f32 %v2495, 1.442695
        %v2525 = vpow.pop %v2524
        %v2526 = vmul.f32 %v2496, 1.442695
        %v2527 = vpow.pop %v2526
        %v2528 = vmul.f32 %v2497, 1.442695
        %v2529 = vpow.pop %v2528
        %v2530 = vsel %vm1457, %v2499, 0.0
        %2531 = vadd.xlane.f32.xlu0 %v2530
        %v2532 = vpop.xlane.xlu0 %2531
        %v2533 = vsel %vm1457, %v2501, 0.0
        %2534 = vadd.xlane.f32.xlu0 %v2533
        %v2535 = vpop.xlane.xlu0 %2534
        %v2536 = vsel %vm1457, %v2503, 0.0
        %2537 = vadd.xlane.f32.xlu0 %v2536
        %v2538 = vpop.xlane.xlu0 %2537
        %v2539 = vsel %vm1457, %v2505, 0.0
        %2540 = vadd.xlane.f32.xlu0 %v2539
        %v2541 = vpop.xlane.xlu0 %2540
        %v2542 = vsel %vm1457, %v2507, 0.0
        %2543 = vadd.xlane.f32.xlu0 %v2542
        %v2544 = vpop.xlane.xlu0 %2543
        %v2545 = vsel %vm1457, %v2509, 0.0
        %2546 = vadd.xlane.f32.xlu0 %v2545
        %v2547 = vpop.xlane.xlu0 %2546
        %v2548 = vsel %vm1457, %v2511, 0.0
        %2549 = vadd.xlane.f32.xlu0 %v2548
        %v2550 = vpop.xlane.xlu0 %2549
        %v2551 = vsel %vm1457, %v2513, 0.0
        %2552 = vadd.xlane.f32.xlu0 %v2551
        %v2553 = vpop.xlane.xlu0 %2552
        %v2554 = vsel %vm1457, %v2515, 0.0
        %2555 = vadd.xlane.f32.xlu0 %v2554
        %v2556 = vpop.xlane.xlu0 %2555
        %v2557 = vsel %vm1457, %v2517, 0.0
        %2558 = vadd.xlane.f32.xlu0 %v2557
        %v2559 = vpop.xlane.xlu0 %2558
        %v2560 = vsel %vm1457, %v2519, 0.0
        %2561 = vadd.xlane.f32.xlu0 %v2560
        %v2562 = vpop.xlane.xlu0 %2561
        %v2563 = vsel %vm1457, %v2521, 0.0
        %2564 = vadd.xlane.f32.xlu0 %v2563
        %v2565 = vpop.xlane.xlu0 %2564
        %v2566 = vsel %vm1457, %v2523, 0.0
        %2567 = vadd.xlane.f32.xlu0 %v2566
        %v2568 = vpop.xlane.xlu0 %2567
        %v2569 = vsel %vm1457, %v2525, 0.0
        %2570 = vadd.xlane.f32.xlu0 %v2569
        %v2571 = vpop.xlane.xlu0 %2570
        %v2572 = vsel %vm1457, %v2527, 0.0
        %2573 = vadd.xlane.f32.xlu0 %v2572
        %v2574 = vpop.xlane.xlu0 %2573
        %v2575 = vsel %vm1457, %v2529, 0.0
        %2576 = vadd.xlane.f32.xlu0 %v2575
        %v2577 = vpop.xlane.xlu0 %2576
        %v2578 = vpack.c.bf16 %v2499, %v2499
        %v2579 = vpack.c.bf16 %v2501, %v2501
        %v2580 = vpack.c.bf16 %v2503, %v2503
        %v2581 = vpack.c.bf16 %v2505, %v2505
        %v2582 = vpack.c.bf16 %v2507, %v2507
        %v2583 = vpack.c.bf16 %v2509, %v2509
        %v2584 = vpack.c.bf16 %v2511, %v2511
        %v2585 = vpack.c.bf16 %v2513, %v2513
        %v2586 = vpack.c.bf16 %v2515, %v2515
        %v2587 = vpack.c.bf16 %v2517, %v2517
        %v2588 = vpack.c.bf16 %v2519, %v2519
        %v2589 = vpack.c.bf16 %v2521, %v2521
        %v2590 = vpack.c.bf16 %v2523, %v2523
        %v2591 = vpack.c.bf16 %v2525, %v2525
        %v2592 = vpack.c.bf16 %v2527, %v2527
        %v2593 = vpack.c.bf16 %v2529, %v2529
        %v2602 = vunpack.c.l.b16 %v2578
        %v2603 = vunpack.c.l.b16 %v2579
        %v2604 = vunpack.c.l.b16 %v2580
        %v2605 = vunpack.c.l.b16 %v2581
        %v2606 = vunpack.c.l.b16 %v2582
        %v2607 = vunpack.c.l.b16 %v2583
        %v2608 = vunpack.c.l.b16 %v2584
        %v2609 = vunpack.c.l.b16 %v2585
        %v2610 = vpack.c.b16 %v2603, %v2602
        %v2611 = vpack.c.b16 %v2605, %v2604
        %v2612 = vpack.c.b16 %v2607, %v2606
        %v2613 = vpack.c.b16 %v2609, %v2608
        %2614 = vrot.lane.b32.xlu0 %v1654, 64
        %v2615 = vpop.permute.xlu0 %2614
        %2616 = vrot.lane.b32.xlu0 %v1655, 64
        %v2617 = vpop.permute.xlu0 %2616
        %2618 = vrot.lane.b32.xlu0 %v1656, 64
        %v2619 = vpop.permute.xlu0 %2618
        %2620 = vrot.lane.b32.xlu0 %v1657, 64
        %v2621 = vpop.permute.xlu0 %2620
        %v2627 = vsel %vm1457, %v2610, 0
        %v2630 = vsel %vm1457, %v2611, 0
        %v2633 = vsel %vm1457, %v2612, 0
        %v2636 = vsel %vm1457, %v2613, 0
        %2638 = vmatpush.bf16.msra.mxu0 0
        %2639 = vmatpush.bf16.msra.mxu0 0
        %2640 = vmatpush.bf16.msra.mxu0 0
        %2641 = vmatpush.bf16.msra.mxu0 0
        %2642 = vmatpush.bf16.msra.mxu0 %v2621
        %2643 = vmatpush.bf16.msra.mxu0 %v2619
        %2644 = vmatpush.bf16.msra.mxu0 %v2617
        %2645 = vmatpush.bf16.msra.mxu0 %v2615
        %2646 = vmatmul.bf16.gmra.mxu0 %v2627
        %v2647 = vpop.f32.mrf.mxu0
        %v2648 = vadd.f32 0.0, %v2647
        %v2649 = vpop.f32.mrf.mxu0
        %v2650 = vadd.f32 0.0, %v2649
        %2651 = vmatmul.bf16.gmra.mxu0 %v2630
        %v2652 = vpop.f32.mrf.mxu0
        %v2653 = vadd.f32 0.0, %v2652
        %v2654 = vpop.f32.mrf.mxu0
        %v2655 = vadd.f32 0.0, %v2654
        %2656 = vmatmul.bf16.gmra.mxu0 %v2633
        %v2657 = vpop.f32.mrf.mxu0
        %v2658 = vadd.f32 0.0, %v2657
        %v2659 = vpop.f32.mrf.mxu0
        %v2660 = vadd.f32 0.0, %v2659
        %2661 = vmatmul.bf16.gmra.mxu0 %v2636
        %v2662 = vpop.f32.mrf.mxu0
        %v2663 = vadd.f32 0.0, %v2662
        %v2664 = vpop.f32.mrf.mxu0
        %v2665 = vadd.f32 0.0, %v2664
        %2666 = vdwg.mxu0
        %v2675 = vunpack.c.l.b16 %v2586
        %v2676 = vunpack.c.l.b16 %v2587
        %v2677 = vunpack.c.l.b16 %v2588
        %v2678 = vunpack.c.l.b16 %v2589
        %v2679 = vunpack.c.l.b16 %v2590
        %v2680 = vunpack.c.l.b16 %v2591
        %v2681 = vunpack.c.l.b16 %v2592
        %v2682 = vunpack.c.l.b16 %v2593
        %v2683 = vpack.c.b16 %v2676, %v2675
        %v2684 = vpack.c.b16 %v2678, %v2677
        %v2685 = vpack.c.b16 %v2680, %v2679
        %v2686 = vpack.c.b16 %v2682, %v2681
        %2687 = vrot.lane.b32.xlu0 %v1739, 64
        %v2688 = vpop.permute.xlu0 %2687
        %2689 = vrot.lane.b32.xlu0 %v1740, 64
        %v2690 = vpop.permute.xlu0 %2689
        %2691 = vrot.lane.b32.xlu0 %v1741, 64
        %v2692 = vpop.permute.xlu0 %2691
        %2693 = vrot.lane.b32.xlu0 %v1742, 64
        %v2694 = vpop.permute.xlu0 %2693
        %v2700 = vsel %vm1457, %v2683, 0
        %v2703 = vsel %vm1457, %v2684, 0
        %v2706 = vsel %vm1457, %v2685, 0
        %v2709 = vsel %vm1457, %v2686, 0
        %2711 = vmatpush.bf16.msra.mxu0 0
        %2712 = vmatpush.bf16.msra.mxu0 0
        %2713 = vmatpush.bf16.msra.mxu0 0
        %2714 = vmatpush.bf16.msra.mxu0 0
        %2715 = vmatpush.bf16.msra.mxu0 %v2694
        %2716 = vmatpush.bf16.msra.mxu0 %v2692
        %2717 = vmatpush.bf16.msra.mxu0 %v2690
        %2718 = vmatpush.bf16.msra.mxu0 %v2688
        %2719 = vmatmul.bf16.gmra.mxu0 %v2700
        %v2720 = vpop.f32.mrf.mxu0
        %v2721 = vadd.f32 0.0, %v2720
        %v2722 = vpop.f32.mrf.mxu0
        %v2723 = vadd.f32 0.0, %v2722
        %2724 = vmatmul.bf16.gmra.mxu0 %v2703
        %v2725 = vpop.f32.mrf.mxu0
        %v2726 = vadd.f32 0.0, %v2725
        %v2727 = vpop.f32.mrf.mxu0
        %v2728 = vadd.f32 0.0, %v2727
        %2729 = vmatmul.bf16.gmra.mxu0 %v2706
        %v2730 = vpop.f32.mrf.mxu0
        %v2731 = vadd.f32 0.0, %v2730
        %v2732 = vpop.f32.mrf.mxu0
        %v2733 = vadd.f32 0.0, %v2732
        %2734 = vmatmul.bf16.gmra.mxu0 %v2709
        %v2735 = vpop.f32.mrf.mxu0
        %v2736 = vadd.f32 0.0, %v2735
        %v2737 = vpop.f32.mrf.mxu0
        %v2738 = vadd.f32 0.0, %v2737
        %2739 = vdwg.mxu0
        %v2740 = vrcp.pop %v2532
        %v2741 = vrcp.pop %v2535
        %v2742 = vrcp.pop %v2538
        %v2743 = vrcp.pop %v2541
        %v2744 = vrcp.pop %v2544
        %v2745 = vrcp.pop %v2547
        %v2746 = vrcp.pop %v2550
        %v2747 = vrcp.pop %v2553
        %v2748 = vrcp.pop %v2556
        %v2749 = vrcp.pop %v2559
        %v2750 = vrcp.pop %v2562
        %v2751 = vrcp.pop %v2565
        %v2752 = vrcp.pop %v2568
        %v2753 = vrcp.pop %v2571
        %v2754 = vrcp.pop %v2574
        %v2755 = vrcp.pop %v2577
        %v2756 = vmul.f32 %v2648, %v2740
        %v2757 = vmul.f32 %v2650, %v2741
        %v2758 = vmul.f32 %v2653, %v2742
        %v2759 = vmul.f32 %v2655, %v2743
        %v2760 = vmul.f32 %v2658, %v2744
        %v2761 = vmul.f32 %v2660, %v2745
        %v2762 = vmul.f32 %v2663, %v2746
        %v2763 = vmul.f32 %v2665, %v2747
        %v2764 = vmul.f32 %v2721, %v2748
        %v2765 = vmul.f32 %v2723, %v2749
        %v2766 = vmul.f32 %v2726, %v2750
        %v2767 = vmul.f32 %v2728, %v2751
        %v2768 = vmul.f32 %v2731, %v2752
        %v2769 = vmul.f32 %v2733, %v2753
        %v2770 = vmul.f32 %v2736, %v2754
        %v2771 = vmul.f32 %v2738, %v2755
        %2772 = vrot.lane.b32.xlu0 %v1286, 32
        %v2773 = vpop.permute.xlu0 %2772
        %2774 = vrot.lane.b32.xlu0 %v1287, 32
        %v2775 = vpop.permute.xlu0 %2774
        %2776 = vrot.lane.b32.xlu0 %v1288, 32
        %v2777 = vpop.permute.xlu0 %2776
        %2778 = vrot.lane.b32.xlu0 %v1289, 32
        %v2779 = vpop.permute.xlu0 %2778
        %2780 = vrot.lane.b32.xlu0 %v1306, 32
        %v2781 = vpop.permute.xlu0 %2780
        %2782 = vrot.lane.b32.xlu0 %v1307, 32
        %v2783 = vpop.permute.xlu0 %2782
        %2784 = vrot.lane.b32.xlu0 %v1308, 32
        %v2785 = vpop.permute.xlu0 %2784
        %2786 = vrot.lane.b32.xlu0 %v1309, 32
        %v2787 = vpop.permute.xlu0 %2786
        %v2789 = vsel %vm1310, %v2773, 0
        %v2792 = vsel %vm1310, %v2775, 0
        %v2795 = vsel %vm1310, %v2777, 0
        %v2798 = vsel %vm1310, %v2779, 0
        %v2801 = vsel %vm1310, %v2781, 0
        %v2804 = vsel %vm1310, %v2783, 0
        %v2807 = vsel %vm1310, %v2785, 0
        %v2810 = vsel %vm1310, %v2787, 0
        %2812 = vmatpush.bf16.xpose.msra.mxu0 0
        %2813 = vmatpush.bf16.xpose.msra.mxu0 0
        %2814 = vmatpush.bf16.xpose.msra.mxu0 0
        %2815 = vmatpush.bf16.xpose.msra.mxu0 0
        %2816 = vmatpush.bf16.xpose.msra.mxu0 %v2810
        %2817 = vmatpush.bf16.xpose.msra.mxu0 %v2807
        %2818 = vmatpush.bf16.xpose.msra.mxu0 %v2804
        %2819 = vmatpush.bf16.xpose.msra.mxu0 %v2801
        %2820 = vmatmul.bf16.gmra.mxu0 %v2789
        %v2821 = vpop.f32.mrf.mxu0
        %v2822 = vadd.f32 %v1206, %v2821
        %v2823 = vpop.f32.mrf.mxu0
        %v2824 = vadd.f32 %v1207, %v2823
        %2825 = vmatmul.bf16.gmra.mxu0 %v2792
        %v2826 = vpop.f32.mrf.mxu0
        %v2827 = vadd.f32 %v1208, %v2826
        %v2828 = vpop.f32.mrf.mxu0
        %v2829 = vadd.f32 %v1209, %v2828
        %2830 = vmatmul.bf16.gmra.mxu0 %v2795
        %v2831 = vpop.f32.mrf.mxu0
        %v2832 = vadd.f32 %v1210, %v2831
        %v2833 = vpop.f32.mrf.mxu0
        %v2834 = vadd.f32 %v1211, %v2833
        %2835 = vmatmul.bf16.gmra.mxu0 %v2798
        %v2836 = vpop.f32.mrf.mxu0
        %v2837 = vadd.f32 %v1212, %v2836
        %v2838 = vpop.f32.mrf.mxu0
        %v2839 = vadd.f32 %v1213, %v2838
        %2840 = vdwg.mxu0
        %2841 = vrot.lane.b32.xlu0 %v1380, 32
        %v2842 = vpop.permute.xlu0 %2841
        %2843 = vrot.lane.b32.xlu0 %v1381, 32
        %v2844 = vpop.permute.xlu0 %2843
        %2845 = vrot.lane.b32.xlu0 %v1382, 32
        %v2846 = vpop.permute.xlu0 %2845
        %2847 = vrot.lane.b32.xlu0 %v1383, 32
        %v2848 = vpop.permute.xlu0 %2847
        %2849 = vrot.lane.b32.xlu0 %v1400, 32
        %v2850 = vpop.permute.xlu0 %2849
        %2851 = vrot.lane.b32.xlu0 %v1401, 32
        %v2852 = vpop.permute.xlu0 %2851
        %2853 = vrot.lane.b32.xlu0 %v1402, 32
        %v2854 = vpop.permute.xlu0 %2853
        %2855 = vrot.lane.b32.xlu0 %v1403, 32
        %v2856 = vpop.permute.xlu0 %2855
        %v2858 = vsel %vm1310, %v2842, 0
        %v2861 = vsel %vm1310, %v2844, 0
        %v2864 = vsel %vm1310, %v2846, 0
        %v2867 = vsel %vm1310, %v2848, 0
        %v2870 = vsel %vm1310, %v2850, 0
        %v2873 = vsel %vm1310, %v2852, 0
        %v2876 = vsel %vm1310, %v2854, 0
        %v2879 = vsel %vm1310, %v2856, 0
        %2881 = vmatpush.bf16.xpose.msra.mxu0 0
        %2882 = vmatpush.bf16.xpose.msra.mxu0 0
        %2883 = vmatpush.bf16.xpose.msra.mxu0 0
        %2884 = vmatpush.bf16.xpose.msra.mxu0 0
        %2885 = vmatpush.bf16.xpose.msra.mxu0 %v2879
        %2886 = vmatpush.bf16.xpose.msra.mxu0 %v2876
        %2887 = vmatpush.bf16.xpose.msra.mxu0 %v2873
        %2888 = vmatpush.bf16.xpose.msra.mxu0 %v2870
        %2889 = vmatmul.bf16.gmra.mxu0 %v2858
        %v2890 = vpop.f32.mrf.mxu0
        %v2891 = vadd.f32 %v1214, %v2890
        %v2892 = vpop.f32.mrf.mxu0
        %v2893 = vadd.f32 %v1215, %v2892
        %2894 = vmatmul.bf16.gmra.mxu0 %v2861
        %v2895 = vpop.f32.mrf.mxu0
        %v2896 = vadd.f32 %v1216, %v2895
        %v2897 = vpop.f32.mrf.mxu0
        %v2898 = vadd.f32 %v1217, %v2897
        %2899 = vmatmul.bf16.gmra.mxu0 %v2864
        %v2900 = vpop.f32.mrf.mxu0
        %v2901 = vadd.f32 %v1218, %v2900
        %v2902 = vpop.f32.mrf.mxu0
        %v2903 = vadd.f32 %v1219, %v2902
        %2904 = vmatmul.bf16.gmra.mxu0 %v2867
        %v2905 = vpop.f32.mrf.mxu0
        %v2906 = vadd.f32 %v1220, %v2905
        %v2907 = vpop.f32.mrf.mxu0
        %v2908 = vadd.f32 %v1221, %v2907
        %2909 = vdwg.mxu0
        %v2910 = vsel %vm1457, %v2822, -inf
        %2911 = vmax.xlane.f32.xlu0 %v2910
        %v2912 = vpop.xlane.xlu0 %2911
        %v2913 = vsel %vm1457, %v2824, -inf
        %2914 = vmax.xlane.f32.xlu0 %v2913
        %v2915 = vpop.xlane.xlu0 %2914
        %v2916 = vsel %vm1457, %v2827, -inf
        %2917 = vmax.xlane.f32.xlu0 %v2916
        %v2918 = vpop.xlane.xlu0 %2917
        %v2919 = vsel %vm1457, %v2829, -inf
        %2920 = vmax.xlane.f32.xlu0 %v2919
        %v2921 = vpop.xlane.xlu0 %2920
        %v2922 = vsel %vm1457, %v2832, -inf
        %2923 = vmax.xlane.f32.xlu0 %v2922
        %v2924 = vpop.xlane.xlu0 %2923
        %v2925 = vsel %vm1457, %v2834, -inf
        %2926 = vmax.xlane.f32.xlu0 %v2925
        %v2927 = vpop.xlane.xlu0 %2926
        %v2928 = vsel %vm1457, %v2837, -inf
        %2929 = vmax.xlane.f32.xlu0 %v2928
        %v2930 = vpop.xlane.xlu0 %2929
        %v2931 = vsel %vm1457, %v2839, -inf
        %2932 = vmax.xlane.f32.xlu0 %v2931
        %v2933 = vpop.xlane.xlu0 %2932
        %v2934 = vsel %vm1457, %v2891, -inf
        %2935 = vmax.xlane.f32.xlu0 %v2934
        %v2936 = vpop.xlane.xlu0 %2935
        %v2937 = vsel %vm1457, %v2893, -inf
        %2938 = vmax.xlane.f32.xlu0 %v2937
        %v2939 = vpop.xlane.xlu0 %2938
        %v2940 = vsel %vm1457, %v2896, -inf
        %2941 = vmax.xlane.f32.xlu0 %v2940
        %v2942 = vpop.xlane.xlu0 %2941
        %v2943 = vsel %vm1457, %v2898, -inf
        %2944 = vmax.xlane.f32.xlu0 %v2943
        %v2945 = vpop.xlane.xlu0 %2944
        %v2946 = vsel %vm1457, %v2901, -inf
        %2947 = vmax.xlane.f32.xlu0 %v2946
        %v2948 = vpop.xlane.xlu0 %2947
        %v2949 = vsel %vm1457, %v2903, -inf
        %2950 = vmax.xlane.f32.xlu0 %v2949
        %v2951 = vpop.xlane.xlu0 %2950
        %v2952 = vsel %vm1457, %v2906, -inf
        %2953 = vmax.xlane.f32.xlu0 %v2952
        %v2954 = vpop.xlane.xlu0 %2953
        %v2955 = vsel %vm1457, %v2908, -inf
        %2956 = vmax.xlane.f32.xlu0 %v2955
        %v2957 = vpop.xlane.xlu0 %2956
        %v2958 = vsub.f32 %v2822, %v2912
        %v2959 = vsub.f32 %v2824, %v2915
        %v2960 = vsub.f32 %v2827, %v2918
        %v2961 = vsub.f32 %v2829, %v2921
        %v2962 = vsub.f32 %v2832, %v2924
        %v2963 = vsub.f32 %v2834, %v2927
        %v2964 = vsub.f32 %v2837, %v2930
        %v2965 = vsub.f32 %v2839, %v2933
        %v2966 = vsub.f32 %v2891, %v2936
        %v2967 = vsub.f32 %v2893, %v2939
        %v2968 = vsub.f32 %v2896, %v2942
        %v2969 = vsub.f32 %v2898, %v2945
        %v2970 = vsub.f32 %v2901, %v2948
        %v2971 = vsub.f32 %v2903, %v2951
        %v2972 = vsub.f32 %v2906, %v2954
        %v2973 = vsub.f32 %v2908, %v2957
        %v2974 = vmul.f32 %v2958, 1.442695
        %v2975 = vpow.pop %v2974
        %v2976 = vmul.f32 %v2959, 1.442695
        %v2977 = vpow.pop %v2976
        %v2978 = vmul.f32 %v2960, 1.442695
        %v2979 = vpow.pop %v2978
        %v2980 = vmul.f32 %v2961, 1.442695
        %v2981 = vpow.pop %v2980
        %v2982 = vmul.f32 %v2962, 1.442695
        %v2983 = vpow.pop %v2982
        %v2984 = vmul.f32 %v2963, 1.442695
        %v2985 = vpow.pop %v2984
        %v2986 = vmul.f32 %v2964, 1.442695
        %v2987 = vpow.pop %v2986
        %v2988 = vmul.f32 %v2965, 1.442695
        %v2989 = vpow.pop %v2988
        %v2990 = vmul.f32 %v2966, 1.442695
        %v2991 = vpow.pop %v2990
        %v2992 = vmul.f32 %v2967, 1.442695
        %v2993 = vpow.pop %v2992
        %v2994 = vmul.f32 %v2968, 1.442695
        %v2995 = vpow.pop %v2994
        %v2996 = vmul.f32 %v2969, 1.442695
        %v2997 = vpow.pop %v2996
        %v2998 = vmul.f32 %v2970, 1.442695
        %v2999 = vpow.pop %v2998
        %v3000 = vmul.f32 %v2971, 1.442695
        %v3001 = vpow.pop %v3000
        %v3002 = vmul.f32 %v2972, 1.442695
        %v3003 = vpow.pop %v3002
        %v3004 = vmul.f32 %v2973, 1.442695
        %v3005 = vpow.pop %v3004
        %v3006 = vsel %vm1457, %v2975, 0.0
        %3007 = vadd.xlane.f32.xlu0 %v3006
        %v3008 = vpop.xlane.xlu0 %3007
        %v3009 = vsel %vm1457, %v2977, 0.0
        %3010 = vadd.xlane.f32.xlu0 %v3009
        %v3011 = vpop.xlane.xlu0 %3010
        %v3012 = vsel %vm1457, %v2979, 0.0
        %3013 = vadd.xlane.f32.xlu0 %v3012
        %v3014 = vpop.xlane.xlu0 %3013
        %v3015 = vsel %vm1457, %v2981, 0.0
        %3016 = vadd.xlane.f32.xlu0 %v3015
        %v3017 = vpop.xlane.xlu0 %3016
        %v3018 = vsel %vm1457, %v2983, 0.0
        %3019 = vadd.xlane.f32.xlu0 %v3018
        %v3020 = vpop.xlane.xlu0 %3019
        %v3021 = vsel %vm1457, %v2985, 0.0
        %3022 = vadd.xlane.f32.xlu0 %v3021
        %v3023 = vpop.xlane.xlu0 %3022
        %v3024 = vsel %vm1457, %v2987, 0.0
        %3025 = vadd.xlane.f32.xlu0 %v3024
        %v3026 = vpop.xlane.xlu0 %3025
        %v3027 = vsel %vm1457, %v2989, 0.0
        %3028 = vadd.xlane.f32.xlu0 %v3027
        %v3029 = vpop.xlane.xlu0 %3028
        %v3030 = vsel %vm1457, %v2991, 0.0
        %3031 = vadd.xlane.f32.xlu0 %v3030
        %v3032 = vpop.xlane.xlu0 %3031
        %v3033 = vsel %vm1457, %v2993, 0.0
        %3034 = vadd.xlane.f32.xlu0 %v3033
        %v3035 = vpop.xlane.xlu0 %3034
        %v3036 = vsel %vm1457, %v2995, 0.0
        %3037 = vadd.xlane.f32.xlu0 %v3036
        %v3038 = vpop.xlane.xlu0 %3037
        %v3039 = vsel %vm1457, %v2997, 0.0
        %3040 = vadd.xlane.f32.xlu0 %v3039
        %v3041 = vpop.xlane.xlu0 %3040
        %v3042 = vsel %vm1457, %v2999, 0.0
        %3043 = vadd.xlane.f32.xlu0 %v3042
        %v3044 = vpop.xlane.xlu0 %3043
        %v3045 = vsel %vm1457, %v3001, 0.0
        %3046 = vadd.xlane.f32.xlu0 %v3045
        %v3047 = vpop.xlane.xlu0 %3046
        %v3048 = vsel %vm1457, %v3003, 0.0
        %3049 = vadd.xlane.f32.xlu0 %v3048
        %v3050 = vpop.xlane.xlu0 %3049
        %v3051 = vsel %vm1457, %v3005, 0.0
        %3052 = vadd.xlane.f32.xlu0 %v3051
        %v3053 = vpop.xlane.xlu0 %3052
        %v3054 = vpack.c.bf16 %v2975, %v2975
        %v3055 = vpack.c.bf16 %v2977, %v2977
        %v3056 = vpack.c.bf16 %v2979, %v2979
        %v3057 = vpack.c.bf16 %v2981, %v2981
        %v3058 = vpack.c.bf16 %v2983, %v2983
        %v3059 = vpack.c.bf16 %v2985, %v2985
        %v3060 = vpack.c.bf16 %v2987, %v2987
        %v3061 = vpack.c.bf16 %v2989, %v2989
        %v3062 = vpack.c.bf16 %v2991, %v2991
        %v3063 = vpack.c.bf16 %v2993, %v2993
        %v3064 = vpack.c.bf16 %v2995, %v2995
        %v3065 = vpack.c.bf16 %v2997, %v2997
        %v3066 = vpack.c.bf16 %v2999, %v2999
        %v3067 = vpack.c.bf16 %v3001, %v3001
        %v3068 = vpack.c.bf16 %v3003, %v3003
        %v3069 = vpack.c.bf16 %v3005, %v3005
        %v3078 = vunpack.c.l.b16 %v3054
        %v3079 = vunpack.c.l.b16 %v3055
        %v3080 = vunpack.c.l.b16 %v3056
        %v3081 = vunpack.c.l.b16 %v3057
        %v3082 = vunpack.c.l.b16 %v3058
        %v3083 = vunpack.c.l.b16 %v3059
        %v3084 = vunpack.c.l.b16 %v3060
        %v3085 = vunpack.c.l.b16 %v3061
        %v3086 = vpack.c.b16 %v3079, %v3078
        %v3087 = vpack.c.b16 %v3081, %v3080
        %v3088 = vpack.c.b16 %v3083, %v3082
        %v3089 = vpack.c.b16 %v3085, %v3084
        %3090 = vrot.lane.b32.xlu0 %v1654, 32
        %v3091 = vpop.permute.xlu0 %3090
        %3092 = vrot.lane.b32.xlu0 %v1655, 32
        %v3093 = vpop.permute.xlu0 %3092
        %3094 = vrot.lane.b32.xlu0 %v1656, 32
        %v3095 = vpop.permute.xlu0 %3094
        %3096 = vrot.lane.b32.xlu0 %v1657, 32
        %v3097 = vpop.permute.xlu0 %3096
        %v3103 = vsel %vm1457, %v3086, 0
        %v3106 = vsel %vm1457, %v3087, 0
        %v3109 = vsel %vm1457, %v3088, 0
        %v3112 = vsel %vm1457, %v3089, 0
        %3114 = vmatpush.bf16.msra.mxu0 0
        %3115 = vmatpush.bf16.msra.mxu0 0
        %3116 = vmatpush.bf16.msra.mxu0 0
        %3117 = vmatpush.bf16.msra.mxu0 0
        %3118 = vmatpush.bf16.msra.mxu0 %v3097
        %3119 = vmatpush.bf16.msra.mxu0 %v3095
        %3120 = vmatpush.bf16.msra.mxu0 %v3093
        %3121 = vmatpush.bf16.msra.mxu0 %v3091
        %3122 = vmatmul.bf16.gmra.mxu0 %v3103
        %v3123 = vpop.f32.mrf.mxu0
        %v3124 = vadd.f32 0.0, %v3123
        %v3125 = vpop.f32.mrf.mxu0
        %v3126 = vadd.f32 0.0, %v3125
        %3127 = vmatmul.bf16.gmra.mxu0 %v3106
        %v3128 = vpop.f32.mrf.mxu0
        %v3129 = vadd.f32 0.0, %v3128
        %v3130 = vpop.f32.mrf.mxu0
        %v3131 = vadd.f32 0.0, %v3130
        %3132 = vmatmul.bf16.gmra.mxu0 %v3109
        %v3133 = vpop.f32.mrf.mxu0
        %v3134 = vadd.f32 0.0, %v3133
        %v3135 = vpop.f32.mrf.mxu0
        %v3136 = vadd.f32 0.0, %v3135
        %3137 = vmatmul.bf16.gmra.mxu0 %v3112
        %v3138 = vpop.f32.mrf.mxu0
        %v3139 = vadd.f32 0.0, %v3138
        %v3140 = vpop.f32.mrf.mxu0
        %v3141 = vadd.f32 0.0, %v3140
        %3142 = vdwg.mxu0
        %v3151 = vunpack.c.l.b16 %v3062
        %v3152 = vunpack.c.l.b16 %v3063
        %v3153 = vunpack.c.l.b16 %v3064
        %v3154 = vunpack.c.l.b16 %v3065
        %v3155 = vunpack.c.l.b16 %v3066
        %v3156 = vunpack.c.l.b16 %v3067
        %v3157 = vunpack.c.l.b16 %v3068
        %v3158 = vunpack.c.l.b16 %v3069
        %v3159 = vpack.c.b16 %v3152, %v3151
        %v3160 = vpack.c.b16 %v3154, %v3153
        %v3161 = vpack.c.b16 %v3156, %v3155
        %v3162 = vpack.c.b16 %v3158, %v3157
        %3163 = vrot.lane.b32.xlu0 %v1739, 32
        %v3164 = vpop.permute.xlu0 %3163
        %3165 = vrot.lane.b32.xlu0 %v1740, 32
        %v3166 = vpop.permute.xlu0 %3165
        %3167 = vrot.lane.b32.xlu0 %v1741, 32
        %v3168 = vpop.permute.xlu0 %3167
        %3169 = vrot.lane.b32.xlu0 %v1742, 32
        %v3170 = vpop.permute.xlu0 %3169
        %v3176 = vsel %vm1457, %v3159, 0
        %v3179 = vsel %vm1457, %v3160, 0
        %v3182 = vsel %vm1457, %v3161, 0
        %v3185 = vsel %vm1457, %v3162, 0
        %3187 = vmatpush.bf16.msra.mxu0 0
        %3188 = vmatpush.bf16.msra.mxu0 0
        %3189 = vmatpush.bf16.msra.mxu0 0
        %3190 = vmatpush.bf16.msra.mxu0 0
        %3191 = vmatpush.bf16.msra.mxu0 %v3170
        %3192 = vmatpush.bf16.msra.mxu0 %v3168
        %3193 = vmatpush.bf16.msra.mxu0 %v3166
        %3194 = vmatpush.bf16.msra.mxu0 %v3164
        %3195 = vmatmul.bf16.gmra.mxu0 %v3176
        %v3196 = vpop.f32.mrf.mxu0
        %v3197 = vadd.f32 0.0, %v3196
        %v3198 = vpop.f32.mrf.mxu0
        %v3199 = vadd.f32 0.0, %v3198
        %3200 = vmatmul.bf16.gmra.mxu0 %v3179
        %v3201 = vpop.f32.mrf.mxu0
        %v3202 = vadd.f32 0.0, %v3201
        %v3203 = vpop.f32.mrf.mxu0
        %v3204 = vadd.f32 0.0, %v3203
        %3205 = vmatmul.bf16.gmra.mxu0 %v3182
        %v3206 = vpop.f32.mrf.mxu0
        %v3207 = vadd.f32 0.0, %v3206
        %v3208 = vpop.f32.mrf.mxu0
        %v3209 = vadd.f32 0.0, %v3208
        %3210 = vmatmul.bf16.gmra.mxu0 %v3185
        %v3211 = vpop.f32.mrf.mxu0
        %v3212 = vadd.f32 0.0, %v3211
        %v3213 = vpop.f32.mrf.mxu0
        %v3214 = vadd.f32 0.0, %v3213
        %3215 = vdwg.mxu0
        %v3216 = vrcp.pop %v3008
        %v3217 = vrcp.pop %v3011
        %v3218 = vrcp.pop %v3014
        %v3219 = vrcp.pop %v3017
        %v3220 = vrcp.pop %v3020
        %v3221 = vrcp.pop %v3023
        %v3222 = vrcp.pop %v3026
        %v3223 = vrcp.pop %v3029
        %v3224 = vrcp.pop %v3032
        %v3225 = vrcp.pop %v3035
        %v3226 = vrcp.pop %v3038
        %v3227 = vrcp.pop %v3041
        %v3228 = vrcp.pop %v3044
        %v3229 = vrcp.pop %v3047
        %v3230 = vrcp.pop %v3050
        %v3231 = vrcp.pop %v3053
        %v3232 = vmul.f32 %v3124, %v3216
        %v3233 = vmul.f32 %v3126, %v3217
        %v3234 = vmul.f32 %v3129, %v3218
        %v3235 = vmul.f32 %v3131, %v3219
        %v3236 = vmul.f32 %v3134, %v3220
        %v3237 = vmul.f32 %v3136, %v3221
        %v3238 = vmul.f32 %v3139, %v3222
        %v3239 = vmul.f32 %v3141, %v3223
        %v3240 = vmul.f32 %v3197, %v3224
        %v3241 = vmul.f32 %v3199, %v3225
        %v3242 = vmul.f32 %v3202, %v3226
        %v3243 = vmul.f32 %v3204, %v3227
        %v3244 = vmul.f32 %v3207, %v3228
        %v3245 = vmul.f32 %v3209, %v3229
        %v3246 = vmul.f32 %v3212, %v3230
        %v3247 = vmul.f32 %v3214, %v3231
        %3264 = vrot.lane.b32.xlu0 %v2280, 32
        %v3265 = vpop.permute.xlu0 %3264
        %3266 = vrot.lane.b32.xlu0 %v2281, 32
        %v3267 = vpop.permute.xlu0 %3266
        %3268 = vrot.lane.b32.xlu0 %v2282, 32
        %v3269 = vpop.permute.xlu0 %3268
        %3270 = vrot.lane.b32.xlu0 %v2283, 32
        %v3271 = vpop.permute.xlu0 %3270
        %3272 = vrot.lane.b32.xlu0 %v2284, 32
        %v3273 = vpop.permute.xlu0 %3272
        %3274 = vrot.lane.b32.xlu0 %v2285, 32
        %v3275 = vpop.permute.xlu0 %3274
        %3276 = vrot.lane.b32.xlu0 %v2286, 32
        %v3277 = vpop.permute.xlu0 %3276
        %3278 = vrot.lane.b32.xlu0 %v2287, 32
        %v3279 = vpop.permute.xlu0 %3278
        %3280 = vrot.lane.b32.xlu0 %v2288, 32
        %v3281 = vpop.permute.xlu0 %3280
        %3282 = vrot.lane.b32.xlu0 %v2289, 32
        %v3283 = vpop.permute.xlu0 %3282
        %3284 = vrot.lane.b32.xlu0 %v2290, 32
        %v3285 = vpop.permute.xlu0 %3284
        %3286 = vrot.lane.b32.xlu0 %v2291, 32
        %v3287 = vpop.permute.xlu0 %3286
        %3288 = vrot.lane.b32.xlu0 %v2292, 32
        %v3289 = vpop.permute.xlu0 %3288
        %3290 = vrot.lane.b32.xlu0 %v2293, 32
        %v3291 = vpop.permute.xlu0 %3290
        %3292 = vrot.lane.b32.xlu0 %v2294, 32
        %v3293 = vpop.permute.xlu0 %3292
        %3294 = vrot.lane.b32.xlu0 %v2295, 32
        %v3295 = vpop.permute.xlu0 %3294
        %3328 = vrot.lane.b32.xlu0 %v2756, 64
        %v3329 = vpop.permute.xlu0 %3328
        %3330 = vrot.lane.b32.xlu0 %v2757, 64
        %v3331 = vpop.permute.xlu0 %3330
        %3332 = vrot.lane.b32.xlu0 %v2758, 64
        %v3333 = vpop.permute.xlu0 %3332
        %3334 = vrot.lane.b32.xlu0 %v2759, 64
        %v3335 = vpop.permute.xlu0 %3334
        %3336 = vrot.lane.b32.xlu0 %v2760, 64
        %v3337 = vpop.permute.xlu0 %3336
        %3338 = vrot.lane.b32.xlu0 %v2761, 64
        %v3339 = vpop.permute.xlu0 %3338
        %3340 = vrot.lane.b32.xlu0 %v2762, 64
        %v3341 = vpop.permute.xlu0 %3340
        %3342 = vrot.lane.b32.xlu0 %v2763, 64
        %v3343 = vpop.permute.xlu0 %3342
        %3344 = vrot.lane.b32.xlu0 %v2764, 64
        %v3345 = vpop.permute.xlu0 %3344
        %3346 = vrot.lane.b32.xlu0 %v2765, 64
        %v3347 = vpop.permute.xlu0 %3346
        %3348 = vrot.lane.b32.xlu0 %v2766, 64
        %v3349 = vpop.permute.xlu0 %3348
        %3350 = vrot.lane.b32.xlu0 %v2767, 64
        %v3351 = vpop.permute.xlu0 %3350
        %3352 = vrot.lane.b32.xlu0 %v2768, 64
        %v3353 = vpop.permute.xlu0 %3352
        %3354 = vrot.lane.b32.xlu0 %v2769, 64
        %v3355 = vpop.permute.xlu0 %3354
        %3356 = vrot.lane.b32.xlu0 %v2770, 64
        %v3357 = vpop.permute.xlu0 %3356
        %3358 = vrot.lane.b32.xlu0 %v2771, 64
        %v3359 = vpop.permute.xlu0 %3358
        %3392 = vrot.lane.b32.xlu0 %v3232, 96
        %v3393 = vpop.permute.xlu0 %3392
        %3394 = vrot.lane.b32.xlu0 %v3233, 96
        %v3395 = vpop.permute.xlu0 %3394
        %3396 = vrot.lane.b32.xlu0 %v3234, 96
        %v3397 = vpop.permute.xlu0 %3396
        %3398 = vrot.lane.b32.xlu0 %v3235, 96
        %v3399 = vpop.permute.xlu0 %3398
        %3400 = vrot.lane.b32.xlu0 %v3236, 96
        %v3401 = vpop.permute.xlu0 %3400
        %3402 = vrot.lane.b32.xlu0 %v3237, 96
        %v3403 = vpop.permute.xlu0 %3402
        %3404 = vrot.lane.b32.xlu0 %v3238, 96
        %v3405 = vpop.permute.xlu0 %3404
        %3406 = vrot.lane.b32.xlu0 %v3239, 96
        %v3407 = vpop.permute.xlu0 %3406
        %3408 = vrot.lane.b32.xlu0 %v3240, 96
        %v3409 = vpop.permute.xlu0 %3408
        %3410 = vrot.lane.b32.xlu0 %v3241, 96
        %v3411 = vpop.permute.xlu0 %3410
        %3412 = vrot.lane.b32.xlu0 %v3242, 96
        %v3413 = vpop.permute.xlu0 %3412
        %3414 = vrot.lane.b32.xlu0 %v3243, 96
        %v3415 = vpop.permute.xlu0 %3414
        %3416 = vrot.lane.b32.xlu0 %v3244, 96
        %v3417 = vpop.permute.xlu0 %3416
        %3418 = vrot.lane.b32.xlu0 %v3245, 96
        %v3419 = vpop.permute.xlu0 %3418
        %3420 = vrot.lane.b32.xlu0 %v3246, 96
        %v3421 = vpop.permute.xlu0 %3420
        %3422 = vrot.lane.b32.xlu0 %v3247, 96
        %v3423 = vpop.permute.xlu0 %3422
        %v3440 = vsel %vm1310, %v1804, %v3265
        %v3441 = vsel %vm1310, %v1805, %v3267
        %v3442 = vsel %vm1310, %v1806, %v3269
        %v3443 = vsel %vm1310, %v1807, %v3271
        %v3444 = vsel %vm1310, %v1808, %v3273
        %v3445 = vsel %vm1310, %v1809, %v3275
        %v3446 = vsel %vm1310, %v1810, %v3277
        %v3447 = vsel %vm1310, %v1811, %v3279
        %v3448 = vsel %vm1310, %v1812, %v3281
        %v3449 = vsel %vm1310, %v1813, %v3283
        %v3450 = vsel %vm1310, %v1814, %v3285
        %v3451 = vsel %vm1310, %v1815, %v3287
        %v3452 = vsel %vm1310, %v1816, %v3289
        %v3453 = vsel %vm1310, %v1817, %v3291
        %v3454 = vsel %vm1310, %v1818, %v3293
        %v3455 = vsel %vm1310, %v1819, %v3295
        %v3456 = vsel %vm1457, %v3440, %v3329
        %v3457 = vsel %vm1457, %v3441, %v3331
        %v3458 = vsel %vm1457, %v3442, %v3333
        %v3459 = vsel %vm1457, %v3443, %v3335
        %v3460 = vsel %vm1457, %v3444, %v3337
        %v3461 = vsel %vm1457, %v3445, %v3339
        %v3462 = vsel %vm1457, %v3446, %v3341
        %v3463 = vsel %vm1457, %v3447, %v3343
        %v3464 = vsel %vm1457, %v3448, %v3345
        %v3465 = vsel %vm1457, %v3449, %v3347
        %v3466 = vsel %vm1457, %v3450, %v3349
        %v3467 = vsel %vm1457, %v3451, %v3351
        %v3468 = vsel %vm1457, %v3452, %v3353
        %v3469 = vsel %vm1457, %v3453, %v3355
        %v3470 = vsel %vm1457, %v3454, %v3357
        %v3471 = vsel %vm1457, %v3455, %v3359
        %vm3472 = vcmask 785408
        %v3473 = vsel %vm3472, %v3456, %v3393
        %v3474 = vsel %vm3472, %v3457, %v3395
        %v3475 = vsel %vm3472, %v3458, %v3397
        %v3476 = vsel %vm3472, %v3459, %v3399
        %v3477 = vsel %vm3472, %v3460, %v3401
        %v3478 = vsel %vm3472, %v3461, %v3403
        %v3479 = vsel %vm3472, %v3462, %v3405
        %v3480 = vsel %vm3472, %v3463, %v3407
        %v3481 = vsel %vm3472, %v3464, %v3409
        %v3482 = vsel %vm3472, %v3465, %v3411
        %v3483 = vsel %vm3472, %v3466, %v3413
        %v3484 = vsel %vm3472, %v3467, %v3415
        %v3485 = vsel %vm3472, %v3468, %v3417
        %v3486 = vsel %vm3472, %v3469, %v3419
        %v3487 = vsel %vm3472, %v3470, %v3421
        %v3488 = vsel %vm3472, %v3471, %v3423
        %v3489 = vpack.c.bf16 %v3474, %v3473
        %v3490 = vpack.c.bf16 %v3476, %v3475
        %v3491 = vpack.c.bf16 %v3478, %v3477
        %v3492 = vpack.c.bf16 %v3480, %v3479
        %v3493 = vpack.c.bf16 %v3482, %v3481
        %v3494 = vpack.c.bf16 %v3484, %v3483
        %v3495 = vpack.c.bf16 %v3486, %v3485
        %v3496 = vpack.c.bf16 %v3488, %v3487
        %v3497 = vld [vmem:[#allocation10] sm:$0xf]
        %v3498 = vld [vmem:[#allocation10 + $0x4] sm:$0xf]
        %v3499 = vld [vmem:[#allocation10 + $0x8] sm:$0xf]
        %v3500 = vld [vmem:[#allocation10 + $0xc] sm:$0xf]
        %v3501 = vld [vmem:[#allocation10 + $0x10] sm:$0xf]
        %v3502 = vld [vmem:[#allocation10 + $0x14] sm:$0xf]
        %v3503 = vld [vmem:[#allocation10 + $0x18] sm:$0xf]
        %v3504 = vld [vmem:[#allocation10 + $0x1c] sm:$0xf]
        %v3505 = vld [vmem:[#allocation10 + $0x20] sm:$0xf]
        %v3506 = vld [vmem:[#allocation10 + $0x24] sm:$0xf]
        %v3507 = vld [vmem:[#allocation10 + $0x28] sm:$0xf]
        %v3508 = vld [vmem:[#allocation10 + $0x2c] sm:$0xf]
        %v3509 = vld [vmem:[#allocation10 + $0x30] sm:$0xf]
        %v3510 = vld [vmem:[#allocation10 + $0x34] sm:$0xf]
        %v3511 = vld [vmem:[#allocation10 + $0x38] sm:$0xf]
        %v3512 = vld [vmem:[#allocation10 + $0x3c] sm:$0xf]
        %v3513 = vld [vmem:[%s6] sm:$0x1]
        %v3515 = vperm.slane %v3513, 0
        %v3533 = vunpack.c.l.b16 %v3497
        %v3534 = vunpack.c.l.b16 %v3498
        %v3535 = vunpack.c.l.b16 %v3499
        %v3536 = vunpack.c.l.b16 %v3500
        %v3537 = vunpack.c.l.b16 %v3501
        %v3538 = vunpack.c.l.b16 %v3502
        %v3539 = vunpack.c.l.b16 %v3503
        %v3540 = vunpack.c.l.b16 %v3504
        %v3541 = vunpack.c.l.b16 %v3505
        %v3542 = vunpack.c.l.b16 %v3506
        %v3543 = vunpack.c.l.b16 %v3507
        %v3544 = vunpack.c.l.b16 %v3508
        %v3545 = vunpack.c.l.b16 %v3509
        %v3546 = vunpack.c.l.b16 %v3510
        %v3547 = vunpack.c.l.b16 %v3511
        %v3548 = vunpack.c.l.b16 %v3512
        %v3549 = vpack.c.b16 %v3534, %v3533
        %v3550 = vpack.c.b16 %v3536, %v3535
        %v3551 = vpack.c.b16 %v3538, %v3537
        %v3552 = vpack.c.b16 %v3540, %v3539
        %v3553 = vpack.c.b16 %v3542, %v3541
        %v3554 = vpack.c.b16 %v3544, %v3543
        %v3555 = vpack.c.b16 %v3546, %v3545
        %v3556 = vpack.c.b16 %v3548, %v3547
        %3565 = vmatpush.bf16.msra.mxu0 %v3556
        %3566 = vmatpush.bf16.msra.mxu0 %v3555
        %3567 = vmatpush.bf16.msra.mxu0 %v3554
        %3568 = vmatpush.bf16.msra.mxu0 %v3553
        %3569 = vmatpush.bf16.msra.mxu0 %v3552
        %3570 = vmatpush.bf16.msra.mxu0 %v3551
        %3571 = vmatpush.bf16.msra.mxu0 %v3550
        %3572 = vmatpush.bf16.msra.mxu0 %v3549
        %3573 = vmatmul.bf16.gmra.mxu0 %v3489
        %v3574 = vpop.f32.mrf.mxu0
        %v3575 = vadd.f32 %v3515, %v3574
        %v3576 = vpop.f32.mrf.mxu0
        %v3577 = vadd.f32 %v3515, %v3576
        %3578 = vmatmul.bf16.gmra.mxu0 %v3490
        %v3579 = vpop.f32.mrf.mxu0
        %v3580 = vadd.f32 %v3515, %v3579
        %v3581 = vpop.f32.mrf.mxu0
        %v3582 = vadd.f32 %v3515, %v3581
        %3583 = vmatmul.bf16.gmra.mxu0 %v3491
        %v3584 = vpop.f32.mrf.mxu0
        %v3585 = vadd.f32 %v3515, %v3584
        %v3586 = vpop.f32.mrf.mxu0
        %v3587 = vadd.f32 %v3515, %v3586
        %3588 = vmatmul.bf16.gmra.mxu0 %v3492
        %v3589 = vpop.f32.mrf.mxu0
        %v3590 = vadd.f32 %v3515, %v3589
        %v3591 = vpop.f32.mrf.mxu0
        %v3592 = vadd.f32 %v3515, %v3591
        %3593 = vmatmul.bf16.gmra.mxu0 %v3493
        %v3594 = vpop.f32.mrf.mxu0
        %v3595 = vadd.f32 %v3515, %v3594
        %v3596 = vpop.f32.mrf.mxu0
        %v3597 = vadd.f32 %v3515, %v3596
        %3598 = vmatmul.bf16.gmra.mxu0 %v3494
        %v3599 = vpop.f32.mrf.mxu0
        %v3600 = vadd.f32 %v3515, %v3599
        %v3601 = vpop.f32.mrf.mxu0
        %v3602 = vadd.f32 %v3515, %v3601
        %3603 = vmatmul.bf16.gmra.mxu0 %v3495
        %v3604 = vpop.f32.mrf.mxu0
        %v3605 = vadd.f32 %v3515, %v3604
        %v3606 = vpop.f32.mrf.mxu0
        %v3607 = vadd.f32 %v3515, %v3606
        %3608 = vmatmul.bf16.gmra.mxu0 %v3496
        %v3609 = vpop.f32.mrf.mxu0
        %v3610 = vadd.f32 %v3515, %v3609
        %v3611 = vpop.f32.mrf.mxu0
        %v3612 = vadd.f32 %v3515, %v3611
        %3613 = vdwg.mxu0
        %v3614 = vpack.c.bf16 %v3575, %v3575
        %v3615 = vpack.c.bf16 %v3577, %v3577
        %v3616 = vpack.c.bf16 %v3580, %v3580
        %v3617 = vpack.c.bf16 %v3582, %v3582
        %v3618 = vpack.c.bf16 %v3585, %v3585
        %v3619 = vpack.c.bf16 %v3587, %v3587
        %v3620 = vpack.c.bf16 %v3590, %v3590
        %v3621 = vpack.c.bf16 %v3592, %v3592
        %v3622 = vpack.c.bf16 %v3595, %v3595
        %v3623 = vpack.c.bf16 %v3597, %v3597
        %v3624 = vpack.c.bf16 %v3600, %v3600
        %v3625 = vpack.c.bf16 %v3602, %v3602
        %v3626 = vpack.c.bf16 %v3605, %v3605
        %v3627 = vpack.c.bf16 %v3607, %v3607
        %v3628 = vpack.c.bf16 %v3610, %v3610
        %v3629 = vpack.c.bf16 %v3612, %v3612
        %v3638 = vunpack.c.l.b16 %v3622
        %v3639 = vunpack.c.l.b16 %v3623
        %v3640 = vunpack.c.l.b16 %v3624
        %v3641 = vunpack.c.l.b16 %v3625
        %v3642 = vunpack.c.l.b16 %v3626
        %v3643 = vunpack.c.l.b16 %v3627
        %v3644 = vunpack.c.l.b16 %v3628
        %v3645 = vunpack.c.l.b16 %v3629
        %v3646 = vpack.c.b16 %v3638, %v3638
        %v3647 = vpack.c.b16 %v3639, %v3639
        %v3648 = vpack.c.b16 %v3640, %v3640
        %v3649 = vpack.c.b16 %v3641, %v3641
        %v3650 = vpack.c.b16 %v3642, %v3642
        %v3651 = vpack.c.b16 %v3643, %v3643
        %v3652 = vpack.c.b16 %v3644, %v3644
        %v3653 = vpack.c.b16 %v3645, %v3645
        %vm3654 = vcmask 1043456
        %v3657 = vsel %vm3654, %v3614, %v3646
        %v3660 = vsel %vm3654, %v3615, %v3647
        %v3663 = vsel %vm3654, %v3616, %v3648
        %v3666 = vsel %vm3654, %v3617, %v3649
        %v3669 = vsel %vm3654, %v3618, %v3650
        %v3672 = vsel %vm3654, %v3619, %v3651
        %v3675 = vsel %vm3654, %v3620, %v3652
        %v3678 = vsel %vm3654, %v3621, %v3653
        %v3687 = vunpack.c.l.b16 %v3657
        %v3688 = vunpack.c.h.b16 %v3657
        %v3689 = vunpack.c.l.b16 %v3660
        %v3690 = vunpack.c.h.b16 %v3660
        %v3691 = vunpack.c.l.b16 %v3663
        %v3692 = vunpack.c.h.b16 %v3663
        %v3693 = vunpack.c.l.b16 %v3666
        %v3694 = vunpack.c.h.b16 %v3666
        %v3695 = vunpack.c.l.b16 %v3669
        %v3696 = vunpack.c.h.b16 %v3669
        %v3697 = vunpack.c.l.b16 %v3672
        %v3698 = vunpack.c.h.b16 %v3672
        %v3699 = vunpack.c.l.b16 %v3675
        %v3700 = vunpack.c.h.b16 %v3675
        %v3701 = vunpack.c.l.b16 %v3678
        %v3702 = vunpack.c.h.b16 %v3678
        %v3703 = vpack.c.b16 %v3687, %v3687
        %v3704 = vpack.c.b16 %v3688, %v3688
        %v3705 = vpack.c.b16 %v3689, %v3689
        %v3706 = vpack.c.b16 %v3690, %v3690
        %v3707 = vpack.c.b16 %v3691, %v3691
        %v3708 = vpack.c.b16 %v3692, %v3692
        %v3709 = vpack.c.b16 %v3693, %v3693
        %v3710 = vpack.c.b16 %v3694, %v3694
        %v3711 = vpack.c.b16 %v3695, %v3695
        %v3712 = vpack.c.b16 %v3696, %v3696
        %v3713 = vpack.c.b16 %v3697, %v3697
        %v3714 = vpack.c.b16 %v3698, %v3698
        %v3715 = vpack.c.b16 %v3699, %v3699
        %v3716 = vpack.c.b16 %v3700, %v3700
        %v3717 = vpack.c.b16 %v3701, %v3701
        %v3718 = vpack.c.b16 %v3702, %v3702
        %3735 = vst [vmem:[%s448] sm:$0xf] %v3703
        %3736 = vst [vmem:[%s448 + $0x4] sm:$0xf] %v3704
        %3737 = vst [vmem:[%s448 + $0x8] sm:$0xf] %v3705
        %3738 = vst [vmem:[%s448 + $0xc] sm:$0xf] %v3706
        %3739 = vst [vmem:[%s448 + $0x10] sm:$0xf] %v3707
        %3740 = vst [vmem:[%s448 + $0x14] sm:$0xf] %v3708
        %3741 = vst [vmem:[%s448 + $0x18] sm:$0xf] %v3709
        %3742 = vst [vmem:[%s448 + $0x1c] sm:$0xf] %v3710
        %3743 = vst [vmem:[%s448 + $0x20] sm:$0xf] %v3711
        %3744 = vst [vmem:[%s448 + $0x24] sm:$0xf] %v3712
        %3745 = vst [vmem:[%s448 + $0x28] sm:$0xf] %v3713
        %3746 = vst [vmem:[%s448 + $0x2c] sm:$0xf] %v3714
        %3747 = vst [vmem:[%s448 + $0x30] sm:$0xf] %v3715
        %3748 = vst [vmem:[%s448 + $0x34] sm:$0xf] %v3716
        %3749 = vst [vmem:[%s448 + $0x38] sm:$0xf] %v3717
        %3750 = vst [vmem:[%s448 + $0x3c] sm:$0xf] %v3718
        %s3751 = sand.u32 %s232, 1
        %s3752 = scalar_lea.sflag [#allocation4], %s3751
        %s3753 = sand.u32 %s232, 1
        %s3754 = smul.addr %s3753, 64
        %s3755 = scalar_lea.vmem [#allocation13], %s3754
        // Predicated region
        $region77: #{tpu_custom_call.1} parent=51 // pred_check
          %p3756 = pneg %p242
        $region78: #{tpu_custom_call.1} parent=51 // pred_check_branch
          %3758 = sbr.rel (%p3756) target = $region80
        $region79: #{tpu_custom_call.1} parent=51 // pred_region
          %s3759 = smul.u32 8, %s35
          %3761 = vsyncadd %s3752, 0
          %s3762 = smul.addr %s3759, 2
          %s3763 = smul.addr %s34, 32
          %s3764 = sadd.s32 %s3762, %s3763
          %s3765 = smul.addr %s3764, 4
          %s3766 = scalar_lea.hbm %s8, %s3765
          %s3767 = sshll.u32 %s3755, 4
          %s3768 = int_to_ptr.vmem [resolvable:$true] %s3767
          %s3769 = sshll.u32 %s3766, 4
          %s3770 = int_to_ptr.hbm [resolvable:$true] %s3769
          %3775 = dma.vmem_to_hbm [thread:$0]  %s3768, 1024, %s3770, %s3752, 64, 64, 4
        $region80: #{tpu_custom_call.1} parent=51 // pred_fallthru
          _
      $region52: #{tpu_custom_call.1} parent=5 // pred_fallthru
        _
      %p3776 = scmp.le.s32.totalorder 2, %s25
      // Predicated region
      $region81: #{tpu_custom_call.1} parent=5 // pred_check
        %p3777 = pneg %p3776
      $region82: #{tpu_custom_call.1} parent=5 // pred_check_branch
        %3779 = sbr.rel (%p3777) target = $region84
      $region83: #{tpu_custom_call.1} parent=5 // pred_region
        %s3780 = ssub.s32 %s25, 2
        // Predicated region
        $region85: #{tpu_custom_call.1} parent=83 // pred_check
          %p3781 = pneg %p248
        $region86: #{tpu_custom_call.1} parent=83 // pred_check_branch
          %3783 = sbr.rel (%p3781) target = $region88
        $region87: #{tpu_custom_call.1} parent=83 // pred_region
          %s3784 = sand.u32 %s233, 1
          %s3785 = scalar_lea.sflag [#allocation4], %s3784
          %s3786 = sand.u32 %s233, 1
          %s3787 = smul.addr %s3786, 64
          %s3788 = scalar_lea.vmem [#allocation13], %s3787
          %3790 = dma.done %s3785, 1024
        $region88: #{tpu_custom_call.1} parent=83 // pred_fallthru
          _
      $region84: #{tpu_custom_call.1} parent=5 // pred_fallthru
        _
    $region6: #{tpu_custom_call.1} parent=1 // loop_footer
      %s29 = sadd.s32 1, %s25
    $region7: #{tpu_custom_call.1} parent=1 // loop_footer_branch
      %24 = sbr.rel target = $region3
    $region8: #{tpu_custom_call.1} parent=1 // loop_exit
      _
    %3791 = vsyncpa [#allocation3], 1
    %s3792 = scalar_lea.sflag [#allocation3], 1
    %3793 = vsyncpa %s3792, 1
    %3794 = vsyncpa [#allocation6], 1
    %3795 = vsyncpa [#allocation9], 1
    %3796 = vsyncpa [#allocation12], 1
    %s3797 = scalar_lea.sflag [#allocation12], 1
    %3798 = vsyncpa %s3797, 1
    %3799 = vsyncpa [#allocation4], 1
    %s3800 = scalar_lea.sflag [#allocation4], 1
    %3801 = vsyncpa %s3800, 1

</llo_original>
